<compile_context>
chip_gen: v5e
topology: v5e:2x2
jax: 0.10.0
libtpu: 0.0.40
codegen_flags: <defaults>
</compile_context>

<pallas_src>
import jax
import jax.numpy as jnp
from jax import lax
from jax.experimental import pallas as pl
from jax.experimental.pallas import tpu as pltpu

BB = 8  # sequences per grid step (fills the 8 vreg sublanes / 8 MXU rows)


def gru_seq_kernel(tok_ref, table_ref, h0_ref, w_hh_ref, b_hn_ref,
                   w_dec_ref, b_dec_ref,
                   logits_ref, h_fin_ref,
                   gi_sc, hs_sc):
    """One-hot gather -> batched input projection -> serial GRU -> batched decoder."""
    T, bb = tok_ref.shape[1], tok_ref.shape[2]
    VP = table_ref.shape[0]
    HP = h0_ref.shape[1]
    OP = w_dec_ref.shape[1]

    # ---- 1) Embedding gather + input projection + r/z bias fold, all steps ----
    # gi[t, b, :] = table[token[t, b], :] selected via a one-hot MXU matmul.
    tok = tok_ref[0]                                                # (T, BB) int32
    onehot = (lax.broadcasted_iota(jnp.int32, (T, bb, VP), 2)
              == tok[:, :, None]).astype(jnp.float32)               # (T, BB, VP)
    gi = jnp.dot(onehot.reshape(T * bb, VP), table_ref[...],
                 preferred_element_type=jnp.float32)                # (T*BB, 3HP)
    gi_sc[...] = gi.reshape(T, bb, 3 * HP)

    # ---- 2) Serial GRU recurrence; only h @ W_hh^T is on the critical chain ---
    b_hn = jnp.broadcast_to(b_hn_ref[...], (bb, HP))                # hoisted

    def step(t, h):                                                 # h: (BB, HP)
        gh = jnp.dot(h, w_hh_ref[...],                              # VMEM-fed RHS
                     preferred_element_type=jnp.float32)            # (BB, 3HP)
        g = gi_sc[t]                                                # (BB, 3HP)
        r = jax.nn.sigmoid(g[:, 0:HP] + gh[:, 0:HP])
        z = jax.nn.sigmoid(g[:, HP:2 * HP] + gh[:, HP:2 * HP])
        n = jnp.tanh(g[:, 2 * HP:3 * HP] + r * (gh[:, 2 * HP:3 * HP] + b_hn))
        h_new = (1.0 - z) * n + z * h
        hs_sc[t] = h_new
        return h_new

    h_last = lax.fori_loop(0, T, step, h0_ref[...], unroll=True)
    h_fin_ref[...] = h_last

    # ---- 3) Batched decoder over all (t, b) pairs; lane-dense (T*BB, OP) slab --
    logits = (jnp.dot(hs_sc[...].reshape(T * bb, HP), w_dec_ref[...],
                      preferred_element_type=jnp.float32)
              + b_dec_ref[...])
    logits_ref[...] = logits.reshape(T, bb, OP)


def rnn_forward(tokens, hidden, params, *, hp=128, vp=128, op=128):
    """tokens: int32 (B, T); hidden: float32 (n_layers=1, B, H_logical).
    Returns (logits (B, T, O), hidden' (1, B, H)).  Each of the B sequences is
    processed exactly like calling the torch module's forward() T times."""
    B, T = tokens.shape
    V, H = params["emb"].shape
    O = params["w_dec"].shape[0]
    assert B % BB == 0 and T % 8 == 0
    nb = B // BB
    f32 = jnp.float32
    hi = lax.Precision.HIGHEST

    def pad2(m, r, c):
        return jnp.pad(m, ((0, r - m.shape[0]), (0, c - m.shape[1])))

    def pad1(v, n):
        return jnp.pad(v, (0, n - v.shape[0]))

    # Per-gate zero padding to lane-aligned sizes.  Padded weight rows/cols,
    # padded bias lanes and padded h0 lanes are zero, and zero lanes stay zero
    # through the recurrence, so this is exactly the H=50 model of the spec.
    def pad_gates_t(w):  # torch-layout (3H, H) -> padded transposed (HP, 3HP)
        return jnp.concatenate(
            [pad2(w[g * H:(g + 1) * H].T, hp, hp) for g in range(3)], axis=1)

    w_ih_t = pad_gates_t(params["w_ih"])
    w_hh_t = pad_gates_t(params["w_hh"])

    # Fold b_ih and the r/z parts of b_hh into the table; b_hn stays separate
    # because it lives inside r * (W_hn h + b_hn).
    b_fold = params["b_ih"] + jnp.concatenate(
        [params["b_hh"][:2 * H], jnp.zeros((H,), f32)])
    b_fold = jnp.concatenate([pad1(b_fold[g * H:(g + 1) * H], hp) for g in range(3)])
    b_hn = pad1(params["b_hh"][2 * H:3 * H], hp)[None, :]

    # Fused gather + input-projection table (small-V only): gi = onehot @ table.
    emb_p = pad2(params["emb"], vp, hp)
    gi_table = jnp.dot(emb_p, w_ih_t, precision=hi) + b_fold[None, :]   # (VP, 3HP)

    w_dec_t = pad2(params["w_dec"].T, hp, op)                           # (HP, OP)
    b_dec = pad1(params["b_dec"], op)[None, :]                          # (1, OP)

    h0 = pad2(hidden[0], B, hp)                                         # (B, HP)
    # Tokens laid out (nb, T, BB): block i holds sequences i*BB..i*BB+BB-1, t-major.
    tok = jnp.transpose(tokens.reshape(nb, BB, T), (0, 2, 1)).astype(jnp.int32)

    grid_spec = pltpu.PrefetchScalarGridSpec(
        num_scalar_prefetch=0,
        grid=(nb,),
        in_specs=[
            pl.BlockSpec((1, T, BB), lambda i: (i, 0, 0)),      # token ids
            pl.BlockSpec((vp, 3 * hp), lambda i: (0, 0)),       # fused gi table
            pl.BlockSpec((BB, hp), lambda i: (i, 0)),           # h0 tile
            pl.BlockSpec((hp, 3 * hp), lambda i: (0, 0)),       # W_hh^T
            pl.BlockSpec((1, hp), lambda i: (0, 0)),            # b_hn
            pl.BlockSpec((hp, op), lambda i: (0, 0)),           # W_dec^T
            pl.BlockSpec((1, op), lambda i: (0, 0)),            # b_dec
        ],
        out_specs=(
            pl.BlockSpec((T, BB, op), lambda i: (0, i, 0)),     # logits (t-major)
            pl.BlockSpec((BB, hp), lambda i: (i, 0)),           # final hidden
        ),
        scratch_shapes=[
            pltpu.VMEM((T, BB, 3 * hp), jnp.float32),           # batched gi
            pltpu.VMEM((T, BB, hp), jnp.float32),               # all hidden states
        ],
    )

    logits_tbo, h_fin = pl.pallas_call(
        gru_seq_kernel,
        out_shape=(jax.ShapeDtypeStruct((T, B, op), f32),
                   jax.ShapeDtypeStruct((B, hp), f32)),
        grid_spec=grid_spec,
        compiler_params=pltpu.CompilerParams(
            dimension_semantics=("parallel",)),   # v7x: 2nd TC takes half the batch tiles
    )(tok, gi_table, h0, w_hh_t, b_hn, w_dec_t, b_dec)

    logits = jnp.swapaxes(logits_tbo, 0, 1)[:, :, :O]           # (B, T, O)
    return logits, h_fin[:, :H][None, :, :]                     # (1, B, H)


def init_params(key, vocab, hidden, out):
    """Torch-layout params, torch-like init (Embedding ~ N(0,1),
    GRU/Linear ~ U(-1/sqrt(H), 1/sqrt(H)))."""
    ks = jax.random.split(key, 7)
    bound = hidden ** -0.5
    u = lambda k, shape: jax.random.uniform(k, shape, jnp.float32, -bound, bound)
    return {
        "emb": jax.random.normal(ks[0], (vocab, hidden), jnp.float32),
        "w_ih": u(ks[1], (3 * hidden, hidden)),   # gate order [r, z, n]
        "w_hh": u(ks[2], (3 * hidden, hidden)),
        "b_ih": u(ks[3], (3 * hidden,)),
        "b_hh": u(ks[4], (3 * hidden,)),
        "w_dec": u(ks[5], (out, hidden)),
        "b_dec": u(ks[6], (out,)),
    }


def rnn_forward_ref(tokens, hidden, params):
    """Pure-JAX reference: exact torch.nn.GRU per-step formula, looped over T."""
    H = params["emb"].shape[1]
    B, T = tokens.shape
    hi = lax.Precision.HIGHEST
    mm = lambda a, b: jnp.dot(a, b, precision=hi)
    h = hidden[0]                                       # (B, H)
    w_ih_t, w_hh_t = params["w_ih"].T, params["w_hh"].T
    outs = []
    for t in range(T):
        x = params["emb"][tokens[:, t]]                 # (B, H)
        gi = mm(x, w_ih_t) + params["b_ih"]
        gh = mm(h, w_hh_t) + params["b_hh"]
        r = jax.nn.sigmoid(gi[:, :H] + gh[:, :H])
        z = jax.nn.sigmoid(gi[:, H:2 * H] + gh[:, H:2 * H])
        n = jnp.tanh(gi[:, 2 * H:] + r * gh[:, 2 * H:])
        h = (1.0 - z) * n + z * h
        outs.append(mm(h, params["w_dec"].T) + params["b_dec"])
    return jnp.stack(outs, axis=1), h[None, :, :]       # (B, T, O), (1, B, H)


if __name__ == "__main__":
    VOCAB, HIDDEN, OUTPUT = 100, 50, 100   # len(string.printable)-ish vocab, hidden_size=50
    B, T = 16, 16                          # 16 independent sequences of 16 tokens

    key = jax.random.PRNGKey(0)
    pkey, tkey, hkey = jax.random.split(key, 3)

    params = init_params(pkey, VOCAB, HIDDEN, OUTPUT)
    tokens = jax.random.randint(tkey, (B, T), 0, VOCAB, dtype=jnp.int32)
    # init_hidden() is zeros; use a small random hidden to exercise the z*h path.
    hidden = jax.random.normal(hkey, (1, B, HIDDEN), jnp.float32)

    logits, h_new = rnn_forward(tokens, hidden, params)
    jax.block_until_ready((logits, h_new))

    logits_ref, h_ref = rnn_forward_ref(tokens, hidden, params)
    assert logits.shape == (B, T, OUTPUT)
    assert h_new.shape == (1, B, HIDDEN)
    assert jnp.allclose(logits, logits_ref, atol=5e-3, rtol=5e-3)
    assert jnp.allclose(h_new, h_ref, atol=5e-3, rtol=5e-3)

    print("KERNEL_OK")
</pallas_src>

<mosaic_0001>
module attributes {stable_mosaic.version = 11 : i64} {
  func.func @gru_seq_kernel(%arg0: i32, %arg1: memref<1x16x8xi32, #tpu.memory_space<vmem>>, %arg2: memref<128x384xf32, #tpu.memory_space<vmem>>, %arg3: memref<8x128xf32, #tpu.memory_space<vmem>>, %arg4: memref<128x384xf32, #tpu.memory_space<vmem>>, %arg5: memref<1x128xf32, #tpu.memory_space<vmem>>, %arg6: memref<128x128xf32, #tpu.memory_space<vmem>>, %arg7: memref<1x128xf32, #tpu.memory_space<vmem>>, %arg8: memref<16x8x128xf32, #tpu.memory_space<vmem>>, %arg9: memref<8x128xf32, #tpu.memory_space<vmem>>, %arg10: memref<16x8x384xf32, #tpu.memory_space<vmem>>, %arg11: memref<16x8x128xf32, #tpu.memory_space<vmem>>) attributes {dimension_semantics = [#tpu.dimension_semantics<parallel>], iteration_bounds = array<i64: 2>, scalar_prefetch = 0 : i64, scratch_operands = 2 : i64, tpu.core_type = #tpu.core_type<tc>, window_params = [{transform_indices = @transform_0, window_bounds = array<i64: 1, 16, 8>}, {pipeline_mode = #tpu.pipeline_mode<synchronous>, transform_indices = @transform_1, window_bounds = array<i64: 128, 384>}, {transform_indices = @transform_2, window_bounds = array<i64: 8, 128>}, {pipeline_mode = #tpu.pipeline_mode<synchronous>, transform_indices = @transform_3, window_bounds = array<i64: 128, 384>}, {pipeline_mode = #tpu.pipeline_mode<synchronous>, transform_indices = @transform_4, window_bounds = array<i64: 1, 128>}, {pipeline_mode = #tpu.pipeline_mode<synchronous>, transform_indices = @transform_5, window_bounds = array<i64: 128, 128>}, {pipeline_mode = #tpu.pipeline_mode<synchronous>, transform_indices = @transform_6, window_bounds = array<i64: 1, 128>}, {transform_indices = @transform_7, window_bounds = array<i64: 16, 8, 128>}, {transform_indices = @transform_8, window_bounds = array<i64: 8, 128>}]} {
    %c0 = arith.constant 0 : index
    %c0_0 = arith.constant 0 : index
    %c0_1 = arith.constant 0 : index
    %0 = vector.load %arg1[%c0, %c0_0, %c0_1] : memref<1x16x8xi32, #tpu.memory_space<vmem>>, vector<1x16x8xi32>
    %1 = vector.shape_cast %0 : vector<1x16x8xi32> to vector<16x8xi32>
    %2 = tpu.iota {dimensions = array<i32: 2>} : vector<16x8x128xi32>
    %3 = vector.shape_cast %1 : vector<16x8xi32> to vector<16x8x1xi32>
    %4 = vector.broadcast %3 : vector<16x8x1xi32> to vector<16x8x128xi32>
    %5 = arith.cmpi eq, %2, %4 : vector<16x8x128xi32>
    %6 = arith.extui %5 : vector<16x8x128xi1> to vector<16x8x128xi32>
    %7 = arith.sitofp %6 : vector<16x8x128xi32> to vector<16x8x128xf32>
    %8 = vector.shape_cast %7 : vector<16x8x128xf32> to vector<128x128xf32>
    %c0_2 = arith.constant 0 : index
    %c0_3 = arith.constant 0 : index
    %9 = vector.load %arg2[%c0_2, %c0_3] : memref<128x384xf32, #tpu.memory_space<vmem>>, vector<128x384xf32>
    %cst = arith.constant dense<0.000000e+00> : vector<128x384xf32>
    %10 = tpu.matmul %8, %9, %cst {dimension_numbers = #tpu.dot_dimension_numbers<[1], [0], [0], [1], [0, 0, 1, 1], [], []>} : vector<128x128xf32>, vector<128x384xf32>, vector<128x384xf32> -> vector<128x384xf32>
    %11 = vector.shape_cast %10 : vector<128x384xf32> to vector<16x8x384xf32>
    %c0_4 = arith.constant 0 : index
    %c0_5 = arith.constant 0 : index
    %c0_6 = arith.constant 0 : index
    %12 = vector.load %arg10[%c0_4, %c0_5, %c0_6] : memref<16x8x384xf32, #tpu.memory_space<vmem>>, vector<16x8x384xf32>
    tpu.vector_store %arg10[%c0_4, %c0_5, %c0_6], %11 {strides = array<i32>} : memref<16x8x384xf32, #tpu.memory_space<vmem>>, vector<16x8x384xf32>,
    %c0_7 = arith.constant 0 : index
    %c0_8 = arith.constant 0 : index
    %13 = vector.load %arg5[%c0_7, %c0_8] : memref<1x128xf32, #tpu.memory_space<vmem>>, vector<1x128xf32>
    %14 = vector.shape_cast %13 : vector<1x128xf32> to vector<1x128xf32>
    %15 = vector.broadcast %14 : vector<1x128xf32> to vector<8x128xf32>
    %c0_9 = arith.constant 0 : index
    %c0_10 = arith.constant 0 : index
    %16 = vector.load %arg3[%c0_9, %c0_10] : memref<8x128xf32, #tpu.memory_space<vmem>>, vector<8x128xf32>
    %c0_i32 = arith.constant 0 : i32
    %c0_11 = arith.constant 0 : index
    %c0_12 = arith.constant 0 : index
    %17 = vector.load %arg4[%c0_11, %c0_12] : memref<128x384xf32, #tpu.memory_space<vmem>>, vector<128x384xf32>
    %cst_13 = arith.constant dense<0.000000e+00> : vector<8x384xf32>
    %18 = tpu.matmul %16, %17, %cst_13 {dimension_numbers = #tpu.dot_dimension_numbers<[1], [0], [0], [1], [0, 0, 1, 1], [], []>} : vector<8x128xf32>, vector<128x384xf32>, vector<8x384xf32> -> vector<8x384xf32>
    %19 = arith.index_cast %c0_i32 : i32 to index
    %c0_14 = arith.constant 0 : index
    %c0_15 = arith.constant 0 : index
    %20 = vector.load %arg10[%19, %c0_14, %c0_15] : memref<16x8x384xf32, #tpu.memory_space<vmem>>, vector<1x8x384xf32>
    %21 = vector.shape_cast %20 : vector<1x8x384xf32> to vector<8x384xf32>
    %22 = vector.extract_strided_slice %21 {offsets = [0, 0], sizes = [8, 128], strides = [1, 1]} : vector<8x384xf32> to vector<8x128xf32>
    %23 = vector.extract_strided_slice %18 {offsets = [0, 0], sizes = [8, 128], strides = [1, 1]} : vector<8x384xf32> to vector<8x128xf32>
    %24 = arith.addf %22, %23 : vector<8x128xf32>
    %25 = arith.negf %24 : vector<8x128xf32>
    %26 = math.exp %25 : vector<8x128xf32>
    %cst_16 = arith.constant 1.000000e+00 : f32
    %27 = vector.broadcast %cst_16 : f32 to vector<8x128xf32>
    %28 = arith.addf %27, %26 : vector<8x128xf32>
    %29 = arith.divf %27, %28 : vector<8x128xf32>
    %30 = vector.extract_strided_slice %21 {offsets = [0, 128], sizes = [8, 128], strides = [1, 1]} : vector<8x384xf32> to vector<8x128xf32>
    %31 = vector.extract_strided_slice %18 {offsets = [0, 128], sizes = [8, 128], strides = [1, 1]} : vector<8x384xf32> to vector<8x128xf32>
    %32 = arith.addf %30, %31 : vector<8x128xf32>
    %33 = arith.negf %32 : vector<8x128xf32>
    %34 = math.exp %33 : vector<8x128xf32>
    %cst_17 = arith.constant 1.000000e+00 : f32
    %35 = vector.broadcast %cst_17 : f32 to vector<8x128xf32>
    %36 = arith.addf %35, %34 : vector<8x128xf32>
    %37 = arith.divf %35, %36 : vector<8x128xf32>
    %38 = vector.extract_strided_slice %21 {offsets = [0, 256], sizes = [8, 128], strides = [1, 1]} : vector<8x384xf32> to vector<8x128xf32>
    %39 = vector.extract_strided_slice %18 {offsets = [0, 256], sizes = [8, 128], strides = [1, 1]} : vector<8x384xf32> to vector<8x128xf32>
    %40 = arith.addf %39, %15 : vector<8x128xf32>
    %41 = arith.mulf %29, %40 : vector<8x128xf32>
    %42 = arith.addf %38, %41 : vector<8x128xf32>
    %43 = math.tanh %42 : vector<8x128xf32>
    %cst_18 = arith.constant 1.000000e+00 : f32
    %44 = vector.broadcast %cst_18 : f32 to vector<8x128xf32>
    %45 = arith.subf %44, %37 : vector<8x128xf32>
    %46 = arith.mulf %45, %43 : vector<8x128xf32>
    %47 = arith.mulf %37, %16 : vector<8x128xf32>
    %48 = arith.addf %46, %47 : vector<8x128xf32>
    %49 = arith.index_cast %c0_i32 : i32 to index
    %c0_19 = arith.constant 0 : index
    %c0_20 = arith.constant 0 : index
    %50 = vector.load %arg11[%49, %c0_19, %c0_20] : memref<16x8x128xf32, #tpu.memory_space<vmem>>, vector<1x8x128xf32>
    %51 = vector.shape_cast %50 : vector<1x8x128xf32> to vector<8x128xf32>
    %52 = vector.shape_cast %48 : vector<8x128xf32> to vector<1x8x128xf32>
    tpu.vector_store %arg11[%49, %c0_19, %c0_20], %52 {strides = array<i32>} : memref<16x8x128xf32, #tpu.memory_space<vmem>>, vector<1x8x128xf32>,
    %c1_i32 = arith.constant 1 : i32
    %c0_21 = arith.constant 0 : index
    %c0_22 = arith.constant 0 : index
    %53 = vector.load %arg4[%c0_21, %c0_22] : memref<128x384xf32, #tpu.memory_space<vmem>>, vector<128x384xf32>
    %cst_23 = arith.constant dense<0.000000e+00> : vector<8x384xf32>
    %54 = tpu.matmul %48, %53, %cst_23 {dimension_numbers = #tpu.dot_dimension_numbers<[1], [0], [0], [1], [0, 0, 1, 1], [], []>} : vector<8x128xf32>, vector<128x384xf32>, vector<8x384xf32> -> vector<8x384xf32>
    %55 = arith.index_cast %c1_i32 : i32 to index
    %c0_24 = arith.constant 0 : index
    %c0_25 = arith.constant 0 : index
    %56 = vector.load %arg10[%55, %c0_24, %c0_25] : memref<16x8x384xf32, #tpu.memory_space<vmem>>, vector<1x8x384xf32>
    %57 = vector.shape_cast %56 : vector<1x8x384xf32> to vector<8x384xf32>
    %58 = vector.extract_strided_slice %57 {offsets = [0, 0], sizes = [8, 128], strides = [1, 1]} : vector<8x384xf32> to vector<8x128xf32>
    %59 = vector.extract_strided_slice %54 {offsets = [0, 0], sizes = [8, 128], strides = [1, 1]} : vector<8x384xf32> to vector<8x128xf32>
    %60 = arith.addf %58, %59 : vector<8x128xf32>
    %61 = arith.negf %60 : vector<8x128xf32>
    %62 = math.exp %61 : vector<8x128xf32>
    %cst_26 = arith.constant 1.000000e+00 : f32
    %63 = vector.broadcast %cst_26 : f32 to vector<8x128xf32>
    %64 = arith.addf %63, %62 : vector<8x128xf32>
    %65 = arith.divf %63, %64 : vector<8x128xf32>
    %66 = vector.extract_strided_slice %57 {offsets = [0, 128], sizes = [8, 128], strides = [1, 1]} : vector<8x384xf32> to vector<8x128xf32>
    %67 = vector.extract_strided_slice %54 {offsets = [0, 128], sizes = [8, 128], strides = [1, 1]} : vector<8x384xf32> to vector<8x128xf32>
    %68 = arith.addf %66, %67 : vector<8x128xf32>
    %69 = arith.negf %68 : vector<8x128xf32>
    %70 = math.exp %69 : vector<8x128xf32>
    %cst_27 = arith.constant 1.000000e+00 : f32
    %71 = vector.broadcast %cst_27 : f32 to vector<8x128xf32>
    %72 = arith.addf %71, %70 : vector<8x128xf32>
    %73 = arith.divf %71, %72 : vector<8x128xf32>
    %74 = vector.extract_strided_slice %57 {offsets = [0, 256], sizes = [8, 128], strides = [1, 1]} : vector<8x384xf32> to vector<8x128xf32>
    %75 = vector.extract_strided_slice %54 {offsets = [0, 256], sizes = [8, 128], strides = [1, 1]} : vector<8x384xf32> to vector<8x128xf32>
    %76 = arith.addf %75, %15 : vector<8x128xf32>
    %77 = arith.mulf %65, %76 : vector<8x128xf32>
    %78 = arith.addf %74, %77 : vector<8x128xf32>
    %79 = math.tanh %78 : vector<8x128xf32>
    %cst_28 = arith.constant 1.000000e+00 : f32
    %80 = vector.broadcast %cst_28 : f32 to vector<8x128xf32>
    %81 = arith.subf %80, %73 : vector<8x128xf32>
    %82 = arith.mulf %81, %79 : vector<8x128xf32>
    %83 = arith.mulf %73, %48 : vector<8x128xf32>
    %84 = arith.addf %82, %83 : vector<8x128xf32>
    %85 = arith.index_cast %c1_i32 : i32 to index
    %c0_29 = arith.constant 0 : index
    %c0_30 = arith.constant 0 : index
    %86 = vector.load %arg11[%85, %c0_29, %c0_30] : memref<16x8x128xf32, #tpu.memory_space<vmem>>, vector<1x8x128xf32>
    %87 = vector.shape_cast %86 : vector<1x8x128xf32> to vector<8x128xf32>
    %88 = vector.shape_cast %84 : vector<8x128xf32> to vector<1x8x128xf32>
    tpu.vector_store %arg11[%85, %c0_29, %c0_30], %88 {strides = array<i32>} : memref<16x8x128xf32, #tpu.memory_space<vmem>>, vector<1x8x128xf32>,
    %c2_i32 = arith.constant 2 : i32
    %c0_31 = arith.constant 0 : index
    %c0_32 = arith.constant 0 : index
    %89 = vector.load %arg4[%c0_31, %c0_32] : memref<128x384xf32, #tpu.memory_space<vmem>>, vector<128x384xf32>
    %cst_33 = arith.constant dense<0.000000e+00> : vector<8x384xf32>
    %90 = tpu.matmul %84, %89, %cst_33 {dimension_numbers = #tpu.dot_dimension_numbers<[1], [0], [0], [1], [0, 0, 1, 1], [], []>} : vector<8x128xf32>, vector<128x384xf32>, vector<8x384xf32> -> vector<8x384xf32>
    %91 = arith.index_cast %c2_i32 : i32 to index
    %c0_34 = arith.constant 0 : index
    %c0_35 = arith.constant 0 : index
    %92 = vector.load %arg10[%91, %c0_34, %c0_35] : memref<16x8x384xf32, #tpu.memory_space<vmem>>, vector<1x8x384xf32>
    %93 = vector.shape_cast %92 : vector<1x8x384xf32> to vector<8x384xf32>
    %94 = vector.extract_strided_slice %93 {offsets = [0, 0], sizes = [8, 128], strides = [1, 1]} : vector<8x384xf32> to vector<8x128xf32>
    %95 = vector.extract_strided_slice %90 {offsets = [0, 0], sizes = [8, 128], strides = [1, 1]} : vector<8x384xf32> to vector<8x128xf32>
    %96 = arith.addf %94, %95 : vector<8x128xf32>
    %97 = arith.negf %96 : vector<8x128xf32>
    %98 = math.exp %97 : vector<8x128xf32>
    %cst_36 = arith.constant 1.000000e+00 : f32
    %99 = vector.broadcast %cst_36 : f32 to vector<8x128xf32>
    %100 = arith.addf %99, %98 : vector<8x128xf32>
    %101 = arith.divf %99, %100 : vector<8x128xf32>
    %102 = vector.extract_strided_slice %93 {offsets = [0, 128], sizes = [8, 128], strides = [1, 1]} : vector<8x384xf32> to vector<8x128xf32>
    %103 = vector.extract_strided_slice %90 {offsets = [0, 128], sizes = [8, 128], strides = [1, 1]} : vector<8x384xf32> to vector<8x128xf32>
    %104 = arith.addf %102, %103 : vector<8x128xf32>
    %105 = arith.negf %104 : vector<8x128xf32>
    %106 = math.exp %105 : vector<8x128xf32>
    %cst_37 = arith.constant 1.000000e+00 : f32
    %107 = vector.broadcast %cst_37 : f32 to vector<8x128xf32>
    %108 = arith.addf %107, %106 : vector<8x128xf32>
    %109 = arith.divf %107, %108 : vector<8x128xf32>
    %110 = vector.extract_strided_slice %93 {offsets = [0, 256], sizes = [8, 128], strides = [1, 1]} : vector<8x384xf32> to vector<8x128xf32>
    %111 = vector.extract_strided_slice %90 {offsets = [0, 256], sizes = [8, 128], strides = [1, 1]} : vector<8x384xf32> to vector<8x128xf32>
    %112 = arith.addf %111, %15 : vector<8x128xf32>
    %113 = arith.mulf %101, %112 : vector<8x128xf32>
    %114 = arith.addf %110, %113 : vector<8x128xf32>
    %115 = math.tanh %114 : vector<8x128xf32>
    %cst_38 = arith.constant 1.000000e+00 : f32
    %116 = vector.broadcast %cst_38 : f32 to vector<8x128xf32>
    %117 = arith.subf %116, %109 : vector<8x128xf32>
    %118 = arith.mulf %117, %115 : vector<8x128xf32>
    %119 = arith.mulf %109, %84 : vector<8x128xf32>
    %120 = arith.addf %118, %119 : vector<8x128xf32>
    %121 = arith.index_cast %c2_i32 : i32 to index
    %c0_39 = arith.constant 0 : index
    %c0_40 = arith.constant 0 : index
    %122 = vector.load %arg11[%121, %c0_39, %c0_40] : memref<16x8x128xf32, #tpu.memory_space<vmem>>, vector<1x8x128xf32>
    %123 = vector.shape_cast %122 : vector<1x8x128xf32> to vector<8x128xf32>
    %124 = vector.shape_cast %120 : vector<8x128xf32> to vector<1x8x128xf32>
    tpu.vector_store %arg11[%121, %c0_39, %c0_40], %124 {strides = array<i32>} : memref<16x8x128xf32, #tpu.memory_space<vmem>>, vector<1x8x128xf32>,
    %c3_i32 = arith.constant 3 : i32
    %c0_41 = arith.constant 0 : index
    %c0_42 = arith.constant 0 : index
    %125 = vector.load %arg4[%c0_41, %c0_42] : memref<128x384xf32, #tpu.memory_space<vmem>>, vector<128x384xf32>
    %cst_43 = arith.constant dense<0.000000e+00> : vector<8x384xf32>
    %126 = tpu.matmul %120, %125, %cst_43 {dimension_numbers = #tpu.dot_dimension_numbers<[1], [0], [0], [1], [0, 0, 1, 1], [], []>} : vector<8x128xf32>, vector<128x384xf32>, vector<8x384xf32> -> vector<8x384xf32>
    %127 = arith.index_cast %c3_i32 : i32 to index
    %c0_44 = arith.constant 0 : index
    %c0_45 = arith.constant 0 : index
    %128 = vector.load %arg10[%127, %c0_44, %c0_45] : memref<16x8x384xf32, #tpu.memory_space<vmem>>, vector<1x8x384xf32>
    %129 = vector.shape_cast %128 : vector<1x8x384xf32> to vector<8x384xf32>
    %130 = vector.extract_strided_slice %129 {offsets = [0, 0], sizes = [8, 128], strides = [1, 1]} : vector<8x384xf32> to vector<8x128xf32>
    %131 = vector.extract_strided_slice %126 {offsets = [0, 0], sizes = [8, 128], strides = [1, 1]} : vector<8x384xf32> to vector<8x128xf32>
    %132 = arith.addf %130, %131 : vector<8x128xf32>
    %133 = arith.negf %132 : vector<8x128xf32>
    %134 = math.exp %133 : vector<8x128xf32>
    %cst_46 = arith.constant 1.000000e+00 : f32
    %135 = vector.broadcast %cst_46 : f32 to vector<8x128xf32>
    %136 = arith.addf %135, %134 : vector<8x128xf32>
    %137 = arith.divf %135, %136 : vector<8x128xf32>
    %138 = vector.extract_strided_slice %129 {offsets = [0, 128], sizes = [8, 128], strides = [1, 1]} : vector<8x384xf32> to vector<8x128xf32>
    %139 = vector.extract_strided_slice %126 {offsets = [0, 128], sizes = [8, 128], strides = [1, 1]} : vector<8x384xf32> to vector<8x128xf32>
    %140 = arith.addf %138, %139 : vector<8x128xf32>
    %141 = arith.negf %140 : vector<8x128xf32>
    %142 = math.exp %141 : vector<8x128xf32>
    %cst_47 = arith.constant 1.000000e+00 : f32
    %143 = vector.broadcast %cst_47 : f32 to vector<8x128xf32>
    %144 = arith.addf %143, %142 : vector<8x128xf32>
    %145 = arith.divf %143, %144 : vector<8x128xf32>
    %146 = vector.extract_strided_slice %129 {offsets = [0, 256], sizes = [8, 128], strides = [1, 1]} : vector<8x384xf32> to vector<8x128xf32>
    %147 = vector.extract_strided_slice %126 {offsets = [0, 256], sizes = [8, 128], strides = [1, 1]} : vector<8x384xf32> to vector<8x128xf32>
    %148 = arith.addf %147, %15 : vector<8x128xf32>
    %149 = arith.mulf %137, %148 : vector<8x128xf32>
    %150 = arith.addf %146, %149 : vector<8x128xf32>
    %151 = math.tanh %150 : vector<8x128xf32>
    %cst_48 = arith.constant 1.000000e+00 : f32
    %152 = vector.broadcast %cst_48 : f32 to vector<8x128xf32>
    %153 = arith.subf %152, %145 : vector<8x128xf32>
    %154 = arith.mulf %153, %151 : vector<8x128xf32>
    %155 = arith.mulf %145, %120 : vector<8x128xf32>
    %156 = arith.addf %154, %155 : vector<8x128xf32>
    %157 = arith.index_cast %c3_i32 : i32 to index
    %c0_49 = arith.constant 0 : index
    %c0_50 = arith.constant 0 : index
    %158 = vector.load %arg11[%157, %c0_49, %c0_50] : memref<16x8x128xf32, #tpu.memory_space<vmem>>, vector<1x8x128xf32>
    %159 = vector.shape_cast %158 : vector<1x8x128xf32> to vector<8x128xf32>
    %160 = vector.shape_cast %156 : vector<8x128xf32> to vector<1x8x128xf32>
    tpu.vector_store %arg11[%157, %c0_49, %c0_50], %160 {strides = array<i32>} : memref<16x8x128xf32, #tpu.memory_space<vmem>>, vector<1x8x128xf32>,
    %c4_i32 = arith.constant 4 : i32
    %c0_51 = arith.constant 0 : index
    %c0_52 = arith.constant 0 : index
    %161 = vector.load %arg4[%c0_51, %c0_52] : memref<128x384xf32, #tpu.memory_space<vmem>>, vector<128x384xf32>
    %cst_53 = arith.constant dense<0.000000e+00> : vector<8x384xf32>
    %162 = tpu.matmul %156, %161, %cst_53 {dimension_numbers = #tpu.dot_dimension_numbers<[1], [0], [0], [1], [0, 0, 1, 1], [], []>} : vector<8x128xf32>, vector<128x384xf32>, vector<8x384xf32> -> vector<8x384xf32>
    %163 = arith.index_cast %c4_i32 : i32 to index
    %c0_54 = arith.constant 0 : index
    %c0_55 = arith.constant 0 : index
    %164 = vector.load %arg10[%163, %c0_54, %c0_55] : memref<16x8x384xf32, #tpu.memory_space<vmem>>, vector<1x8x384xf32>
    %165 = vector.shape_cast %164 : vector<1x8x384xf32> to vector<8x384xf32>
    %166 = vector.extract_strided_slice %165 {offsets = [0, 0], sizes = [8, 128], strides = [1, 1]} : vector<8x384xf32> to vector<8x128xf32>
    %167 = vector.extract_strided_slice %162 {offsets = [0, 0], sizes = [8, 128], strides = [1, 1]} : vector<8x384xf32> to vector<8x128xf32>
    %168 = arith.addf %166, %167 : vector<8x128xf32>
    %169 = arith.negf %168 : vector<8x128xf32>
    %170 = math.exp %169 : vector<8x128xf32>
    %cst_56 = arith.constant 1.000000e+00 : f32
    %171 = vector.broadcast %cst_56 : f32 to vector<8x128xf32>
    %172 = arith.addf %171, %170 : vector<8x128xf32>
    %173 = arith.divf %171, %172 : vector<8x128xf32>
    %174 = vector.extract_strided_slice %165 {offsets = [0, 128], sizes = [8, 128], strides = [1, 1]} : vector<8x384xf32> to vector<8x128xf32>
    %175 = vector.extract_strided_slice %162 {offsets = [0, 128], sizes = [8, 128], strides = [1, 1]} : vector<8x384xf32> to vector<8x128xf32>
    %176 = arith.addf %174, %175 : vector<8x128xf32>
    %177 = arith.negf %176 : vector<8x128xf32>
    %178 = math.exp %177 : vector<8x128xf32>
    %cst_57 = arith.constant 1.000000e+00 : f32
    %179 = vector.broadcast %cst_57 : f32 to vector<8x128xf32>
    %180 = arith.addf %179, %178 : vector<8x128xf32>
    %181 = arith.divf %179, %180 : vector<8x128xf32>
    %182 = vector.extract_strided_slice %165 {offsets = [0, 256], sizes = [8, 128], strides = [1, 1]} : vector<8x384xf32> to vector<8x128xf32>
    %183 = vector.extract_strided_slice %162 {offsets = [0, 256], sizes = [8, 128], strides = [1, 1]} : vector<8x384xf32> to vector<8x128xf32>
    %184 = arith.addf %183, %15 : vector<8x128xf32>
    %185 = arith.mulf %173, %184 : vector<8x128xf32>
    %186 = arith.addf %182, %185 : vector<8x128xf32>
    %187 = math.tanh %186 : vector<8x128xf32>
    %cst_58 = arith.constant 1.000000e+00 : f32
    %188 = vector.broadcast %cst_58 : f32 to vector<8x128xf32>
    %189 = arith.subf %188, %181 : vector<8x128xf32>
    %190 = arith.mulf %189, %187 : vector<8x128xf32>
    %191 = arith.mulf %181, %156 : vector<8x128xf32>
    %192 = arith.addf %190, %191 : vector<8x128xf32>
    %193 = arith.index_cast %c4_i32 : i32 to index
    %c0_59 = arith.constant 0 : index
    %c0_60 = arith.constant 0 : index
    %194 = vector.load %arg11[%193, %c0_59, %c0_60] : memref<16x8x128xf32, #tpu.memory_space<vmem>>, vector<1x8x128xf32>
    %195 = vector.shape_cast %194 : vector<1x8x128xf32> to vector<8x128xf32>
    %196 = vector.shape_cast %192 : vector<8x128xf32> to vector<1x8x128xf32>
    tpu.vector_store %arg11[%193, %c0_59, %c0_60], %196 {strides = array<i32>} : memref<16x8x128xf32, #tpu.memory_space<vmem>>, vector<1x8x128xf32>,
    %c5_i32 = arith.constant 5 : i32
    %c0_61 = arith.constant 0 : index
    %c0_62 = arith.constant 0 : index
    %197 = vector.load %arg4[%c0_61, %c0_62] : memref<128x384xf32, #tpu.memory_space<vmem>>, vector<128x384xf32>
    %cst_63 = arith.constant dense<0.000000e+00> : vector<8x384xf32>
    %198 = tpu.matmul %192, %197, %cst_63 {dimension_numbers = #tpu.dot_dimension_numbers<[1], [0], [0], [1], [0, 0, 1, 1], [], []>} : vector<8x128xf32>, vector<128x384xf32>, vector<8x384xf32> -> vector<8x384xf32>
    %199 = arith.index_cast %c5_i32 : i32 to index
    %c0_64 = arith.constant 0 : index
    %c0_65 = arith.constant 0 : index
    %200 = vector.load %arg10[%199, %c0_64, %c0_65] : memref<16x8x384xf32, #tpu.memory_space<vmem>>, vector<1x8x384xf32>
    %201 = vector.shape_cast %200 : vector<1x8x384xf32> to vector<8x384xf32>
    %202 = vector.extract_strided_slice %201 {offsets = [0, 0], sizes = [8, 128], strides = [1, 1]} : vector<8x384xf32> to vector<8x128xf32>
    %203 = vector.extract_strided_slice %198 {offsets = [0, 0], sizes = [8, 128], strides = [1, 1]} : vector<8x384xf32> to vector<8x128xf32>
    %204 = arith.addf %202, %203 : vector<8x128xf32>
    %205 = arith.negf %204 : vector<8x128xf32>
    %206 = math.exp %205 : vector<8x128xf32>
    %cst_66 = arith.constant 1.000000e+00 : f32
    %207 = vector.broadcast %cst_66 : f32 to vector<8x128xf32>
    %208 = arith.addf %207, %206 : vector<8x128xf32>
    %209 = arith.divf %207, %208 : vector<8x128xf32>
    %210 = vector.extract_strided_slice %201 {offsets = [0, 128], sizes = [8, 128], strides = [1, 1]} : vector<8x384xf32> to vector<8x128xf32>
    %211 = vector.extract_strided_slice %198 {offsets = [0, 128], sizes = [8, 128], strides = [1, 1]} : vector<8x384xf32> to vector<8x128xf32>
    %212 = arith.addf %210, %211 : vector<8x128xf32>
    %213 = arith.negf %212 : vector<8x128xf32>
    %214 = math.exp %213 : vector<8x128xf32>
    %cst_67 = arith.constant 1.000000e+00 : f32
    %215 = vector.broadcast %cst_67 : f32 to vector<8x128xf32>
    %216 = arith.addf %215, %214 : vector<8x128xf32>
    %217 = arith.divf %215, %216 : vector<8x128xf32>
    %218 = vector.extract_strided_slice %201 {offsets = [0, 256], sizes = [8, 128], strides = [1, 1]} : vector<8x384xf32> to vector<8x128xf32>
    %219 = vector.extract_strided_slice %198 {offsets = [0, 256], sizes = [8, 128], strides = [1, 1]} : vector<8x384xf32> to vector<8x128xf32>
    %220 = arith.addf %219, %15 : vector<8x128xf32>
    %221 = arith.mulf %209, %220 : vector<8x128xf32>
    %222 = arith.addf %218, %221 : vector<8x128xf32>
    %223 = math.tanh %222 : vector<8x128xf32>
    %cst_68 = arith.constant 1.000000e+00 : f32
    %224 = vector.broadcast %cst_68 : f32 to vector<8x128xf32>
    %225 = arith.subf %224, %217 : vector<8x128xf32>
    %226 = arith.mulf %225, %223 : vector<8x128xf32>
    %227 = arith.mulf %217, %192 : vector<8x128xf32>
    %228 = arith.addf %226, %227 : vector<8x128xf32>
    %229 = arith.index_cast %c5_i32 : i32 to index
    %c0_69 = arith.constant 0 : index
    %c0_70 = arith.constant 0 : index
    %230 = vector.load %arg11[%229, %c0_69, %c0_70] : memref<16x8x128xf32, #tpu.memory_space<vmem>>, vector<1x8x128xf32>
    %231 = vector.shape_cast %230 : vector<1x8x128xf32> to vector<8x128xf32>
    %232 = vector.shape_cast %228 : vector<8x128xf32> to vector<1x8x128xf32>
    tpu.vector_store %arg11[%229, %c0_69, %c0_70], %232 {strides = array<i32>} : memref<16x8x128xf32, #tpu.memory_space<vmem>>, vector<1x8x128xf32>,
    %c6_i32 = arith.constant 6 : i32
    %c0_71 = arith.constant 0 : index
    %c0_72 = arith.constant 0 : index
    %233 = vector.load %arg4[%c0_71, %c0_72] : memref<128x384xf32, #tpu.memory_space<vmem>>, vector<128x384xf32>
    %cst_73 = arith.constant dense<0.000000e+00> : vector<8x384xf32>
    %234 = tpu.matmul %228, %233, %cst_73 {dimension_numbers = #tpu.dot_dimension_numbers<[1], [0], [0], [1], [0, 0, 1, 1], [], []>} : vector<8x128xf32>, vector<128x384xf32>, vector<8x384xf32> -> vector<8x384xf32>
    %235 = arith.index_cast %c6_i32 : i32 to index
    %c0_74 = arith.constant 0 : index
    %c0_75 = arith.constant 0 : index
    %236 = vector.load %arg10[%235, %c0_74, %c0_75] : memref<16x8x384xf32, #tpu.memory_space<vmem>>, vector<1x8x384xf32>
    %237 = vector.shape_cast %236 : vector<1x8x384xf32> to vector<8x384xf32>
    %238 = vector.extract_strided_slice %237 {offsets = [0, 0], sizes = [8, 128], strides = [1, 1]} : vector<8x384xf32> to vector<8x128xf32>
    %239 = vector.extract_strided_slice %234 {offsets = [0, 0], sizes = [8, 128], strides = [1, 1]} : vector<8x384xf32> to vector<8x128xf32>
    %240 = arith.addf %238, %239 : vector<8x128xf32>
    %241 = arith.negf %240 : vector<8x128xf32>
    %242 = math.exp %241 : vector<8x128xf32>
    %cst_76 = arith.constant 1.000000e+00 : f32
    %243 = vector.broadcast %cst_76 : f32 to vector<8x128xf32>
    %244 = arith.addf %243, %242 : vector<8x128xf32>
    %245 = arith.divf %243, %244 : vector<8x128xf32>
    %246 = vector.extract_strided_slice %237 {offsets = [0, 128], sizes = [8, 128], strides = [1, 1]} : vector<8x384xf32> to vector<8x128xf32>
    %247 = vector.extract_strided_slice %234 {offsets = [0, 128], sizes = [8, 128], strides = [1, 1]} : vector<8x384xf32> to vector<8x128xf32>
    %248 = arith.addf %246, %247 : vector<8x128xf32>
    %249 = arith.negf %248 : vector<8x128xf32>
    %250 = math.exp %249 : vector<8x128xf32>
    %cst_77 = arith.constant 1.000000e+00 : f32
    %251 = vector.broadcast %cst_77 : f32 to vector<8x128xf32>
    %252 = arith.addf %251, %250 : vector<8x128xf32>
    %253 = arith.divf %251, %252 : vector<8x128xf32>
    %254 = vector.extract_strided_slice %237 {offsets = [0, 256], sizes = [8, 128], strides = [1, 1]} : vector<8x384xf32> to vector<8x128xf32>
    %255 = vector.extract_strided_slice %234 {offsets = [0, 256], sizes = [8, 128], strides = [1, 1]} : vector<8x384xf32> to vector<8x128xf32>
    %256 = arith.addf %255, %15 : vector<8x128xf32>
    %257 = arith.mulf %245, %256 : vector<8x128xf32>
    %258 = arith.addf %254, %257 : vector<8x128xf32>
    %259 = math.tanh %258 : vector<8x128xf32>
    %cst_78 = arith.constant 1.000000e+00 : f32
    %260 = vector.broadcast %cst_78 : f32 to vector<8x128xf32>
    %261 = arith.subf %260, %253 : vector<8x128xf32>
    %262 = arith.mulf %261, %259 : vector<8x128xf32>
    %263 = arith.mulf %253, %228 : vector<8x128xf32>
    %264 = arith.addf %262, %263 : vector<8x128xf32>
    %265 = arith.index_cast %c6_i32 : i32 to index
    %c0_79 = arith.constant 0 : index
    %c0_80 = arith.constant 0 : index
    %266 = vector.load %arg11[%265, %c0_79, %c0_80] : memref<16x8x128xf32, #tpu.memory_space<vmem>>, vector<1x8x128xf32>
    %267 = vector.shape_cast %266 : vector<1x8x128xf32> to vector<8x128xf32>
    %268 = vector.shape_cast %264 : vector<8x128xf32> to vector<1x8x128xf32>
    tpu.vector_store %arg11[%265, %c0_79, %c0_80], %268 {strides = array<i32>} : memref<16x8x128xf32, #tpu.memory_space<vmem>>, vector<1x8x128xf32>,
    %c7_i32 = arith.constant 7 : i32
    %c0_81 = arith.constant 0 : index
    %c0_82 = arith.constant 0 : index
    %269 = vector.load %arg4[%c0_81, %c0_82] : memref<128x384xf32, #tpu.memory_space<vmem>>, vector<128x384xf32>
    %cst_83 = arith.constant dense<0.000000e+00> : vector<8x384xf32>
    %270 = tpu.matmul %264, %269, %cst_83 {dimension_numbers = #tpu.dot_dimension_numbers<[1], [0], [0], [1], [0, 0, 1, 1], [], []>} : vector<8x128xf32>, vector<128x384xf32>, vector<8x384xf32> -> vector<8x384xf32>
    %271 = arith.index_cast %c7_i32 : i32 to index
    %c0_84 = arith.constant 0 : index
    %c0_85 = arith.constant 0 : index
    %272 = vector.load %arg10[%271, %c0_84, %c0_85] : memref<16x8x384xf32, #tpu.memory_space<vmem>>, vector<1x8x384xf32>
    %273 = vector.shape_cast %272 : vector<1x8x384xf32> to vector<8x384xf32>
    %274 = vector.extract_strided_slice %273 {offsets = [0, 0], sizes = [8, 128], strides = [1, 1]} : vector<8x384xf32> to vector<8x128xf32>
    %275 = vector.extract_strided_slice %270 {offsets = [0, 0], sizes = [8, 128], strides = [1, 1]} : vector<8x384xf32> to vector<8x128xf32>
    %276 = arith.addf %274, %275 : vector<8x128xf32>
    %277 = arith.negf %276 : vector<8x128xf32>
    %278 = math.exp %277 : vector<8x128xf32>
    %cst_86 = arith.constant 1.000000e+00 : f32
    %279 = vector.broadcast %cst_86 : f32 to vector<8x128xf32>
    %280 = arith.addf %279, %278 : vector<8x128xf32>
    %281 = arith.divf %279, %280 : vector<8x128xf32>
    %282 = vector.extract_strided_slice %273 {offsets = [0, 128], sizes = [8, 128], strides = [1, 1]} : vector<8x384xf32> to vector<8x128xf32>
    %283 = vector.extract_strided_slice %270 {offsets = [0, 128], sizes = [8, 128], strides = [1, 1]} : vector<8x384xf32> to vector<8x128xf32>
    %284 = arith.addf %282, %283 : vector<8x128xf32>
    %285 = arith.negf %284 : vector<8x128xf32>
    %286 = math.exp %285 : vector<8x128xf32>
    %cst_87 = arith.constant 1.000000e+00 : f32
    %287 = vector.broadcast %cst_87 : f32 to vector<8x128xf32>
    %288 = arith.addf %287, %286 : vector<8x128xf32>
    %289 = arith.divf %287, %288 : vector<8x128xf32>
    %290 = vector.extract_strided_slice %273 {offsets = [0, 256], sizes = [8, 128], strides = [1, 1]} : vector<8x384xf32> to vector<8x128xf32>
    %291 = vector.extract_strided_slice %270 {offsets = [0, 256], sizes = [8, 128], strides = [1, 1]} : vector<8x384xf32> to vector<8x128xf32>
    %292 = arith.addf %291, %15 : vector<8x128xf32>
    %293 = arith.mulf %281, %292 : vector<8x128xf32>
    %294 = arith.addf %290, %293 : vector<8x128xf32>
    %295 = math.tanh %294 : vector<8x128xf32>
    %cst_88 = arith.constant 1.000000e+00 : f32
    %296 = vector.broadcast %cst_88 : f32 to vector<8x128xf32>
    %297 = arith.subf %296, %289 : vector<8x128xf32>
    %298 = arith.mulf %297, %295 : vector<8x128xf32>
    %299 = arith.mulf %289, %264 : vector<8x128xf32>
    %300 = arith.addf %298, %299 : vector<8x128xf32>
    %301 = arith.index_cast %c7_i32 : i32 to index
    %c0_89 = arith.constant 0 : index
    %c0_90 = arith.constant 0 : index
    %302 = vector.load %arg11[%301, %c0_89, %c0_90] : memref<16x8x128xf32, #tpu.memory_space<vmem>>, vector<1x8x128xf32>
    %303 = vector.shape_cast %302 : vector<1x8x128xf32> to vector<8x128xf32>
    %304 = vector.shape_cast %300 : vector<8x128xf32> to vector<1x8x128xf32>
    tpu.vector_store %arg11[%301, %c0_89, %c0_90], %304 {strides = array<i32>} : memref<16x8x128xf32, #tpu.memory_space<vmem>>, vector<1x8x128xf32>,
    %c8_i32 = arith.constant 8 : i32
    %c0_91 = arith.constant 0 : index
    %c0_92 = arith.constant 0 : index
    %305 = vector.load %arg4[%c0_91, %c0_92] : memref<128x384xf32, #tpu.memory_space<vmem>>, vector<128x384xf32>
    %cst_93 = arith.constant dense<0.000000e+00> : vector<8x384xf32>
    %306 = tpu.matmul %300, %305, %cst_93 {dimension_numbers = #tpu.dot_dimension_numbers<[1], [0], [0], [1], [0, 0, 1, 1], [], []>} : vector<8x128xf32>, vector<128x384xf32>, vector<8x384xf32> -> vector<8x384xf32>
    %307 = arith.index_cast %c8_i32 : i32 to index
    %c0_94 = arith.constant 0 : index
    %c0_95 = arith.constant 0 : index
    %308 = vector.load %arg10[%307, %c0_94, %c0_95] : memref<16x8x384xf32, #tpu.memory_space<vmem>>, vector<1x8x384xf32>
    %309 = vector.shape_cast %308 : vector<1x8x384xf32> to vector<8x384xf32>
    %310 = vector.extract_strided_slice %309 {offsets = [0, 0], sizes = [8, 128], strides = [1, 1]} : vector<8x384xf32> to vector<8x128xf32>
    %311 = vector.extract_strided_slice %306 {offsets = [0, 0], sizes = [8, 128], strides = [1, 1]} : vector<8x384xf32> to vector<8x128xf32>
    %312 = arith.addf %310, %311 : vector<8x128xf32>
    %313 = arith.negf %312 : vector<8x128xf32>
    %314 = math.exp %313 : vector<8x128xf32>
    %cst_96 = arith.constant 1.000000e+00 : f32
    %315 = vector.broadcast %cst_96 : f32 to vector<8x128xf32>
    %316 = arith.addf %315, %314 : vector<8x128xf32>
    %317 = arith.divf %315, %316 : vector<8x128xf32>
    %318 = vector.extract_strided_slice %309 {offsets = [0, 128], sizes = [8, 128], strides = [1, 1]} : vector<8x384xf32> to vector<8x128xf32>
    %319 = vector.extract_strided_slice %306 {offsets = [0, 128], sizes = [8, 128], strides = [1, 1]} : vector<8x384xf32> to vector<8x128xf32>
    %320 = arith.addf %318, %319 : vector<8x128xf32>
    %321 = arith.negf %320 : vector<8x128xf32>
    %322 = math.exp %321 : vector<8x128xf32>
    %cst_97 = arith.constant 1.000000e+00 : f32
    %323 = vector.broadcast %cst_97 : f32 to vector<8x128xf32>
    %324 = arith.addf %323, %322 : vector<8x128xf32>
    %325 = arith.divf %323, %324 : vector<8x128xf32>
    %326 = vector.extract_strided_slice %309 {offsets = [0, 256], sizes = [8, 128], strides = [1, 1]} : vector<8x384xf32> to vector<8x128xf32>
    %327 = vector.extract_strided_slice %306 {offsets = [0, 256], sizes = [8, 128], strides = [1, 1]} : vector<8x384xf32> to vector<8x128xf32>
    %328 = arith.addf %327, %15 : vector<8x128xf32>
    %329 = arith.mulf %317, %328 : vector<8x128xf32>
    %330 = arith.addf %326, %329 : vector<8x128xf32>
    %331 = math.tanh %330 : vector<8x128xf32>
    %cst_98 = arith.constant 1.000000e+00 : f32
    %332 = vector.broadcast %cst_98 : f32 to vector<8x128xf32>
    %333 = arith.subf %332, %325 : vector<8x128xf32>
    %334 = arith.mulf %333, %331 : vector<8x128xf32>
    %335 = arith.mulf %325, %300 : vector<8x128xf32>
    %336 = arith.addf %334, %335 : vector<8x128xf32>
    %337 = arith.index_cast %c8_i32 : i32 to index
    %c0_99 = arith.constant 0 : index
    %c0_100 = arith.constant 0 : index
    %338 = vector.load %arg11[%337, %c0_99, %c0_100] : memref<16x8x128xf32, #tpu.memory_space<vmem>>, vector<1x8x128xf32>
    %339 = vector.shape_cast %338 : vector<1x8x128xf32> to vector<8x128xf32>
    %340 = vector.shape_cast %336 : vector<8x128xf32> to vector<1x8x128xf32>
    tpu.vector_store %arg11[%337, %c0_99, %c0_100], %340 {strides = array<i32>} : memref<16x8x128xf32, #tpu.memory_space<vmem>>, vector<1x8x128xf32>,
    %c9_i32 = arith.constant 9 : i32
    %c0_101 = arith.constant 0 : index
    %c0_102 = arith.constant 0 : index
    %341 = vector.load %arg4[%c0_101, %c0_102] : memref<128x384xf32, #tpu.memory_space<vmem>>, vector<128x384xf32>
    %cst_103 = arith.constant dense<0.000000e+00> : vector<8x384xf32>
    %342 = tpu.matmul %336, %341, %cst_103 {dimension_numbers = #tpu.dot_dimension_numbers<[1], [0], [0], [1], [0, 0, 1, 1], [], []>} : vector<8x128xf32>, vector<128x384xf32>, vector<8x384xf32> -> vector<8x384xf32>
    %343 = arith.index_cast %c9_i32 : i32 to index
    %c0_104 = arith.constant 0 : index
    %c0_105 = arith.constant 0 : index
    %344 = vector.load %arg10[%343, %c0_104, %c0_105] : memref<16x8x384xf32, #tpu.memory_space<vmem>>, vector<1x8x384xf32>
    %345 = vector.shape_cast %344 : vector<1x8x384xf32> to vector<8x384xf32>
    %346 = vector.extract_strided_slice %345 {offsets = [0, 0], sizes = [8, 128], strides = [1, 1]} : vector<8x384xf32> to vector<8x128xf32>
    %347 = vector.extract_strided_slice %342 {offsets = [0, 0], sizes = [8, 128], strides = [1, 1]} : vector<8x384xf32> to vector<8x128xf32>
    %348 = arith.addf %346, %347 : vector<8x128xf32>
    %349 = arith.negf %348 : vector<8x128xf32>
    %350 = math.exp %349 : vector<8x128xf32>
    %cst_106 = arith.constant 1.000000e+00 : f32
    %351 = vector.broadcast %cst_106 : f32 to vector<8x128xf32>
    %352 = arith.addf %351, %350 : vector<8x128xf32>
    %353 = arith.divf %351, %352 : vector<8x128xf32>
    %354 = vector.extract_strided_slice %345 {offsets = [0, 128], sizes = [8, 128], strides = [1, 1]} : vector<8x384xf32> to vector<8x128xf32>
    %355 = vector.extract_strided_slice %342 {offsets = [0, 128], sizes = [8, 128], strides = [1, 1]} : vector<8x384xf32> to vector<8x128xf32>
    %356 = arith.addf %354, %355 : vector<8x128xf32>
    %357 = arith.negf %356 : vector<8x128xf32>
    %358 = math.exp %357 : vector<8x128xf32>
    %cst_107 = arith.constant 1.000000e+00 : f32
    %359 = vector.broadcast %cst_107 : f32 to vector<8x128xf32>
    %360 = arith.addf %359, %358 : vector<8x128xf32>
    %361 = arith.divf %359, %360 : vector<8x128xf32>
    %362 = vector.extract_strided_slice %345 {offsets = [0, 256], sizes = [8, 128], strides = [1, 1]} : vector<8x384xf32> to vector<8x128xf32>
    %363 = vector.extract_strided_slice %342 {offsets = [0, 256], sizes = [8, 128], strides = [1, 1]} : vector<8x384xf32> to vector<8x128xf32>
    %364 = arith.addf %363, %15 : vector<8x128xf32>
    %365 = arith.mulf %353, %364 : vector<8x128xf32>
    %366 = arith.addf %362, %365 : vector<8x128xf32>
    %367 = math.tanh %366 : vector<8x128xf32>
    %cst_108 = arith.constant 1.000000e+00 : f32
    %368 = vector.broadcast %cst_108 : f32 to vector<8x128xf32>
    %369 = arith.subf %368, %361 : vector<8x128xf32>
    %370 = arith.mulf %369, %367 : vector<8x128xf32>
    %371 = arith.mulf %361, %336 : vector<8x128xf32>
    %372 = arith.addf %370, %371 : vector<8x128xf32>
    %373 = arith.index_cast %c9_i32 : i32 to index
    %c0_109 = arith.constant 0 : index
    %c0_110 = arith.constant 0 : index
    %374 = vector.load %arg11[%373, %c0_109, %c0_110] : memref<16x8x128xf32, #tpu.memory_space<vmem>>, vector<1x8x128xf32>
    %375 = vector.shape_cast %374 : vector<1x8x128xf32> to vector<8x128xf32>
    %376 = vector.shape_cast %372 : vector<8x128xf32> to vector<1x8x128xf32>
    tpu.vector_store %arg11[%373, %c0_109, %c0_110], %376 {strides = array<i32>} : memref<16x8x128xf32, #tpu.memory_space<vmem>>, vector<1x8x128xf32>,
    %c10_i32 = arith.constant 10 : i32
    %c0_111 = arith.constant 0 : index
    %c0_112 = arith.constant 0 : index
    %377 = vector.load %arg4[%c0_111, %c0_112] : memref<128x384xf32, #tpu.memory_space<vmem>>, vector<128x384xf32>
    %cst_113 = arith.constant dense<0.000000e+00> : vector<8x384xf32>
    %378 = tpu.matmul %372, %377, %cst_113 {dimension_numbers = #tpu.dot_dimension_numbers<[1], [0], [0], [1], [0, 0, 1, 1], [], []>} : vector<8x128xf32>, vector<128x384xf32>, vector<8x384xf32> -> vector<8x384xf32>
    %379 = arith.index_cast %c10_i32 : i32 to index
    %c0_114 = arith.constant 0 : index
    %c0_115 = arith.constant 0 : index
    %380 = vector.load %arg10[%379, %c0_114, %c0_115] : memref<16x8x384xf32, #tpu.memory_space<vmem>>, vector<1x8x384xf32>
    %381 = vector.shape_cast %380 : vector<1x8x384xf32> to vector<8x384xf32>
    %382 = vector.extract_strided_slice %381 {offsets = [0, 0], sizes = [8, 128], strides = [1, 1]} : vector<8x384xf32> to vector<8x128xf32>
    %383 = vector.extract_strided_slice %378 {offsets = [0, 0], sizes = [8, 128], strides = [1, 1]} : vector<8x384xf32> to vector<8x128xf32>
    %384 = arith.addf %382, %383 : vector<8x128xf32>
    %385 = arith.negf %384 : vector<8x128xf32>
    %386 = math.exp %385 : vector<8x128xf32>
    %cst_116 = arith.constant 1.000000e+00 : f32
    %387 = vector.broadcast %cst_116 : f32 to vector<8x128xf32>
    %388 = arith.addf %387, %386 : vector<8x128xf32>
    %389 = arith.divf %387, %388 : vector<8x128xf32>
    %390 = vector.extract_strided_slice %381 {offsets = [0, 128], sizes = [8, 128], strides = [1, 1]} : vector<8x384xf32> to vector<8x128xf32>
    %391 = vector.extract_strided_slice %378 {offsets = [0, 128], sizes = [8, 128], strides = [1, 1]} : vector<8x384xf32> to vector<8x128xf32>
    %392 = arith.addf %390, %391 : vector<8x128xf32>
    %393 = arith.negf %392 : vector<8x128xf32>
    %394 = math.exp %393 : vector<8x128xf32>
    %cst_117 = arith.constant 1.000000e+00 : f32
    %395 = vector.broadcast %cst_117 : f32 to vector<8x128xf32>
    %396 = arith.addf %395, %394 : vector<8x128xf32>
    %397 = arith.divf %395, %396 : vector<8x128xf32>
    %398 = vector.extract_strided_slice %381 {offsets = [0, 256], sizes = [8, 128], strides = [1, 1]} : vector<8x384xf32> to vector<8x128xf32>
    %399 = vector.extract_strided_slice %378 {offsets = [0, 256], sizes = [8, 128], strides = [1, 1]} : vector<8x384xf32> to vector<8x128xf32>
    %400 = arith.addf %399, %15 : vector<8x128xf32>
    %401 = arith.mulf %389, %400 : vector<8x128xf32>
    %402 = arith.addf %398, %401 : vector<8x128xf32>
    %403 = math.tanh %402 : vector<8x128xf32>
    %cst_118 = arith.constant 1.000000e+00 : f32
    %404 = vector.broadcast %cst_118 : f32 to vector<8x128xf32>
    %405 = arith.subf %404, %397 : vector<8x128xf32>
    %406 = arith.mulf %405, %403 : vector<8x128xf32>
    %407 = arith.mulf %397, %372 : vector<8x128xf32>
    %408 = arith.addf %406, %407 : vector<8x128xf32>
    %409 = arith.index_cast %c10_i32 : i32 to index
    %c0_119 = arith.constant 0 : index
    %c0_120 = arith.constant 0 : index
    %410 = vector.load %arg11[%409, %c0_119, %c0_120] : memref<16x8x128xf32, #tpu.memory_space<vmem>>, vector<1x8x128xf32>
    %411 = vector.shape_cast %410 : vector<1x8x128xf32> to vector<8x128xf32>
    %412 = vector.shape_cast %408 : vector<8x128xf32> to vector<1x8x128xf32>
    tpu.vector_store %arg11[%409, %c0_119, %c0_120], %412 {strides = array<i32>} : memref<16x8x128xf32, #tpu.memory_space<vmem>>, vector<1x8x128xf32>,
    %c11_i32 = arith.constant 11 : i32
    %c0_121 = arith.constant 0 : index
    %c0_122 = arith.constant 0 : index
    %413 = vector.load %arg4[%c0_121, %c0_122] : memref<128x384xf32, #tpu.memory_space<vmem>>, vector<128x384xf32>
    %cst_123 = arith.constant dense<0.000000e+00> : vector<8x384xf32>
    %414 = tpu.matmul %408, %413, %cst_123 {dimension_numbers = #tpu.dot_dimension_numbers<[1], [0], [0], [1], [0, 0, 1, 1], [], []>} : vector<8x128xf32>, vector<128x384xf32>, vector<8x384xf32> -> vector<8x384xf32>
    %415 = arith.index_cast %c11_i32 : i32 to index
    %c0_124 = arith.constant 0 : index
    %c0_125 = arith.constant 0 : index
    %416 = vector.load %arg10[%415, %c0_124, %c0_125] : memref<16x8x384xf32, #tpu.memory_space<vmem>>, vector<1x8x384xf32>
    %417 = vector.shape_cast %416 : vector<1x8x384xf32> to vector<8x384xf32>
    %418 = vector.extract_strided_slice %417 {offsets = [0, 0], sizes = [8, 128], strides = [1, 1]} : vector<8x384xf32> to vector<8x128xf32>
    %419 = vector.extract_strided_slice %414 {offsets = [0, 0], sizes = [8, 128], strides = [1, 1]} : vector<8x384xf32> to vector<8x128xf32>
    %420 = arith.addf %418, %419 : vector<8x128xf32>
    %421 = arith.negf %420 : vector<8x128xf32>
    %422 = math.exp %421 : vector<8x128xf32>
    %cst_126 = arith.constant 1.000000e+00 : f32
    %423 = vector.broadcast %cst_126 : f32 to vector<8x128xf32>
    %424 = arith.addf %423, %422 : vector<8x128xf32>
    %425 = arith.divf %423, %424 : vector<8x128xf32>
    %426 = vector.extract_strided_slice %417 {offsets = [0, 128], sizes = [8, 128], strides = [1, 1]} : vector<8x384xf32> to vector<8x128xf32>
    %427 = vector.extract_strided_slice %414 {offsets = [0, 128], sizes = [8, 128], strides = [1, 1]} : vector<8x384xf32> to vector<8x128xf32>
    %428 = arith.addf %426, %427 : vector<8x128xf32>
    %429 = arith.negf %428 : vector<8x128xf32>
    %430 = math.exp %429 : vector<8x128xf32>
    %cst_127 = arith.constant 1.000000e+00 : f32
    %431 = vector.broadcast %cst_127 : f32 to vector<8x128xf32>
    %432 = arith.addf %431, %430 : vector<8x128xf32>
    %433 = arith.divf %431, %432 : vector<8x128xf32>
    %434 = vector.extract_strided_slice %417 {offsets = [0, 256], sizes = [8, 128], strides = [1, 1]} : vector<8x384xf32> to vector<8x128xf32>
    %435 = vector.extract_strided_slice %414 {offsets = [0, 256], sizes = [8, 128], strides = [1, 1]} : vector<8x384xf32> to vector<8x128xf32>
    %436 = arith.addf %435, %15 : vector<8x128xf32>
    %437 = arith.mulf %425, %436 : vector<8x128xf32>
    %438 = arith.addf %434, %437 : vector<8x128xf32>
    %439 = math.tanh %438 : vector<8x128xf32>
    %cst_128 = arith.constant 1.000000e+00 : f32
    %440 = vector.broadcast %cst_128 : f32 to vector<8x128xf32>
    %441 = arith.subf %440, %433 : vector<8x128xf32>
    %442 = arith.mulf %441, %439 : vector<8x128xf32>
    %443 = arith.mulf %433, %408 : vector<8x128xf32>
    %444 = arith.addf %442, %443 : vector<8x128xf32>
    %445 = arith.index_cast %c11_i32 : i32 to index
    %c0_129 = arith.constant 0 : index
    %c0_130 = arith.constant 0 : index
    %446 = vector.load %arg11[%445, %c0_129, %c0_130] : memref<16x8x128xf32, #tpu.memory_space<vmem>>, vector<1x8x128xf32>
    %447 = vector.shape_cast %446 : vector<1x8x128xf32> to vector<8x128xf32>
    %448 = vector.shape_cast %444 : vector<8x128xf32> to vector<1x8x128xf32>
    tpu.vector_store %arg11[%445, %c0_129, %c0_130], %448 {strides = array<i32>} : memref<16x8x128xf32, #tpu.memory_space<vmem>>, vector<1x8x128xf32>,
    %c12_i32 = arith.constant 12 : i32
    %c0_131 = arith.constant 0 : index
    %c0_132 = arith.constant 0 : index
    %449 = vector.load %arg4[%c0_131, %c0_132] : memref<128x384xf32, #tpu.memory_space<vmem>>, vector<128x384xf32>
    %cst_133 = arith.constant dense<0.000000e+00> : vector<8x384xf32>
    %450 = tpu.matmul %444, %449, %cst_133 {dimension_numbers = #tpu.dot_dimension_numbers<[1], [0], [0], [1], [0, 0, 1, 1], [], []>} : vector<8x128xf32>, vector<128x384xf32>, vector<8x384xf32> -> vector<8x384xf32>
    %451 = arith.index_cast %c12_i32 : i32 to index
    %c0_134 = arith.constant 0 : index
    %c0_135 = arith.constant 0 : index
    %452 = vector.load %arg10[%451, %c0_134, %c0_135] : memref<16x8x384xf32, #tpu.memory_space<vmem>>, vector<1x8x384xf32>
    %453 = vector.shape_cast %452 : vector<1x8x384xf32> to vector<8x384xf32>
    %454 = vector.extract_strided_slice %453 {offsets = [0, 0], sizes = [8, 128], strides = [1, 1]} : vector<8x384xf32> to vector<8x128xf32>
    %455 = vector.extract_strided_slice %450 {offsets = [0, 0], sizes = [8, 128], strides = [1, 1]} : vector<8x384xf32> to vector<8x128xf32>
    %456 = arith.addf %454, %455 : vector<8x128xf32>
    %457 = arith.negf %456 : vector<8x128xf32>
    %458 = math.exp %457 : vector<8x128xf32>
    %cst_136 = arith.constant 1.000000e+00 : f32
    %459 = vector.broadcast %cst_136 : f32 to vector<8x128xf32>
    %460 = arith.addf %459, %458 : vector<8x128xf32>
    %461 = arith.divf %459, %460 : vector<8x128xf32>
    %462 = vector.extract_strided_slice %453 {offsets = [0, 128], sizes = [8, 128], strides = [1, 1]} : vector<8x384xf32> to vector<8x128xf32>
    %463 = vector.extract_strided_slice %450 {offsets = [0, 128], sizes = [8, 128], strides = [1, 1]} : vector<8x384xf32> to vector<8x128xf32>
    %464 = arith.addf %462, %463 : vector<8x128xf32>
    %465 = arith.negf %464 : vector<8x128xf32>
    %466 = math.exp %465 : vector<8x128xf32>
    %cst_137 = arith.constant 1.000000e+00 : f32
    %467 = vector.broadcast %cst_137 : f32 to vector<8x128xf32>
    %468 = arith.addf %467, %466 : vector<8x128xf32>
    %469 = arith.divf %467, %468 : vector<8x128xf32>
    %470 = vector.extract_strided_slice %453 {offsets = [0, 256], sizes = [8, 128], strides = [1, 1]} : vector<8x384xf32> to vector<8x128xf32>
    %471 = vector.extract_strided_slice %450 {offsets = [0, 256], sizes = [8, 128], strides = [1, 1]} : vector<8x384xf32> to vector<8x128xf32>
    %472 = arith.addf %471, %15 : vector<8x128xf32>
    %473 = arith.mulf %461, %472 : vector<8x128xf32>
    %474 = arith.addf %470, %473 : vector<8x128xf32>
    %475 = math.tanh %474 : vector<8x128xf32>
    %cst_138 = arith.constant 1.000000e+00 : f32
    %476 = vector.broadcast %cst_138 : f32 to vector<8x128xf32>
    %477 = arith.subf %476, %469 : vector<8x128xf32>
    %478 = arith.mulf %477, %475 : vector<8x128xf32>
    %479 = arith.mulf %469, %444 : vector<8x128xf32>
    %480 = arith.addf %478, %479 : vector<8x128xf32>
    %481 = arith.index_cast %c12_i32 : i32 to index
    %c0_139 = arith.constant 0 : index
    %c0_140 = arith.constant 0 : index
    %482 = vector.load %arg11[%481, %c0_139, %c0_140] : memref<16x8x128xf32, #tpu.memory_space<vmem>>, vector<1x8x128xf32>
    %483 = vector.shape_cast %482 : vector<1x8x128xf32> to vector<8x128xf32>
    %484 = vector.shape_cast %480 : vector<8x128xf32> to vector<1x8x128xf32>
    tpu.vector_store %arg11[%481, %c0_139, %c0_140], %484 {strides = array<i32>} : memref<16x8x128xf32, #tpu.memory_space<vmem>>, vector<1x8x128xf32>,
    %c13_i32 = arith.constant 13 : i32
    %c0_141 = arith.constant 0 : index
    %c0_142 = arith.constant 0 : index
    %485 = vector.load %arg4[%c0_141, %c0_142] : memref<128x384xf32, #tpu.memory_space<vmem>>, vector<128x384xf32>
    %cst_143 = arith.constant dense<0.000000e+00> : vector<8x384xf32>
    %486 = tpu.matmul %480, %485, %cst_143 {dimension_numbers = #tpu.dot_dimension_numbers<[1], [0], [0], [1], [0, 0, 1, 1], [], []>} : vector<8x128xf32>, vector<128x384xf32>, vector<8x384xf32> -> vector<8x384xf32>
    %487 = arith.index_cast %c13_i32 : i32 to index
    %c0_144 = arith.constant 0 : index
    %c0_145 = arith.constant 0 : index
    %488 = vector.load %arg10[%487, %c0_144, %c0_145] : memref<16x8x384xf32, #tpu.memory_space<vmem>>, vector<1x8x384xf32>
    %489 = vector.shape_cast %488 : vector<1x8x384xf32> to vector<8x384xf32>
    %490 = vector.extract_strided_slice %489 {offsets = [0, 0], sizes = [8, 128], strides = [1, 1]} : vector<8x384xf32> to vector<8x128xf32>
    %491 = vector.extract_strided_slice %486 {offsets = [0, 0], sizes = [8, 128], strides = [1, 1]} : vector<8x384xf32> to vector<8x128xf32>
    %492 = arith.addf %490, %491 : vector<8x128xf32>
    %493 = arith.negf %492 : vector<8x128xf32>
    %494 = math.exp %493 : vector<8x128xf32>
    %cst_146 = arith.constant 1.000000e+00 : f32
    %495 = vector.broadcast %cst_146 : f32 to vector<8x128xf32>
    %496 = arith.addf %495, %494 : vector<8x128xf32>
    %497 = arith.divf %495, %496 : vector<8x128xf32>
    %498 = vector.extract_strided_slice %489 {offsets = [0, 128], sizes = [8, 128], strides = [1, 1]} : vector<8x384xf32> to vector<8x128xf32>
    %499 = vector.extract_strided_slice %486 {offsets = [0, 128], sizes = [8, 128], strides = [1, 1]} : vector<8x384xf32> to vector<8x128xf32>
    %500 = arith.addf %498, %499 : vector<8x128xf32>
    %501 = arith.negf %500 : vector<8x128xf32>
    %502 = math.exp %501 : vector<8x128xf32>
    %cst_147 = arith.constant 1.000000e+00 : f32
    %503 = vector.broadcast %cst_147 : f32 to vector<8x128xf32>
    %504 = arith.addf %503, %502 : vector<8x128xf32>
    %505 = arith.divf %503, %504 : vector<8x128xf32>
    %506 = vector.extract_strided_slice %489 {offsets = [0, 256], sizes = [8, 128], strides = [1, 1]} : vector<8x384xf32> to vector<8x128xf32>
    %507 = vector.extract_strided_slice %486 {offsets = [0, 256], sizes = [8, 128], strides = [1, 1]} : vector<8x384xf32> to vector<8x128xf32>
    %508 = arith.addf %507, %15 : vector<8x128xf32>
    %509 = arith.mulf %497, %508 : vector<8x128xf32>
    %510 = arith.addf %506, %509 : vector<8x128xf32>
    %511 = math.tanh %510 : vector<8x128xf32>
    %cst_148 = arith.constant 1.000000e+00 : f32
    %512 = vector.broadcast %cst_148 : f32 to vector<8x128xf32>
    %513 = arith.subf %512, %505 : vector<8x128xf32>
    %514 = arith.mulf %513, %511 : vector<8x128xf32>
    %515 = arith.mulf %505, %480 : vector<8x128xf32>
    %516 = arith.addf %514, %515 : vector<8x128xf32>
    %517 = arith.index_cast %c13_i32 : i32 to index
    %c0_149 = arith.constant 0 : index
    %c0_150 = arith.constant 0 : index
    %518 = vector.load %arg11[%517, %c0_149, %c0_150] : memref<16x8x128xf32, #tpu.memory_space<vmem>>, vector<1x8x128xf32>
    %519 = vector.shape_cast %518 : vector<1x8x128xf32> to vector<8x128xf32>
    %520 = vector.shape_cast %516 : vector<8x128xf32> to vector<1x8x128xf32>
    tpu.vector_store %arg11[%517, %c0_149, %c0_150], %520 {strides = array<i32>} : memref<16x8x128xf32, #tpu.memory_space<vmem>>, vector<1x8x128xf32>,
    %c14_i32 = arith.constant 14 : i32
    %c0_151 = arith.constant 0 : index
    %c0_152 = arith.constant 0 : index
    %521 = vector.load %arg4[%c0_151, %c0_152] : memref<128x384xf32, #tpu.memory_space<vmem>>, vector<128x384xf32>
    %cst_153 = arith.constant dense<0.000000e+00> : vector<8x384xf32>
    %522 = tpu.matmul %516, %521, %cst_153 {dimension_numbers = #tpu.dot_dimension_numbers<[1], [0], [0], [1], [0, 0, 1, 1], [], []>} : vector<8x128xf32>, vector<128x384xf32>, vector<8x384xf32> -> vector<8x384xf32>
    %523 = arith.index_cast %c14_i32 : i32 to index
    %c0_154 = arith.constant 0 : index
    %c0_155 = arith.constant 0 : index
    %524 = vector.load %arg10[%523, %c0_154, %c0_155] : memref<16x8x384xf32, #tpu.memory_space<vmem>>, vector<1x8x384xf32>
    %525 = vector.shape_cast %524 : vector<1x8x384xf32> to vector<8x384xf32>
    %526 = vector.extract_strided_slice %525 {offsets = [0, 0], sizes = [8, 128], strides = [1, 1]} : vector<8x384xf32> to vector<8x128xf32>
    %527 = vector.extract_strided_slice %522 {offsets = [0, 0], sizes = [8, 128], strides = [1, 1]} : vector<8x384xf32> to vector<8x128xf32>
    %528 = arith.addf %526, %527 : vector<8x128xf32>
    %529 = arith.negf %528 : vector<8x128xf32>
    %530 = math.exp %529 : vector<8x128xf32>
    %cst_156 = arith.constant 1.000000e+00 : f32
    %531 = vector.broadcast %cst_156 : f32 to vector<8x128xf32>
    %532 = arith.addf %531, %530 : vector<8x128xf32>
    %533 = arith.divf %531, %532 : vector<8x128xf32>
    %534 = vector.extract_strided_slice %525 {offsets = [0, 128], sizes = [8, 128], strides = [1, 1]} : vector<8x384xf32> to vector<8x128xf32>
    %535 = vector.extract_strided_slice %522 {offsets = [0, 128], sizes = [8, 128], strides = [1, 1]} : vector<8x384xf32> to vector<8x128xf32>
    %536 = arith.addf %534, %535 : vector<8x128xf32>
    %537 = arith.negf %536 : vector<8x128xf32>
    %538 = math.exp %537 : vector<8x128xf32>
    %cst_157 = arith.constant 1.000000e+00 : f32
    %539 = vector.broadcast %cst_157 : f32 to vector<8x128xf32>
    %540 = arith.addf %539, %538 : vector<8x128xf32>
    %541 = arith.divf %539, %540 : vector<8x128xf32>
    %542 = vector.extract_strided_slice %525 {offsets = [0, 256], sizes = [8, 128], strides = [1, 1]} : vector<8x384xf32> to vector<8x128xf32>
    %543 = vector.extract_strided_slice %522 {offsets = [0, 256], sizes = [8, 128], strides = [1, 1]} : vector<8x384xf32> to vector<8x128xf32>
    %544 = arith.addf %543, %15 : vector<8x128xf32>
    %545 = arith.mulf %533, %544 : vector<8x128xf32>
    %546 = arith.addf %542, %545 : vector<8x128xf32>
    %547 = math.tanh %546 : vector<8x128xf32>
    %cst_158 = arith.constant 1.000000e+00 : f32
    %548 = vector.broadcast %cst_158 : f32 to vector<8x128xf32>
    %549 = arith.subf %548, %541 : vector<8x128xf32>
    %550 = arith.mulf %549, %547 : vector<8x128xf32>
    %551 = arith.mulf %541, %516 : vector<8x128xf32>
    %552 = arith.addf %550, %551 : vector<8x128xf32>
    %553 = arith.index_cast %c14_i32 : i32 to index
    %c0_159 = arith.constant 0 : index
    %c0_160 = arith.constant 0 : index
    %554 = vector.load %arg11[%553, %c0_159, %c0_160] : memref<16x8x128xf32, #tpu.memory_space<vmem>>, vector<1x8x128xf32>
    %555 = vector.shape_cast %554 : vector<1x8x128xf32> to vector<8x128xf32>
    %556 = vector.shape_cast %552 : vector<8x128xf32> to vector<1x8x128xf32>
    tpu.vector_store %arg11[%553, %c0_159, %c0_160], %556 {strides = array<i32>} : memref<16x8x128xf32, #tpu.memory_space<vmem>>, vector<1x8x128xf32>,
    %c15_i32 = arith.constant 15 : i32
    %c0_161 = arith.constant 0 : index
    %c0_162 = arith.constant 0 : index
    %557 = vector.load %arg4[%c0_161, %c0_162] : memref<128x384xf32, #tpu.memory_space<vmem>>, vector<128x384xf32>
    %cst_163 = arith.constant dense<0.000000e+00> : vector<8x384xf32>
    %558 = tpu.matmul %552, %557, %cst_163 {dimension_numbers = #tpu.dot_dimension_numbers<[1], [0], [0], [1], [0, 0, 1, 1], [], []>} : vector<8x128xf32>, vector<128x384xf32>, vector<8x384xf32> -> vector<8x384xf32>
    %559 = arith.index_cast %c15_i32 : i32 to index
    %c0_164 = arith.constant 0 : index
    %c0_165 = arith.constant 0 : index
    %560 = vector.load %arg10[%559, %c0_164, %c0_165] : memref<16x8x384xf32, #tpu.memory_space<vmem>>, vector<1x8x384xf32>
    %561 = vector.shape_cast %560 : vector<1x8x384xf32> to vector<8x384xf32>
    %562 = vector.extract_strided_slice %561 {offsets = [0, 0], sizes = [8, 128], strides = [1, 1]} : vector<8x384xf32> to vector<8x128xf32>
    %563 = vector.extract_strided_slice %558 {offsets = [0, 0], sizes = [8, 128], strides = [1, 1]} : vector<8x384xf32> to vector<8x128xf32>
    %564 = arith.addf %562, %563 : vector<8x128xf32>
    %565 = arith.negf %564 : vector<8x128xf32>
    %566 = math.exp %565 : vector<8x128xf32>
    %cst_166 = arith.constant 1.000000e+00 : f32
    %567 = vector.broadcast %cst_166 : f32 to vector<8x128xf32>
    %568 = arith.addf %567, %566 : vector<8x128xf32>
    %569 = arith.divf %567, %568 : vector<8x128xf32>
    %570 = vector.extract_strided_slice %561 {offsets = [0, 128], sizes = [8, 128], strides = [1, 1]} : vector<8x384xf32> to vector<8x128xf32>
    %571 = vector.extract_strided_slice %558 {offsets = [0, 128], sizes = [8, 128], strides = [1, 1]} : vector<8x384xf32> to vector<8x128xf32>
    %572 = arith.addf %570, %571 : vector<8x128xf32>
    %573 = arith.negf %572 : vector<8x128xf32>
    %574 = math.exp %573 : vector<8x128xf32>
    %cst_167 = arith.constant 1.000000e+00 : f32
    %575 = vector.broadcast %cst_167 : f32 to vector<8x128xf32>
    %576 = arith.addf %575, %574 : vector<8x128xf32>
    %577 = arith.divf %575, %576 : vector<8x128xf32>
    %578 = vector.extract_strided_slice %561 {offsets = [0, 256], sizes = [8, 128], strides = [1, 1]} : vector<8x384xf32> to vector<8x128xf32>
    %579 = vector.extract_strided_slice %558 {offsets = [0, 256], sizes = [8, 128], strides = [1, 1]} : vector<8x384xf32> to vector<8x128xf32>
    %580 = arith.addf %579, %15 : vector<8x128xf32>
    %581 = arith.mulf %569, %580 : vector<8x128xf32>
    %582 = arith.addf %578, %581 : vector<8x128xf32>
    %583 = math.tanh %582 : vector<8x128xf32>
    %cst_168 = arith.constant 1.000000e+00 : f32
    %584 = vector.broadcast %cst_168 : f32 to vector<8x128xf32>
    %585 = arith.subf %584, %577 : vector<8x128xf32>
    %586 = arith.mulf %585, %583 : vector<8x128xf32>
    %587 = arith.mulf %577, %552 : vector<8x128xf32>
    %588 = arith.addf %586, %587 : vector<8x128xf32>
    %589 = arith.index_cast %c15_i32 : i32 to index
    %c0_169 = arith.constant 0 : index
    %c0_170 = arith.constant 0 : index
    %590 = vector.load %arg11[%589, %c0_169, %c0_170] : memref<16x8x128xf32, #tpu.memory_space<vmem>>, vector<1x8x128xf32>
    %591 = vector.shape_cast %590 : vector<1x8x128xf32> to vector<8x128xf32>
    %592 = vector.shape_cast %588 : vector<8x128xf32> to vector<1x8x128xf32>
    tpu.vector_store %arg11[%589, %c0_169, %c0_170], %592 {strides = array<i32>} : memref<16x8x128xf32, #tpu.memory_space<vmem>>, vector<1x8x128xf32>,
    %c16_i32 = arith.constant 16 : i32
    %c0_171 = arith.constant 0 : index
    %c0_172 = arith.constant 0 : index
    %593 = vector.load %arg9[%c0_171, %c0_172] : memref<8x128xf32, #tpu.memory_space<vmem>>, vector<8x128xf32>
    tpu.vector_store %arg9[%c0_171, %c0_172], %588 {strides = array<i32>} : memref<8x128xf32, #tpu.memory_space<vmem>>, vector<8x128xf32>,
    %c0_173 = arith.constant 0 : index
    %c0_174 = arith.constant 0 : index
    %c0_175 = arith.constant 0 : index
    %594 = vector.load %arg11[%c0_173, %c0_174, %c0_175] : memref<16x8x128xf32, #tpu.memory_space<vmem>>, vector<16x8x128xf32>
    %595 = vector.shape_cast %594 : vector<16x8x128xf32> to vector<128x128xf32>
    %c0_176 = arith.constant 0 : index
    %c0_177 = arith.constant 0 : index
    %596 = vector.load %arg6[%c0_176, %c0_177] : memref<128x128xf32, #tpu.memory_space<vmem>>, vector<128x128xf32>
    %cst_178 = arith.constant dense<0.000000e+00> : vector<128x128xf32>
    %597 = tpu.matmul %595, %596, %cst_178 {dimension_numbers = #tpu.dot_dimension_numbers<[1], [0], [0], [1], [0, 0, 1, 1], [], []>} : vector<128x128xf32>, vector<128x128xf32>, vector<128x128xf32> -> vector<128x128xf32>
    %c0_179 = arith.constant 0 : index
    %c0_180 = arith.constant 0 : index
    %598 = vector.load %arg7[%c0_179, %c0_180] : memref<1x128xf32, #tpu.memory_space<vmem>>, vector<1x128xf32>
    %599 = vector.broadcast %598 : vector<1x128xf32> to vector<128x128xf32>
    %600 = arith.addf %597, %599 : vector<128x128xf32>
    %601 = vector.shape_cast %600 : vector<128x128xf32> to vector<16x8x128xf32>
    %c0_181 = arith.constant 0 : index
    %c0_182 = arith.constant 0 : index
    %c0_183 = arith.constant 0 : index
    %602 = vector.load %arg8[%c0_181, %c0_182, %c0_183] : memref<16x8x128xf32, #tpu.memory_space<vmem>>, vector<16x8x128xf32>
    tpu.vector_store %arg8[%c0_181, %c0_182, %c0_183], %601 {strides = array<i32>} : memref<16x8x128xf32, #tpu.memory_space<vmem>>, vector<16x8x128xf32>,
    return
  }
  func.func @transform_0(%arg0: i32) -> (i32, i32, i32) {
    %c0_i32 = arith.constant 0 : i32
    %c0_i32_0 = arith.constant 0 : i32
    %c0_i32_1 = arith.constant 0 : i32
    return %arg0, %c0_i32, %c0_i32_0 : i32, i32, i32
  }
  func.func @transform_1(%arg0: i32) -> (i32, i32) {
    %c0_i32 = arith.constant 0 : i32
    %c0_i32_0 = arith.constant 0 : i32
    %c0_i32_1 = arith.constant 0 : i32
    return %c0_i32, %c0_i32_0 : i32, i32
  }
  func.func @transform_2(%arg0: i32) -> (i32, i32) {
    %c0_i32 = arith.constant 0 : i32
    %c0_i32_0 = arith.constant 0 : i32
    return %arg0, %c0_i32 : i32, i32
  }
  func.func @transform_3(%arg0: i32) -> (i32, i32) {
    %c0_i32 = arith.constant 0 : i32
    %c0_i32_0 = arith.constant 0 : i32
    %c0_i32_1 = arith.constant 0 : i32
    return %c0_i32, %c0_i32_0 : i32, i32
  }
  func.func @transform_4(%arg0: i32) -> (i32, i32) {
    %c0_i32 = arith.constant 0 : i32
    %c0_i32_0 = arith.constant 0 : i32
    %c0_i32_1 = arith.constant 0 : i32
    return %c0_i32, %c0_i32_0 : i32, i32
  }
  func.func @transform_5(%arg0: i32) -> (i32, i32) {
    %c0_i32 = arith.constant 0 : i32
    %c0_i32_0 = arith.constant 0 : i32
    %c0_i32_1 = arith.constant 0 : i32
    return %c0_i32, %c0_i32_0 : i32, i32
  }
  func.func @transform_6(%arg0: i32) -> (i32, i32) {
    %c0_i32 = arith.constant 0 : i32
    %c0_i32_0 = arith.constant 0 : i32
    %c0_i32_1 = arith.constant 0 : i32
    return %c0_i32, %c0_i32_0 : i32, i32
  }
  func.func @transform_7(%arg0: i32) -> (i32, i32, i32) {
    %c0_i32 = arith.constant 0 : i32
    %c0_i32_0 = arith.constant 0 : i32
    %c0_i32_1 = arith.constant 0 : i32
    return %c0_i32, %arg0, %c0_i32_0 : i32, i32, i32
  }
  func.func @transform_8(%arg0: i32) -> (i32, i32) {
    %c0_i32 = arith.constant 0 : i32
    %c0_i32_0 = arith.constant 0 : i32
    return %arg0, %c0_i32 : i32, i32
  }
}

</mosaic_0001>

<llo_original>
// kernel: tpu_custom_call.1
$region0: #{tpu_custom_call.1}
  #allocation0 [shape = 'u32[]', space=smem, size = 0x4, offset = 0x4, fixed_abs, tag = 'smem constant byte address 0x4 - core index']
  #allocation1 [shape = 'u32[72,128]{1,0:T(1,128)}', space=vmem, size = 0x9000, scoped, tag = 'internal scratch']
  #allocation2 [shape = 'f32[16,8,384]{2,1,0:T(8,128)}', space=vmem, size = 0x30000, scoped, tag = 'scratch operand']
  #allocation3 [shape = 'f32[16,8,128]{2,1,0:T(8,128)}', space=vmem, size = 0x10000, scoped, tag = 'scratch operand']
  %s0 = inlined_call_operand.vmem [shape: s32[2,16,8], index: 0, kind: input, shape index: {}]
  %s1 = inlined_call_operand.hbm [shape: f32[128,384], index: 1, kind: input, shape index: {}]
  %s2 = inlined_call_operand.vmem [shape: f32[16,128], index: 2, kind: input, shape index: {}]
  %s3 = inlined_call_operand.hbm [shape: f32[128,384], index: 3, kind: input, shape index: {}]
  %s4 = inlined_call_operand.vmem [shape: f32[1,128], index: 4, kind: input, shape index: {}]
  %s5 = inlined_call_operand.hbm [shape: f32[128,128], index: 5, kind: input, shape index: {}]
  %s6 = inlined_call_operand.vmem [shape: f32[1,128], index: 6, kind: input, shape index: {}]
  %s7 = inlined_call_operand.hbm [shape: f32[16,16,128], index: 7, kind: output, shape index: {0}]
  %s8 = inlined_call_operand.hbm [shape: f32[16,128], index: 8, kind: output, shape index: {1}]
  %9 = xla_tuple %s7, %s8
  %s10 = sld [smem:[#allocation0]]
  $region81: #{tpu_custom_call.1} parent=0
    _
  %s12 = ssub.s32 1, %s10
  %s13 = scalar_select 0, %s12, %s10
  $region1: #{tpu_custom_call.1} parent=0
    #allocation4 [shape = 'u8[196608]{0}', space=vmem, size = 0x30000, scoped, tag = 'input window, operand 1, single buffered']
    #allocation5 [shape = 's32[2]{0}', space=sflag, size = 0x8, scoped, tag = 'scoped memory for tpu_custom_call.1']
    #allocation6 [shape = 's32[2]{0}', space=sflag, size = 0x8, scoped, tag = 'scoped memory for tpu_custom_call.1']
    #allocation7 [shape = 'u8[196608]{0}', space=vmem, size = 0x30000, scoped, tag = 'input window, operand 3, single buffered']
    #allocation8 [shape = 's32[1]{0}', space=sflag, size = 0x4, scoped, tag = 'scoped memory for tpu_custom_call.1']
    #allocation9 [shape = 'u8[65536]{0}', space=vmem, size = 0x10000, scoped, tag = 'input window, operand 5, single buffered']
    #allocation10 [shape = 'u8[131072]{0}', space=vmem, size = 0x20000, scoped, tag = 'output window, operand 0']
    #allocation11 [shape = 'u8[8192]{0}', space=vmem, size = 0x2000, scoped, tag = 'output window, operand 1']
    #allocation12 [shape = 's32[2]{0}', space=sflag, size = 0x8, scoped, tag = 'scoped memory for tpu_custom_call.1']
    %14 = vsyncpa [#allocation5], 0
    %15 = vsyncpa [#allocation8], 0
    %16 = vsyncpa [#allocation6], 0
    %s17 = scalar_lea.sflag [#allocation6], 1
    %18 = vsyncpa %s17, 0
    %19 = vsyncpa [#allocation12], 0
    %s20 = scalar_lea.sflag [#allocation12], 1
    %21 = vsyncpa %s20, 0
    loop: start=0, step=1, limit=4
    $region2: #{tpu_custom_call.1} parent=1 // loop_pre_header
      _
    $region3: #{tpu_custom_call.1} parent=1 // loop_header
      %s23 = sphi 0, %s27
      %p24 = scmp.ge.s32.totalorder %s23, 4
      %s33 = sphi 0, %s35
      %s36 = sphi 0, %s33
      %s37 = sphi 0, %s36
      %s53 = sphi 0, %s37
      %s57 = sphi 0, %s57
      %s59 = sphi 0, %s57
      %s60 = sphi 0, %s59
      %s74 = sphi 0, %s60
      %s80 = sphi 0, %s82
      %s83 = sphi 0, %s80
      %s84 = sphi 0, %s83
      %s100 = sphi 0, %s84
      %s104 = sphi 0, %s104
      %s106 = sphi 0, %s104
      %s107 = sphi 0, %s106
      %s121 = sphi 0, %s107
      %s125 = sphi 0, %s125
      %s127 = sphi 0, %s125
      %s128 = sphi 0, %s127
      %s142 = sphi 0, %s128
      %s146 = sphi 0, %s146
      %s148 = sphi 0, %s146
      %s149 = sphi 0, %s148
      %s163 = sphi 0, %s149
      %s167 = sphi 0, %s167
      %s169 = sphi 0, %s167
      %s170 = sphi 0, %s169
      %s184 = sphi 0, %s170
      %s190 = sphi 0, %s192
      %s193 = sphi 0, %s190
      %s194 = sphi 0, %s193
      %s210 = sphi 0, %s194
      %s216 = sphi 0, %s218
      %s219 = sphi 0, %s216
      %s220 = sphi 0, %s219
      %s236 = sphi 0, %s220
    $region4: #{tpu_custom_call.1} parent=1 // loop_header_branch
      %26 = sbr.rel (%p24) target = $region8
    $region5: #{tpu_custom_call.1} parent=1 // loop_body
      %s28 = ssub.s32 %s23, 1
      %s29 = ssub.s32 %s23, 2
      %s30 = sadd.s32 %s23, 1
      %s31 = ssub.s32 %s23, %s30
      %p32 = scmp.eq.s32.totalorder %s31, 0
      %s34 = sadd.s32 %s33, 1
      %s35 = scalar_select %p32, %s33, %s34
      %p38 = pneg %p32
      %p39 = scmp.eq.s32.totalorder %s23, 1
      %p40 = por %p38, %p39
      %p41 = scmp.ne.s32.totalorder %s33, %s36
      %p42 = scmp.eq.s32.totalorder %s23, 0
      %p43 = por %p41, %p42
      %p44 = scmp.ne.s32.totalorder %s33, %s36
      %p45 = scmp.eq.s32.totalorder %s28, 1
      %p46 = por %p44, %p45
      %p47 = scmp.ne.s32.totalorder %s36, %s37
      %p48 = scmp.eq.s32.totalorder %s28, 0
      %p49 = por %p47, %p48
      %p50 = scmp.ne.s32.totalorder %s36, %s37
      %p51 = scmp.eq.s32.totalorder %s29, 1
      %p52 = por %p50, %p51
      %p54 = scmp.ne.s32.totalorder %s37, %s53
      %p55 = scmp.eq.s32.totalorder %s29, 0
      %p56 = por %p54, %p55
      %s58 = sadd.s32 %s57, 1
      %p61 = scmp.eq.s32.totalorder %s23, 1
      %p62 = scmp.ne.s32.totalorder %s57, %s59
      %p63 = scmp.eq.s32.totalorder %s23, 0
      %p64 = por %p62, %p63
      %p65 = scmp.ne.s32.totalorder %s57, %s59
      %p66 = scmp.eq.s32.totalorder %s28, 1
      %p67 = por %p65, %p66
      %p68 = scmp.ne.s32.totalorder %s59, %s60
      %p69 = scmp.eq.s32.totalorder %s28, 0
      %p70 = por %p68, %p69
      %p71 = scmp.ne.s32.totalorder %s59, %s60
      %p72 = scmp.eq.s32.totalorder %s29, 1
      %p73 = por %p71, %p72
      %p75 = scmp.ne.s32.totalorder %s60, %s74
      %p76 = scmp.eq.s32.totalorder %s29, 0
      %p77 = por %p75, %p76
      %s78 = ssub.s32 %s23, %s30
      %p79 = scmp.eq.s32.totalorder %s78, 0
      %s81 = sadd.s32 %s80, 1
      %s82 = scalar_select %p79, %s80, %s81
      %p85 = pneg %p79
      %p86 = scmp.eq.s32.totalorder %s23, 1
      %p87 = por %p85, %p86
      %p88 = scmp.ne.s32.totalorder %s80, %s83
      %p89 = scmp.eq.s32.totalorder %s23, 0
      %p90 = por %p88, %p89
      %p91 = scmp.ne.s32.totalorder %s80, %s83
      %p92 = scmp.eq.s32.totalorder %s28, 1
      %p93 = por %p91, %p92
      %p94 = scmp.ne.s32.totalorder %s83, %s84
      %p95 = scmp.eq.s32.totalorder %s28, 0
      %p96 = por %p94, %p95
      %p97 = scmp.ne.s32.totalorder %s83, %s84
      %p98 = scmp.eq.s32.totalorder %s29, 1
      %p99 = por %p97, %p98
      %p101 = scmp.ne.s32.totalorder %s84, %s100
      %p102 = scmp.eq.s32.totalorder %s29, 0
      %p103 = por %p101, %p102
      %s105 = sadd.s32 %s104, 1
      %p108 = scmp.eq.s32.totalorder %s23, 1
      %p109 = scmp.ne.s32.totalorder %s104, %s106
      %p110 = scmp.eq.s32.totalorder %s23, 0
      %p111 = por %p109, %p110
      %p112 = scmp.ne.s32.totalorder %s104, %s106
      %p113 = scmp.eq.s32.totalorder %s28, 1
      %p114 = por %p112, %p113
      %p115 = scmp.ne.s32.totalorder %s106, %s107
      %p116 = scmp.eq.s32.totalorder %s28, 0
      %p117 = por %p115, %p116
      %p118 = scmp.ne.s32.totalorder %s106, %s107
      %p119 = scmp.eq.s32.totalorder %s29, 1
      %p120 = por %p118, %p119
      %p122 = scmp.ne.s32.totalorder %s107, %s121
      %p123 = scmp.eq.s32.totalorder %s29, 0
      %p124 = por %p122, %p123
      %s126 = sadd.s32 %s125, 1
      %p129 = scmp.eq.s32.totalorder %s23, 1
      %p130 = scmp.ne.s32.totalorder %s125, %s127
      %p131 = scmp.eq.s32.totalorder %s23, 0
      %p132 = por %p130, %p131
      %p133 = scmp.ne.s32.totalorder %s125, %s127
      %p134 = scmp.eq.s32.totalorder %s28, 1
      %p135 = por %p133, %p134
      %p136 = scmp.ne.s32.totalorder %s127, %s128
      %p137 = scmp.eq.s32.totalorder %s28, 0
      %p138 = por %p136, %p137
      %p139 = scmp.ne.s32.totalorder %s127, %s128
      %p140 = scmp.eq.s32.totalorder %s29, 1
      %p141 = por %p139, %p140
      %p143 = scmp.ne.s32.totalorder %s128, %s142
      %p144 = scmp.eq.s32.totalorder %s29, 0
      %p145 = por %p143, %p144
      %s147 = sadd.s32 %s146, 1
      %p150 = scmp.eq.s32.totalorder %s23, 1
      %p151 = scmp.ne.s32.totalorder %s146, %s148
      %p152 = scmp.eq.s32.totalorder %s23, 0
      %p153 = por %p151, %p152
      %p154 = scmp.ne.s32.totalorder %s146, %s148
      %p155 = scmp.eq.s32.totalorder %s28, 1
      %p156 = por %p154, %p155
      %p157 = scmp.ne.s32.totalorder %s148, %s149
      %p158 = scmp.eq.s32.totalorder %s28, 0
      %p159 = por %p157, %p158
      %p160 = scmp.ne.s32.totalorder %s148, %s149
      %p161 = scmp.eq.s32.totalorder %s29, 1
      %p162 = por %p160, %p161
      %p164 = scmp.ne.s32.totalorder %s149, %s163
      %p165 = scmp.eq.s32.totalorder %s29, 0
      %p166 = por %p164, %p165
      %s168 = sadd.s32 %s167, 1
      %p171 = scmp.eq.s32.totalorder %s23, 1
      %p172 = scmp.ne.s32.totalorder %s167, %s169
      %p173 = scmp.eq.s32.totalorder %s23, 0
      %p174 = por %p172, %p173
      %p175 = scmp.ne.s32.totalorder %s167, %s169
      %p176 = scmp.eq.s32.totalorder %s28, 1
      %p177 = por %p175, %p176
      %p178 = scmp.ne.s32.totalorder %s169, %s170
      %p179 = scmp.eq.s32.totalorder %s28, 0
      %p180 = por %p178, %p179
      %p181 = scmp.ne.s32.totalorder %s169, %s170
      %p182 = scmp.eq.s32.totalorder %s29, 1
      %p183 = por %p181, %p182
      %p185 = scmp.ne.s32.totalorder %s170, %s184
      %p186 = scmp.eq.s32.totalorder %s29, 0
      %p187 = por %p185, %p186
      %s188 = ssub.s32 %s23, %s30
      %p189 = scmp.eq.s32.totalorder %s188, 0
      %s191 = sadd.s32 %s190, 1
      %s192 = scalar_select %p189, %s190, %s191
      %p195 = pneg %p189
      %p196 = scmp.eq.s32.totalorder %s23, 1
      %p197 = por %p195, %p196
      %p198 = scmp.ne.s32.totalorder %s190, %s193
      %p199 = scmp.eq.s32.totalorder %s23, 0
      %p200 = por %p198, %p199
      %p201 = scmp.ne.s32.totalorder %s190, %s193
      %p202 = scmp.eq.s32.totalorder %s28, 1
      %p203 = por %p201, %p202
      %p204 = scmp.ne.s32.totalorder %s193, %s194
      %p205 = scmp.eq.s32.totalorder %s28, 0
      %p206 = por %p204, %p205
      %p207 = scmp.ne.s32.totalorder %s193, %s194
      %p208 = scmp.eq.s32.totalorder %s29, 1
      %p209 = por %p207, %p208
      %p211 = scmp.ne.s32.totalorder %s194, %s210
      %p212 = scmp.eq.s32.totalorder %s29, 0
      %p213 = por %p211, %p212
      %s214 = ssub.s32 %s23, %s30
      %p215 = scmp.eq.s32.totalorder %s214, 0
      %s217 = sadd.s32 %s216, 1
      %s218 = scalar_select %p215, %s216, %s217
      %p221 = pneg %p215
      %p222 = scmp.eq.s32.totalorder %s23, 1
      %p223 = por %p221, %p222
      %p224 = scmp.ne.s32.totalorder %s216, %s219
      %p225 = scmp.eq.s32.totalorder %s23, 0
      %p226 = por %p224, %p225
      %p227 = scmp.ne.s32.totalorder %s216, %s219
      %p228 = scmp.eq.s32.totalorder %s28, 1
      %p229 = por %p227, %p228
      %p230 = scmp.ne.s32.totalorder %s219, %s220
      %p231 = scmp.eq.s32.totalorder %s28, 0
      %p232 = por %p230, %p231
      %p233 = scmp.ne.s32.totalorder %s219, %s220
      %p234 = scmp.eq.s32.totalorder %s29, 1
      %p235 = por %p233, %p234
      %p237 = scmp.ne.s32.totalorder %s220, %s236
      %p238 = scmp.eq.s32.totalorder %s29, 0
      %p239 = por %p237, %p238
      %p240 = scmp.le.s32.totalorder 1, %s23
      %p241 = scmp.lt.s32.totalorder %s23, 3
      %p242 = pnand %p240, %p241
      %p243 = pneg %p242
      // Predicated region
      $region9: #{tpu_custom_call.1} parent=5 // pred_check
        _
      $region10: #{tpu_custom_call.1} parent=5 // pred_check_branch
        %245 = sbr.rel (%p242) target = $region12
      $region11: #{tpu_custom_call.1} parent=5 // pred_region
        %s246 = ssub.s32 %s23, 1
        // Predicated region
        $region13: #{tpu_custom_call.1} parent=11 // pred_check
          %p247 = pneg %p70
        $region14: #{tpu_custom_call.1} parent=11 // pred_check_branch
          %249 = sbr.rel (%p247) target = $region16
        $region15: #{tpu_custom_call.1} parent=11 // pred_region
          %251 = vsyncadd [#allocation5], 0
          %s252 = sshll.u32 %s1, 4
          %s253 = int_to_ptr.hbm [resolvable:$true] %s252
          %s254 = sshll.u32 [#allocation4], 4
          %s255 = int_to_ptr.vmem [resolvable:$true] %s254
          %260 = dma.hbm_to_vmem [thread:$0]  %s253, 6144, %s255, [#allocation5], 384, 384, 24
        $region16: #{tpu_custom_call.1} parent=11 // pred_fallthru
          _
        // Predicated region
        $region17: #{tpu_custom_call.1} parent=11 // pred_check
          %p261 = pneg %p117
        $region18: #{tpu_custom_call.1} parent=11 // pred_check_branch
          %263 = sbr.rel (%p261) target = $region20
        $region19: #{tpu_custom_call.1} parent=11 // pred_region
          %265 = vsyncadd [#allocation8], 0
          %s266 = sshll.u32 %s3, 4
          %s267 = int_to_ptr.hbm [resolvable:$true] %s266
          %s268 = sshll.u32 [#allocation7], 4
          %s269 = int_to_ptr.vmem [resolvable:$true] %s268
          %274 = dma.hbm_to_vmem [thread:$0]  %s267, 6144, %s269, [#allocation8], 384, 384, 24
        $region20: #{tpu_custom_call.1} parent=11 // pred_fallthru
          _
        // Predicated region
        $region21: #{tpu_custom_call.1} parent=11 // pred_check
          %p275 = pneg %p138
        $region22: #{tpu_custom_call.1} parent=11 // pred_check_branch
          %277 = sbr.rel (%p275) target = $region24
        $region23: #{tpu_custom_call.1} parent=11 // pred_region
          _
        $region24: #{tpu_custom_call.1} parent=11 // pred_fallthru
          _
        // Predicated region
        $region25: #{tpu_custom_call.1} parent=11 // pred_check
          %p278 = pneg %p159
        $region26: #{tpu_custom_call.1} parent=11 // pred_check_branch
          %280 = sbr.rel (%p278) target = $region28
        $region27: #{tpu_custom_call.1} parent=11 // pred_region
          %282 = vsyncadd [#allocation8], 0
          %s283 = sshll.u32 %s5, 4
          %s284 = int_to_ptr.hbm [resolvable:$true] %s283
          %s285 = sshll.u32 [#allocation9], 4
          %s286 = int_to_ptr.vmem [resolvable:$true] %s285
          %291 = dma.hbm_to_vmem [thread:$0]  %s284, 2048, %s286, [#allocation8], 128, 128, 8
        $region28: #{tpu_custom_call.1} parent=11 // pred_fallthru
          _
        // Predicated region
        $region29: #{tpu_custom_call.1} parent=11 // pred_check
          %p292 = pneg %p180
        $region30: #{tpu_custom_call.1} parent=11 // pred_check_branch
          %294 = sbr.rel (%p292) target = $region32
        $region31: #{tpu_custom_call.1} parent=11 // pred_region
          _
        $region32: #{tpu_custom_call.1} parent=11 // pred_fallthru
          _
      $region12: #{tpu_custom_call.1} parent=5 // pred_fallthru
        _
      %p295 = scmp.lt.s32.totalorder %s23, 2
      // Predicated region
      $region33: #{tpu_custom_call.1} parent=5 // pred_check
        %p296 = pneg %p295
      $region34: #{tpu_custom_call.1} parent=5 // pred_check_branch
        %298 = sbr.rel (%p296) target = $region36
      $region35: #{tpu_custom_call.1} parent=5 // pred_region
        // Predicated region
        $region37: #{tpu_custom_call.1} parent=35 // pred_check
          %p299 = pneg %p43
        $region38: #{tpu_custom_call.1} parent=35 // pred_check_branch
          %301 = sbr.rel (%p299) target = $region40
        $region39: #{tpu_custom_call.1} parent=35 // pred_region
          %p302 = scmp.lt.s32.totalorder %s23, 1
          %s303 = scalar_select %p302, %s23, 1
          %s304 = smul.addr %s303, 2
          %s305 = smul.addr %s304, 8
          %s306 = scalar_lea.vmem %s0, %s305
        $region40: #{tpu_custom_call.1} parent=35 // pred_fallthru
          _
        // Predicated region
        $region41: #{tpu_custom_call.1} parent=35 // pred_check
          %p307 = pneg %p90
        $region42: #{tpu_custom_call.1} parent=35 // pred_check_branch
          %309 = sbr.rel (%p307) target = $region44
        $region43: #{tpu_custom_call.1} parent=35 // pred_region
          %p310 = scmp.lt.s32.totalorder %s23, 1
          %s311 = scalar_select %p310, %s23, 1
          %s312 = smul.addr %s311, 8
          %s313 = scalar_lea.vmem %s2, %s312
        $region44: #{tpu_custom_call.1} parent=35 // pred_fallthru
          _
      $region36: #{tpu_custom_call.1} parent=5 // pred_fallthru
        _
      %p314 = scmp.le.s32.totalorder 1, %s23
      %p315 = scmp.lt.s32.totalorder %s23, 3
      %p316 = pnand %p314, %p315
      %p317 = pneg %p316
      // Predicated region
      $region45: #{tpu_custom_call.1} parent=5 // pred_check
        _
      $region46: #{tpu_custom_call.1} parent=5 // pred_check_branch
        %319 = sbr.rel (%p316) target = $region48
      $region47: #{tpu_custom_call.1} parent=5 // pred_region
        %s320 = ssub.s32 %s23, 1
        // Predicated region
        $region49: #{tpu_custom_call.1} parent=47 // pred_check
          %p321 = pneg %p70
        $region50: #{tpu_custom_call.1} parent=47 // pred_check_branch
          %323 = sbr.rel (%p321) target = $region52
        $region51: #{tpu_custom_call.1} parent=47 // pred_region
          %325 = dma.done [#allocation5], 6144
        $region52: #{tpu_custom_call.1} parent=47 // pred_fallthru
          _
        // Predicated region
        $region53: #{tpu_custom_call.1} parent=47 // pred_check
          %p326 = pneg %p117
        $region54: #{tpu_custom_call.1} parent=47 // pred_check_branch
          %328 = sbr.rel (%p326) target = $region56
        $region55: #{tpu_custom_call.1} parent=47 // pred_region
          %330 = dma.done [#allocation8], 6144
        $region56: #{tpu_custom_call.1} parent=47 // pred_fallthru
          _
        // Predicated region
        $region57: #{tpu_custom_call.1} parent=47 // pred_check
          %p331 = pneg %p159
        $region58: #{tpu_custom_call.1} parent=47 // pred_check_branch
          %333 = sbr.rel (%p331) target = $region60
        $region59: #{tpu_custom_call.1} parent=47 // pred_region
          %335 = dma.done [#allocation8], 2048
        $region60: #{tpu_custom_call.1} parent=47 // pred_fallthru
          _
        %p336 = scmp.lt.s32.totalorder %s28, 1
        %s337 = scalar_select %p336, %s28, 1
        %s338 = smul.addr %s337, 2
        %s339 = smul.addr %s338, 8
        %s340 = scalar_lea.vmem %s0, %s339
        %p341 = pneg %p49
        %p342 = pneg %p46
        %p343 = pneg %p70
        %p344 = pneg %p67
        %p345 = scmp.lt.s32.totalorder %s28, 1
        %s346 = scalar_select %p345, %s28, 1
        %s347 = smul.addr %s346, 8
        %s348 = scalar_lea.vmem %s2, %s347
        %p349 = pneg %p96
        %p350 = pneg %p93
        %p351 = pneg %p117
        %p352 = pneg %p114
        %p353 = pneg %p138
        %p354 = pneg %p135
        %p355 = pneg %p159
        %p356 = pneg %p156
        %p357 = pneg %p180
        %p358 = pneg %p177
        %p359 = pneg %p206
        %p360 = pneg %p203
        %s361 = sand.u32 %s193, 1
        %s362 = scalar_lea.sflag [#allocation6], %s361
        %s363 = sand.u32 %s193, 1
        %s364 = smul.addr %s363, 128
        %s365 = scalar_lea.vmem [#allocation10], %s364
        %p366 = pneg %p232
        %p367 = pneg %p229
        %s368 = sand.u32 %s219, 1
        %s369 = scalar_lea.sflag [#allocation12], %s368
        %s370 = sand.u32 %s219, 1
        %s371 = smul.addr %s370, 8
        %s372 = scalar_lea.vmem [#allocation11], %s371
        %p373 = scmp.lt.s32.totalorder %s28, 1
        %s374 = scalar_select %p373, %s28, 1
        %s375 = smul.addr %s374, 2
        %s376 = smul.addr %s375, 8
        %s377 = scalar_lea.vmem %s0, %s376
        %p378 = scmp.lt.s32.totalorder %s28, 1
        %s379 = scalar_select %p378, %s28, 1
        %s380 = smul.addr %s379, 8
        %s381 = scalar_lea.vmem %s2, %s380
        %v382 = vld [vmem:[%s377] sm:$0xff]
        %v383 = vld [vmem:[%s377 + $0x8] sm:$0xff]
        %v384 = vlaneseq
        %v385 = vand.u32 %v384, 127
        %v386 = vperm.slane %v382, 0
        %v387 = vlaneseq
        %v388 = vshrl.u32 %v387, 7
        %390 = vset.pattern.permute.xlu0 %v388
        %391 = vperm.xlu0 %390, %v386
        %v392 = vpop.permute.xlu0 %391
        %v393 = vperm.slane %v382, 1
        %v394 = vlaneseq
        %v395 = vshrl.u32 %v394, 7
        %397 = vset.pattern.permute.xlu0 %v395
        %398 = vperm.xlu0 %397, %v393
        %v399 = vpop.permute.xlu0 %398
        %v400 = vperm.slane %v382, 2
        %v401 = vlaneseq
        %v402 = vshrl.u32 %v401, 7
        %404 = vset.pattern.permute.xlu0 %v402
        %405 = vperm.xlu0 %404, %v400
        %v406 = vpop.permute.xlu0 %405
        %v407 = vperm.slane %v382, 3
        %v408 = vlaneseq
        %v409 = vshrl.u32 %v408, 7
        %411 = vset.pattern.permute.xlu0 %v409
        %412 = vperm.xlu0 %411, %v407
        %v413 = vpop.permute.xlu0 %412
        %v414 = vperm.slane %v382, 4
        %v415 = vlaneseq
        %v416 = vshrl.u32 %v415, 7
        %418 = vset.pattern.permute.xlu0 %v416
        %419 = vperm.xlu0 %418, %v414
        %v420 = vpop.permute.xlu0 %419
        %v421 = vperm.slane %v382, 5
        %v422 = vlaneseq
        %v423 = vshrl.u32 %v422, 7
        %425 = vset.pattern.permute.xlu0 %v423
        %426 = vperm.xlu0 %425, %v421
        %v427 = vpop.permute.xlu0 %426
        %v428 = vperm.slane %v382, 6
        %v429 = vlaneseq
        %v430 = vshrl.u32 %v429, 7
        %432 = vset.pattern.permute.xlu0 %v430
        %433 = vperm.xlu0 %432, %v428
        %v434 = vpop.permute.xlu0 %433
        %v435 = vperm.slane %v382, 7
        %v436 = vlaneseq
        %v437 = vshrl.u32 %v436, 7
        %439 = vset.pattern.permute.xlu0 %v437
        %440 = vperm.xlu0 %439, %v435
        %v441 = vpop.permute.xlu0 %440
        %v442 = vperm.slane %v383, 0
        %v443 = vlaneseq
        %v444 = vshrl.u32 %v443, 7
        %446 = vset.pattern.permute.xlu0 %v444
        %447 = vperm.xlu0 %446, %v442
        %v448 = vpop.permute.xlu0 %447
        %v449 = vperm.slane %v383, 1
        %v450 = vlaneseq
        %v451 = vshrl.u32 %v450, 7
        %453 = vset.pattern.permute.xlu0 %v451
        %454 = vperm.xlu0 %453, %v449
        %v455 = vpop.permute.xlu0 %454
        %v456 = vperm.slane %v383, 2
        %v457 = vlaneseq
        %v458 = vshrl.u32 %v457, 7
        %460 = vset.pattern.permute.xlu0 %v458
        %461 = vperm.xlu0 %460, %v456
        %v462 = vpop.permute.xlu0 %461
        %v463 = vperm.slane %v383, 3
        %v464 = vlaneseq
        %v465 = vshrl.u32 %v464, 7
        %467 = vset.pattern.permute.xlu0 %v465
        %468 = vperm.xlu0 %467, %v463
        %v469 = vpop.permute.xlu0 %468
        %v470 = vperm.slane %v383, 4
        %v471 = vlaneseq
        %v472 = vshrl.u32 %v471, 7
        %474 = vset.pattern.permute.xlu0 %v472
        %475 = vperm.xlu0 %474, %v470
        %v476 = vpop.permute.xlu0 %475
        %v477 = vperm.slane %v383, 5
        %v478 = vlaneseq
        %v479 = vshrl.u32 %v478, 7
        %481 = vset.pattern.permute.xlu0 %v479
        %482 = vperm.xlu0 %481, %v477
        %v483 = vpop.permute.xlu0 %482
        %v484 = vperm.slane %v383, 6
        %v485 = vlaneseq
        %v486 = vshrl.u32 %v485, 7
        %488 = vset.pattern.permute.xlu0 %v486
        %489 = vperm.xlu0 %488, %v484
        %v490 = vpop.permute.xlu0 %489
        %v491 = vperm.slane %v383, 7
        %v492 = vlaneseq
        %v493 = vshrl.u32 %v492, 7
        %495 = vset.pattern.permute.xlu0 %v493
        %496 = vperm.xlu0 %495, %v491
        %v497 = vpop.permute.xlu0 %496
        %vm498 = vcmp.eq.s32.totalorder %v385, %v392
        %vm499 = vcmp.eq.s32.totalorder %v385, %v399
        %vm500 = vcmp.eq.s32.totalorder %v385, %v406
        %vm501 = vcmp.eq.s32.totalorder %v385, %v413
        %vm502 = vcmp.eq.s32.totalorder %v385, %v420
        %vm503 = vcmp.eq.s32.totalorder %v385, %v427
        %vm504 = vcmp.eq.s32.totalorder %v385, %v434
        %vm505 = vcmp.eq.s32.totalorder %v385, %v441
        %vm506 = vcmp.eq.s32.totalorder %v385, %v448
        %vm507 = vcmp.eq.s32.totalorder %v385, %v455
        %vm508 = vcmp.eq.s32.totalorder %v385, %v462
        %vm509 = vcmp.eq.s32.totalorder %v385, %v469
        %vm510 = vcmp.eq.s32.totalorder %v385, %v476
        %vm511 = vcmp.eq.s32.totalorder %v385, %v483
        %vm512 = vcmp.eq.s32.totalorder %v385, %v490
        %vm513 = vcmp.eq.s32.totalorder %v385, %v497
        %v514 = vsel %vm498, 1, 0
        %v515 = vsel %vm499, 1, 0
        %v516 = vsel %vm500, 1, 0
        %v517 = vsel %vm501, 1, 0
        %v518 = vsel %vm502, 1, 0
        %v519 = vsel %vm503, 1, 0
        %v520 = vsel %vm504, 1, 0
        %v521 = vsel %vm505, 1, 0
        %v522 = vsel %vm506, 1, 0
        %v523 = vsel %vm507, 1, 0
        %v524 = vsel %vm508, 1, 0
        %v525 = vsel %vm509, 1, 0
        %v526 = vsel %vm510, 1, 0
        %v527 = vsel %vm511, 1, 0
        %v528 = vsel %vm512, 1, 0
        %v529 = vsel %vm513, 1, 0
        %v530 = vcvt.s32.f32 %v514
        %v531 = vcvt.s32.f32 %v515
        %v532 = vcvt.s32.f32 %v516
        %v533 = vcvt.s32.f32 %v517
        %v534 = vcvt.s32.f32 %v518
        %v535 = vcvt.s32.f32 %v519
        %v536 = vcvt.s32.f32 %v520
        %v537 = vcvt.s32.f32 %v521
        %v538 = vcvt.s32.f32 %v522
        %v539 = vcvt.s32.f32 %v523
        %v540 = vcvt.s32.f32 %v524
        %v541 = vcvt.s32.f32 %v525
        %v542 = vcvt.s32.f32 %v526
        %v543 = vcvt.s32.f32 %v527
        %v544 = vcvt.s32.f32 %v528
        %v545 = vcvt.s32.f32 %v529
        %v546 = vld [vmem:[#allocation4] sm:$0xff]
        %v547 = vld [vmem:[#allocation4 + $0x8] sm:$0xff]
        %v548 = vld [vmem:[#allocation4 + $0x10] sm:$0xff]
        %v549 = vld [vmem:[#allocation4 + $0x18] sm:$0xff]
        %v550 = vld [vmem:[#allocation4 + $0x20] sm:$0xff]
        %v551 = vld [vmem:[#allocation4 + $0x28] sm:$0xff]
        %v552 = vld [vmem:[#allocation4 + $0x30] sm:$0xff]
        %v553 = vld [vmem:[#allocation4 + $0x38] sm:$0xff]
        %v554 = vld [vmem:[#allocation4 + $0x40] sm:$0xff]
        %v555 = vld [vmem:[#allocation4 + $0x48] sm:$0xff]
        %v556 = vld [vmem:[#allocation4 + $0x50] sm:$0xff]
        %v557 = vld [vmem:[#allocation4 + $0x58] sm:$0xff]
        %v558 = vld [vmem:[#allocation4 + $0x60] sm:$0xff]
        %v559 = vld [vmem:[#allocation4 + $0x68] sm:$0xff]
        %v560 = vld [vmem:[#allocation4 + $0x70] sm:$0xff]
        %v561 = vld [vmem:[#allocation4 + $0x78] sm:$0xff]
        %v562 = vld [vmem:[#allocation4 + $0x80] sm:$0xff]
        %v563 = vld [vmem:[#allocation4 + $0x88] sm:$0xff]
        %v564 = vld [vmem:[#allocation4 + $0x90] sm:$0xff]
        %v565 = vld [vmem:[#allocation4 + $0x98] sm:$0xff]
        %v566 = vld [vmem:[#allocation4 + $0xa0] sm:$0xff]
        %v567 = vld [vmem:[#allocation4 + $0xa8] sm:$0xff]
        %v568 = vld [vmem:[#allocation4 + $0xb0] sm:$0xff]
        %v569 = vld [vmem:[#allocation4 + $0xb8] sm:$0xff]
        %v570 = vld [vmem:[#allocation4 + $0xc0] sm:$0xff]
        %v571 = vld [vmem:[#allocation4 + $0xc8] sm:$0xff]
        %v572 = vld [vmem:[#allocation4 + $0xd0] sm:$0xff]
        %v573 = vld [vmem:[#allocation4 + $0xd8] sm:$0xff]
        %v574 = vld [vmem:[#allocation4 + $0xe0] sm:$0xff]
        %v575 = vld [vmem:[#allocation4 + $0xe8] sm:$0xff]
        %v576 = vld [vmem:[#allocation4 + $0xf0] sm:$0xff]
        %v577 = vld [vmem:[#allocation4 + $0xf8] sm:$0xff]
        %v578 = vld [vmem:[#allocation4 + $0x100] sm:$0xff]
        %v579 = vld [vmem:[#allocation4 + $0x108] sm:$0xff]
        %v580 = vld [vmem:[#allocation4 + $0x110] sm:$0xff]
        %v581 = vld [vmem:[#allocation4 + $0x118] sm:$0xff]
        %v582 = vld [vmem:[#allocation4 + $0x120] sm:$0xff]
        %v583 = vld [vmem:[#allocation4 + $0x128] sm:$0xff]
        %v584 = vld [vmem:[#allocation4 + $0x130] sm:$0xff]
        %v585 = vld [vmem:[#allocation4 + $0x138] sm:$0xff]
        %v586 = vld [vmem:[#allocation4 + $0x140] sm:$0xff]
        %v587 = vld [vmem:[#allocation4 + $0x148] sm:$0xff]
        %v588 = vld [vmem:[#allocation4 + $0x150] sm:$0xff]
        %v589 = vld [vmem:[#allocation4 + $0x158] sm:$0xff]
        %v590 = vld [vmem:[#allocation4 + $0x160] sm:$0xff]
        %v591 = vld [vmem:[#allocation4 + $0x168] sm:$0xff]
        %v592 = vld [vmem:[#allocation4 + $0x170] sm:$0xff]
        %v593 = vld [vmem:[#allocation4 + $0x178] sm:$0xff]
        %594 = vmatpush.msra.mxu0 %v591
        %595 = vmatpush.msra.mxu0 %v588
        %596 = vmatpush.msra.mxu0 %v585
        %597 = vmatpush.msra.mxu0 %v582
        %598 = vmatpush.msra.mxu0 %v579
        %599 = vmatpush.msra.mxu0 %v576
        %600 = vmatpush.msra.mxu0 %v573
        %601 = vmatpush.msra.mxu0 %v570
        %602 = vmatpush.msra.mxu0 %v567
        %603 = vmatpush.msra.mxu0 %v564
        %604 = vmatpush.msra.mxu0 %v561
        %605 = vmatpush.msra.mxu0 %v558
        %606 = vmatpush.msra.mxu0 %v555
        %607 = vmatpush.msra.mxu0 %v552
        %608 = vmatpush.msra.mxu0 %v549
        %609 = vmatpush.msra.mxu0 %v546
        %610 = vmatmul.f32.gmra.mxu0 %v530
        %v611 = vpop.f32.mrf.mxu0
        %v612 = vadd.f32 0.0, %v611
        %613 = vmatmul.f32.gmra.mxu0 %v531
        %v614 = vpop.f32.mrf.mxu0
        %v615 = vadd.f32 0.0, %v614
        %616 = vmatmul.f32.gmra.mxu0 %v532
        %v617 = vpop.f32.mrf.mxu0
        %v618 = vadd.f32 0.0, %v617
        %619 = vmatmul.f32.gmra.mxu0 %v533
        %v620 = vpop.f32.mrf.mxu0
        %v621 = vadd.f32 0.0, %v620
        %622 = vmatmul.f32.gmra.mxu0 %v534
        %v623 = vpop.f32.mrf.mxu0
        %v624 = vadd.f32 0.0, %v623
        %625 = vmatmul.f32.gmra.mxu0 %v535
        %v626 = vpop.f32.mrf.mxu0
        %v627 = vadd.f32 0.0, %v626
        %628 = vmatmul.f32.gmra.mxu0 %v536
        %v629 = vpop.f32.mrf.mxu0
        %v630 = vadd.f32 0.0, %v629
        %631 = vmatmul.f32.gmra.mxu0 %v537
        %v632 = vpop.f32.mrf.mxu0
        %v633 = vadd.f32 0.0, %v632
        %634 = vmatmul.f32.gmra.mxu0 %v538
        %v635 = vpop.f32.mrf.mxu0
        %v636 = vadd.f32 0.0, %v635
        %637 = vmatmul.f32.gmra.mxu0 %v539
        %v638 = vpop.f32.mrf.mxu0
        %v639 = vadd.f32 0.0, %v638
        %640 = vmatmul.f32.gmra.mxu0 %v540
        %v641 = vpop.f32.mrf.mxu0
        %v642 = vadd.f32 0.0, %v641
        %643 = vmatmul.f32.gmra.mxu0 %v541
        %v644 = vpop.f32.mrf.mxu0
        %v645 = vadd.f32 0.0, %v644
        %646 = vmatmul.f32.gmra.mxu0 %v542
        %v647 = vpop.f32.mrf.mxu0
        %v648 = vadd.f32 0.0, %v647
        %649 = vmatmul.f32.gmra.mxu0 %v543
        %v650 = vpop.f32.mrf.mxu0
        %v651 = vadd.f32 0.0, %v650
        %652 = vmatmul.f32.gmra.mxu0 %v544
        %v653 = vpop.f32.mrf.mxu0
        %v654 = vadd.f32 0.0, %v653
        %655 = vmatmul.f32.gmra.mxu0 %v545
        %v656 = vpop.f32.mrf.mxu0
        %v657 = vadd.f32 0.0, %v656
        %658 = vdwg.mxu0
        %659 = vmatpush.msra.mxu0 %v592
        %660 = vmatpush.msra.mxu0 %v589
        %661 = vmatpush.msra.mxu0 %v586
        %662 = vmatpush.msra.mxu0 %v583
        %663 = vmatpush.msra.mxu0 %v580
        %664 = vmatpush.msra.mxu0 %v577
        %665 = vmatpush.msra.mxu0 %v574
        %666 = vmatpush.msra.mxu0 %v571
        %667 = vmatpush.msra.mxu0 %v568
        %668 = vmatpush.msra.mxu0 %v565
        %669 = vmatpush.msra.mxu0 %v562
        %670 = vmatpush.msra.mxu0 %v559
        %671 = vmatpush.msra.mxu0 %v556
        %672 = vmatpush.msra.mxu0 %v553
        %673 = vmatpush.msra.mxu0 %v550
        %674 = vmatpush.msra.mxu0 %v547
        %675 = vmatmul.f32.gmra.mxu0 %v530
        %v676 = vpop.f32.mrf.mxu0
        %v677 = vadd.f32 0.0, %v676
        %678 = vmatmul.f32.gmra.mxu0 %v531
        %v679 = vpop.f32.mrf.mxu0
        %v680 = vadd.f32 0.0, %v679
        %681 = vmatmul.f32.gmra.mxu0 %v532
        %v682 = vpop.f32.mrf.mxu0
        %v683 = vadd.f32 0.0, %v682
        %684 = vmatmul.f32.gmra.mxu0 %v533
        %v685 = vpop.f32.mrf.mxu0
        %v686 = vadd.f32 0.0, %v685
        %687 = vmatmul.f32.gmra.mxu0 %v534
        %v688 = vpop.f32.mrf.mxu0
        %v689 = vadd.f32 0.0, %v688
        %690 = vmatmul.f32.gmra.mxu0 %v535
        %v691 = vpop.f32.mrf.mxu0
        %v692 = vadd.f32 0.0, %v691
        %693 = vmatmul.f32.gmra.mxu0 %v536
        %v694 = vpop.f32.mrf.mxu0
        %v695 = vadd.f32 0.0, %v694
        %696 = vmatmul.f32.gmra.mxu0 %v537
        %v697 = vpop.f32.mrf.mxu0
        %v698 = vadd.f32 0.0, %v697
        %699 = vmatmul.f32.gmra.mxu0 %v538
        %v700 = vpop.f32.mrf.mxu0
        %v701 = vadd.f32 0.0, %v700
        %702 = vmatmul.f32.gmra.mxu0 %v539
        %v703 = vpop.f32.mrf.mxu0
        %v704 = vadd.f32 0.0, %v703
        %705 = vmatmul.f32.gmra.mxu0 %v540
        %v706 = vpop.f32.mrf.mxu0
        %v707 = vadd.f32 0.0, %v706
        %708 = vmatmul.f32.gmra.mxu0 %v541
        %v709 = vpop.f32.mrf.mxu0
        %v710 = vadd.f32 0.0, %v709
        %711 = vmatmul.f32.gmra.mxu0 %v542
        %v712 = vpop.f32.mrf.mxu0
        %v713 = vadd.f32 0.0, %v712
        %714 = vmatmul.f32.gmra.mxu0 %v543
        %v715 = vpop.f32.mrf.mxu0
        %v716 = vadd.f32 0.0, %v715
        %717 = vmatmul.f32.gmra.mxu0 %v544
        %v718 = vpop.f32.mrf.mxu0
        %v719 = vadd.f32 0.0, %v718
        %720 = vmatmul.f32.gmra.mxu0 %v545
        %v721 = vpop.f32.mrf.mxu0
        %v722 = vadd.f32 0.0, %v721
        %723 = vdwg.mxu0
        %724 = vmatpush.msra.mxu0 %v593
        %725 = vmatpush.msra.mxu0 %v590
        %726 = vmatpush.msra.mxu0 %v587
        %727 = vmatpush.msra.mxu0 %v584
        %728 = vmatpush.msra.mxu0 %v581
        %729 = vmatpush.msra.mxu0 %v578
        %730 = vmatpush.msra.mxu0 %v575
        %731 = vmatpush.msra.mxu0 %v572
        %732 = vmatpush.msra.mxu0 %v569
        %733 = vmatpush.msra.mxu0 %v566
        %734 = vmatpush.msra.mxu0 %v563
        %735 = vmatpush.msra.mxu0 %v560
        %736 = vmatpush.msra.mxu0 %v557
        %737 = vmatpush.msra.mxu0 %v554
        %738 = vmatpush.msra.mxu0 %v551
        %739 = vmatpush.msra.mxu0 %v548
        %740 = vmatmul.f32.gmra.mxu0 %v530
        %v741 = vpop.f32.mrf.mxu0
        %v742 = vadd.f32 0.0, %v741
        %743 = vmatmul.f32.gmra.mxu0 %v531
        %v744 = vpop.f32.mrf.mxu0
        %v745 = vadd.f32 0.0, %v744
        %746 = vmatmul.f32.gmra.mxu0 %v532
        %v747 = vpop.f32.mrf.mxu0
        %v748 = vadd.f32 0.0, %v747
        %749 = vmatmul.f32.gmra.mxu0 %v533
        %v750 = vpop.f32.mrf.mxu0
        %v751 = vadd.f32 0.0, %v750
        %752 = vmatmul.f32.gmra.mxu0 %v534
        %v753 = vpop.f32.mrf.mxu0
        %v754 = vadd.f32 0.0, %v753
        %755 = vmatmul.f32.gmra.mxu0 %v535
        %v756 = vpop.f32.mrf.mxu0
        %v757 = vadd.f32 0.0, %v756
        %758 = vmatmul.f32.gmra.mxu0 %v536
        %v759 = vpop.f32.mrf.mxu0
        %v760 = vadd.f32 0.0, %v759
        %761 = vmatmul.f32.gmra.mxu0 %v537
        %v762 = vpop.f32.mrf.mxu0
        %v763 = vadd.f32 0.0, %v762
        %764 = vmatmul.f32.gmra.mxu0 %v538
        %v765 = vpop.f32.mrf.mxu0
        %v766 = vadd.f32 0.0, %v765
        %767 = vmatmul.f32.gmra.mxu0 %v539
        %v768 = vpop.f32.mrf.mxu0
        %v769 = vadd.f32 0.0, %v768
        %770 = vmatmul.f32.gmra.mxu0 %v540
        %v771 = vpop.f32.mrf.mxu0
        %v772 = vadd.f32 0.0, %v771
        %773 = vmatmul.f32.gmra.mxu0 %v541
        %v774 = vpop.f32.mrf.mxu0
        %v775 = vadd.f32 0.0, %v774
        %776 = vmatmul.f32.gmra.mxu0 %v542
        %v777 = vpop.f32.mrf.mxu0
        %v778 = vadd.f32 0.0, %v777
        %779 = vmatmul.f32.gmra.mxu0 %v543
        %v780 = vpop.f32.mrf.mxu0
        %v781 = vadd.f32 0.0, %v780
        %782 = vmatmul.f32.gmra.mxu0 %v544
        %v783 = vpop.f32.mrf.mxu0
        %v784 = vadd.f32 0.0, %v783
        %785 = vmatmul.f32.gmra.mxu0 %v545
        %v786 = vpop.f32.mrf.mxu0
        %v787 = vadd.f32 0.0, %v786
        %788 = vdwg.mxu0
        %789 = vst [vmem:[#allocation2] sm:$0xff] %v612
        %790 = vst [vmem:[#allocation2 + $0x8] sm:$0xff] %v677
        %791 = vst [vmem:[#allocation2 + $0x10] sm:$0xff] %v742
        %792 = vst [vmem:[#allocation2 + $0x18] sm:$0xff] %v615
        %793 = vst [vmem:[#allocation2 + $0x20] sm:$0xff] %v680
        %794 = vst [vmem:[#allocation2 + $0x28] sm:$0xff] %v745
        %795 = vst [vmem:[#allocation2 + $0x30] sm:$0xff] %v618
        %796 = vst [vmem:[#allocation2 + $0x38] sm:$0xff] %v683
        %797 = vst [vmem:[#allocation2 + $0x40] sm:$0xff] %v748
        %798 = vst [vmem:[#allocation2 + $0x48] sm:$0xff] %v621
        %799 = vst [vmem:[#allocation2 + $0x50] sm:$0xff] %v686
        %800 = vst [vmem:[#allocation2 + $0x58] sm:$0xff] %v751
        %801 = vst [vmem:[#allocation2 + $0x60] sm:$0xff] %v624
        %802 = vst [vmem:[#allocation2 + $0x68] sm:$0xff] %v689
        %803 = vst [vmem:[#allocation2 + $0x70] sm:$0xff] %v754
        %804 = vst [vmem:[#allocation2 + $0x78] sm:$0xff] %v627
        %805 = vst [vmem:[#allocation2 + $0x80] sm:$0xff] %v692
        %806 = vst [vmem:[#allocation2 + $0x88] sm:$0xff] %v757
        %807 = vst [vmem:[#allocation2 + $0x90] sm:$0xff] %v630
        %808 = vst [vmem:[#allocation2 + $0x98] sm:$0xff] %v695
        %809 = vst [vmem:[#allocation2 + $0xa0] sm:$0xff] %v760
        %810 = vst [vmem:[#allocation2 + $0xa8] sm:$0xff] %v633
        %811 = vst [vmem:[#allocation2 + $0xb0] sm:$0xff] %v698
        %812 = vst [vmem:[#allocation2 + $0xb8] sm:$0xff] %v763
        %813 = vst [vmem:[#allocation2 + $0xc0] sm:$0xff] %v636
        %814 = vst [vmem:[#allocation2 + $0xc8] sm:$0xff] %v701
        %815 = vst [vmem:[#allocation2 + $0xd0] sm:$0xff] %v766
        %816 = vst [vmem:[#allocation2 + $0xd8] sm:$0xff] %v639
        %817 = vst [vmem:[#allocation2 + $0xe0] sm:$0xff] %v704
        %818 = vst [vmem:[#allocation2 + $0xe8] sm:$0xff] %v769
        %819 = vst [vmem:[#allocation2 + $0xf0] sm:$0xff] %v642
        %820 = vst [vmem:[#allocation2 + $0xf8] sm:$0xff] %v707
        %821 = vst [vmem:[#allocation2 + $0x100] sm:$0xff] %v772
        %822 = vst [vmem:[#allocation2 + $0x108] sm:$0xff] %v645
        %823 = vst [vmem:[#allocation2 + $0x110] sm:$0xff] %v710
        %824 = vst [vmem:[#allocation2 + $0x118] sm:$0xff] %v775
        %825 = vst [vmem:[#allocation2 + $0x120] sm:$0xff] %v648
        %826 = vst [vmem:[#allocation2 + $0x128] sm:$0xff] %v713
        %827 = vst [vmem:[#allocation2 + $0x130] sm:$0xff] %v778
        %828 = vst [vmem:[#allocation2 + $0x138] sm:$0xff] %v651
        %829 = vst [vmem:[#allocation2 + $0x140] sm:$0xff] %v716
        %830 = vst [vmem:[#allocation2 + $0x148] sm:$0xff] %v781
        %831 = vst [vmem:[#allocation2 + $0x150] sm:$0xff] %v654
        %832 = vst [vmem:[#allocation2 + $0x158] sm:$0xff] %v719
        %833 = vst [vmem:[#allocation2 + $0x160] sm:$0xff] %v784
        %834 = vst [vmem:[#allocation2 + $0x168] sm:$0xff] %v657
        %835 = vst [vmem:[#allocation2 + $0x170] sm:$0xff] %v722
        %836 = vst [vmem:[#allocation2 + $0x178] sm:$0xff] %v787
        %v837 = vld [vmem:[%s4] sm:$0x1]
        %v839 = vperm.slane %v837, 0
        %v841 = vld [vmem:[%s381] sm:$0xff]
        %v842 = vld [vmem:[#allocation7] sm:$0xff]
        %v843 = vld [vmem:[#allocation7 + $0x8] sm:$0xff]
        %v844 = vld [vmem:[#allocation7 + $0x10] sm:$0xff]
        %v845 = vld [vmem:[#allocation7 + $0x18] sm:$0xff]
        %v846 = vld [vmem:[#allocation7 + $0x20] sm:$0xff]
        %v847 = vld [vmem:[#allocation7 + $0x28] sm:$0xff]
        %v848 = vld [vmem:[#allocation7 + $0x30] sm:$0xff]
        %v849 = vld [vmem:[#allocation7 + $0x38] sm:$0xff]
        %v850 = vld [vmem:[#allocation7 + $0x40] sm:$0xff]
        %v851 = vld [vmem:[#allocation7 + $0x48] sm:$0xff]
        %v852 = vld [vmem:[#allocation7 + $0x50] sm:$0xff]
        %v853 = vld [vmem:[#allocation7 + $0x58] sm:$0xff]
        %v854 = vld [vmem:[#allocation7 + $0x60] sm:$0xff]
        %v855 = vld [vmem:[#allocation7 + $0x68] sm:$0xff]
        %v856 = vld [vmem:[#allocation7 + $0x70] sm:$0xff]
        %v857 = vld [vmem:[#allocation7 + $0x78] sm:$0xff]
        %v858 = vld [vmem:[#allocation7 + $0x80] sm:$0xff]
        %v859 = vld [vmem:[#allocation7 + $0x88] sm:$0xff]
        %v860 = vld [vmem:[#allocation7 + $0x90] sm:$0xff]
        %v861 = vld [vmem:[#allocation7 + $0x98] sm:$0xff]
        %v862 = vld [vmem:[#allocation7 + $0xa0] sm:$0xff]
        %v863 = vld [vmem:[#allocation7 + $0xa8] sm:$0xff]
        %v864 = vld [vmem:[#allocation7 + $0xb0] sm:$0xff]
        %v865 = vld [vmem:[#allocation7 + $0xb8] sm:$0xff]
        %v866 = vld [vmem:[#allocation7 + $0xc0] sm:$0xff]
        %v867 = vld [vmem:[#allocation7 + $0xc8] sm:$0xff]
        %v868 = vld [vmem:[#allocation7 + $0xd0] sm:$0xff]
        %v869 = vld [vmem:[#allocation7 + $0xd8] sm:$0xff]
        %v870 = vld [vmem:[#allocation7 + $0xe0] sm:$0xff]
        %v871 = vld [vmem:[#allocation7 + $0xe8] sm:$0xff]
        %v872 = vld [vmem:[#allocation7 + $0xf0] sm:$0xff]
        %v873 = vld [vmem:[#allocation7 + $0xf8] sm:$0xff]
        %v874 = vld [vmem:[#allocation7 + $0x100] sm:$0xff]
        %v875 = vld [vmem:[#allocation7 + $0x108] sm:$0xff]
        %v876 = vld [vmem:[#allocation7 + $0x110] sm:$0xff]
        %v877 = vld [vmem:[#allocation7 + $0x118] sm:$0xff]
        %v878 = vld [vmem:[#allocation7 + $0x120] sm:$0xff]
        %v879 = vld [vmem:[#allocation7 + $0x128] sm:$0xff]
        %v880 = vld [vmem:[#allocation7 + $0x130] sm:$0xff]
        %v881 = vld [vmem:[#allocation7 + $0x138] sm:$0xff]
        %v882 = vld [vmem:[#allocation7 + $0x140] sm:$0xff]
        %v883 = vld [vmem:[#allocation7 + $0x148] sm:$0xff]
        %v884 = vld [vmem:[#allocation7 + $0x150] sm:$0xff]
        %v885 = vld [vmem:[#allocation7 + $0x158] sm:$0xff]
        %v886 = vld [vmem:[#allocation7 + $0x160] sm:$0xff]
        %v887 = vld [vmem:[#allocation7 + $0x168] sm:$0xff]
        %v888 = vld [vmem:[#allocation7 + $0x170] sm:$0xff]
        %v889 = vld [vmem:[#allocation7 + $0x178] sm:$0xff]
        %890 = vmatpush.msra.mxu0 %v887
        %891 = vmatpush.msra.mxu0 %v884
        %892 = vmatpush.msra.mxu0 %v881
        %893 = vmatpush.msra.mxu0 %v878
        %894 = vmatpush.msra.mxu0 %v875
        %895 = vmatpush.msra.mxu0 %v872
        %896 = vmatpush.msra.mxu0 %v869
        %897 = vmatpush.msra.mxu0 %v866
        %898 = vmatpush.msra.mxu0 %v863
        %899 = vmatpush.msra.mxu0 %v860
        %900 = vmatpush.msra.mxu0 %v857
        %901 = vmatpush.msra.mxu0 %v854
        %902 = vmatpush.msra.mxu0 %v851
        %903 = vmatpush.msra.mxu0 %v848
        %904 = vmatpush.msra.mxu0 %v845
        %905 = vmatpush.msra.mxu0 %v842
        %906 = vmatmul.f32.gmra.mxu0 %v841
        %v907 = vpop.f32.mrf.mxu0
        %v908 = vadd.f32 0.0, %v907
        %909 = vdwg.mxu0
        %910 = vmatpush.msra.mxu0 %v888
        %911 = vmatpush.msra.mxu0 %v885
        %912 = vmatpush.msra.mxu0 %v882
        %913 = vmatpush.msra.mxu0 %v879
        %914 = vmatpush.msra.mxu0 %v876
        %915 = vmatpush.msra.mxu0 %v873
        %916 = vmatpush.msra.mxu0 %v870
        %917 = vmatpush.msra.mxu0 %v867
        %918 = vmatpush.msra.mxu0 %v864
        %919 = vmatpush.msra.mxu0 %v861
        %920 = vmatpush.msra.mxu0 %v858
        %921 = vmatpush.msra.mxu0 %v855
        %922 = vmatpush.msra.mxu0 %v852
        %923 = vmatpush.msra.mxu0 %v849
        %924 = vmatpush.msra.mxu0 %v846
        %925 = vmatpush.msra.mxu0 %v843
        %926 = vmatmul.f32.gmra.mxu0 %v841
        %v927 = vpop.f32.mrf.mxu0
        %v928 = vadd.f32 0.0, %v927
        %929 = vdwg.mxu0
        %930 = vmatpush.msra.mxu0 %v889
        %931 = vmatpush.msra.mxu0 %v886
        %932 = vmatpush.msra.mxu0 %v883
        %933 = vmatpush.msra.mxu0 %v880
        %934 = vmatpush.msra.mxu0 %v877
        %935 = vmatpush.msra.mxu0 %v874
        %936 = vmatpush.msra.mxu0 %v871
        %937 = vmatpush.msra.mxu0 %v868
        %938 = vmatpush.msra.mxu0 %v865
        %939 = vmatpush.msra.mxu0 %v862
        %940 = vmatpush.msra.mxu0 %v859
        %941 = vmatpush.msra.mxu0 %v856
        %942 = vmatpush.msra.mxu0 %v853
        %943 = vmatpush.msra.mxu0 %v850
        %944 = vmatpush.msra.mxu0 %v847
        %945 = vmatpush.msra.mxu0 %v844
        %946 = vmatmul.f32.gmra.mxu0 %v841
        %v947 = vpop.f32.mrf.mxu0
        %v948 = vadd.f32 0.0, %v947
        %949 = vdwg.mxu0
        %v950 = vld [vmem:[#allocation2] sm:$0xff]
        %v951 = vld [vmem:[#allocation2 + $0x8] sm:$0xff]
        %v952 = vld [vmem:[#allocation2 + $0x10] sm:$0xff]
        %v953 = vadd.f32 %v950, %v908
        %v954 = vxor.u32 %v953, 2147483648
        %v955 = vmul.f32 %v954, 1.442695
        %v956 = vpow.pop %v955
        %v957 = vadd.f32 %v956, 1.0
        %v958 = vrcp.pop %v957
        %v959 = vmul.f32 %v957, %v958
        %v960 = vsub.f32 1.0, %v959
        %v961 = vmul.f32 %v958, %v960
        %v962 = vadd.f32 %v958, %v961
        %vm963 = vweird.f32 %v957
        %vm964 = vweird.f32 %v958
        %vm965 = vmor %vm963, %vm964
        %v966 = vsel %vm965, %v958, %v962
        %v967 = vand.u32 2147483647, %v957
        %vm968 = vcmp.eq.f32.partialorder %v967, 8.507059e+37
        %v969 = vand.u32 %v957, 2147483648
        %v970 = vor.u32 1.1754944e-38, %v969
        %v971 = vsel %vm968, %v970, %v966
        %v972 = vmul.f32 1.0, %v971
        %v973 = vadd.f32 %v951, %v928
        %v974 = vxor.u32 %v973, 2147483648
        %v975 = vmul.f32 %v974, 1.442695
        %v976 = vpow.pop %v975
        %v977 = vadd.f32 %v976, 1.0
        %v978 = vrcp.pop %v977
        %v979 = vmul.f32 %v977, %v978
        %v980 = vsub.f32 1.0, %v979
        %v981 = vmul.f32 %v978, %v980
        %v982 = vadd.f32 %v978, %v981
        %vm983 = vweird.f32 %v977
        %vm984 = vweird.f32 %v978
        %vm985 = vmor %vm983, %vm984
        %v986 = vsel %vm985, %v978, %v982
        %v987 = vand.u32 2147483647, %v977
        %vm988 = vcmp.eq.f32.partialorder %v987, 8.507059e+37
        %v989 = vand.u32 %v977, 2147483648
        %v990 = vor.u32 1.1754944e-38, %v989
        %v991 = vsel %vm988, %v990, %v986
        %v992 = vmul.f32 1.0, %v991
        %v993 = vadd.f32 %v948, %v839
        %v994 = vmul.f32 %v972, %v993
        %v995 = vadd.f32 %v952, %v994
        %v996 = vtanh.pop %v995
        %v997 = vsub.f32 1.0, %v992
        %v998 = vmul.f32 %v997, %v996
        %v999 = vmul.f32 %v992, %v841
        %v1000 = vadd.f32 %v998, %v999
        %1001 = vst [vmem:[#allocation3] sm:$0xff] %v1000
        %v1002 = vld [vmem:[#allocation7] sm:$0xff]
        %v1003 = vld [vmem:[#allocation7 + $0x8] sm:$0xff]
        %v1004 = vld [vmem:[#allocation7 + $0x10] sm:$0xff]
        %v1005 = vld [vmem:[#allocation7 + $0x18] sm:$0xff]
        %v1006 = vld [vmem:[#allocation7 + $0x20] sm:$0xff]
        %v1007 = vld [vmem:[#allocation7 + $0x28] sm:$0xff]
        %v1008 = vld [vmem:[#allocation7 + $0x30] sm:$0xff]
        %v1009 = vld [vmem:[#allocation7 + $0x38] sm:$0xff]
        %v1010 = vld [vmem:[#allocation7 + $0x40] sm:$0xff]
        %v1011 = vld [vmem:[#allocation7 + $0x48] sm:$0xff]
        %v1012 = vld [vmem:[#allocation7 + $0x50] sm:$0xff]
        %v1013 = vld [vmem:[#allocation7 + $0x58] sm:$0xff]
        %v1014 = vld [vmem:[#allocation7 + $0x60] sm:$0xff]
        %v1015 = vld [vmem:[#allocation7 + $0x68] sm:$0xff]
        %v1016 = vld [vmem:[#allocation7 + $0x70] sm:$0xff]
        %v1017 = vld [vmem:[#allocation7 + $0x78] sm:$0xff]
        %v1018 = vld [vmem:[#allocation7 + $0x80] sm:$0xff]
        %v1019 = vld [vmem:[#allocation7 + $0x88] sm:$0xff]
        %v1020 = vld [vmem:[#allocation7 + $0x90] sm:$0xff]
        %v1021 = vld [vmem:[#allocation7 + $0x98] sm:$0xff]
        %v1022 = vld [vmem:[#allocation7 + $0xa0] sm:$0xff]
        %v1023 = vld [vmem:[#allocation7 + $0xa8] sm:$0xff]
        %v1024 = vld [vmem:[#allocation7 + $0xb0] sm:$0xff]
        %v1025 = vld [vmem:[#allocation7 + $0xb8] sm:$0xff]
        %v1026 = vld [vmem:[#allocation7 + $0xc0] sm:$0xff]
        %v1027 = vld [vmem:[#allocation7 + $0xc8] sm:$0xff]
        %v1028 = vld [vmem:[#allocation7 + $0xd0] sm:$0xff]
        %v1029 = vld [vmem:[#allocation7 + $0xd8] sm:$0xff]
        %v1030 = vld [vmem:[#allocation7 + $0xe0] sm:$0xff]
        %v1031 = vld [vmem:[#allocation7 + $0xe8] sm:$0xff]
        %v1032 = vld [vmem:[#allocation7 + $0xf0] sm:$0xff]
        %v1033 = vld [vmem:[#allocation7 + $0xf8] sm:$0xff]
        %v1034 = vld [vmem:[#allocation7 + $0x100] sm:$0xff]
        %v1035 = vld [vmem:[#allocation7 + $0x108] sm:$0xff]
        %v1036 = vld [vmem:[#allocation7 + $0x110] sm:$0xff]
        %v1037 = vld [vmem:[#allocation7 + $0x118] sm:$0xff]
        %v1038 = vld [vmem:[#allocation7 + $0x120] sm:$0xff]
        %v1039 = vld [vmem:[#allocation7 + $0x128] sm:$0xff]
        %v1040 = vld [vmem:[#allocation7 + $0x130] sm:$0xff]
        %v1041 = vld [vmem:[#allocation7 + $0x138] sm:$0xff]
        %v1042 = vld [vmem:[#allocation7 + $0x140] sm:$0xff]
        %v1043 = vld [vmem:[#allocation7 + $0x148] sm:$0xff]
        %v1044 = vld [vmem:[#allocation7 + $0x150] sm:$0xff]
        %v1045 = vld [vmem:[#allocation7 + $0x158] sm:$0xff]
        %v1046 = vld [vmem:[#allocation7 + $0x160] sm:$0xff]
        %v1047 = vld [vmem:[#allocation7 + $0x168] sm:$0xff]
        %v1048 = vld [vmem:[#allocation7 + $0x170] sm:$0xff]
        %v1049 = vld [vmem:[#allocation7 + $0x178] sm:$0xff]
        %1050 = vmatpush.msra.mxu0 %v1047
        %1051 = vmatpush.msra.mxu0 %v1044
        %1052 = vmatpush.msra.mxu0 %v1041
        %1053 = vmatpush.msra.mxu0 %v1038
        %1054 = vmatpush.msra.mxu0 %v1035
        %1055 = vmatpush.msra.mxu0 %v1032
        %1056 = vmatpush.msra.mxu0 %v1029
        %1057 = vmatpush.msra.mxu0 %v1026
        %1058 = vmatpush.msra.mxu0 %v1023
        %1059 = vmatpush.msra.mxu0 %v1020
        %1060 = vmatpush.msra.mxu0 %v1017
        %1061 = vmatpush.msra.mxu0 %v1014
        %1062 = vmatpush.msra.mxu0 %v1011
        %1063 = vmatpush.msra.mxu0 %v1008
        %1064 = vmatpush.msra.mxu0 %v1005
        %1065 = vmatpush.msra.mxu0 %v1002
        %1066 = vmatmul.f32.gmra.mxu0 %v1000
        %v1067 = vpop.f32.mrf.mxu0
        %v1068 = vadd.f32 0.0, %v1067
        %1069 = vdwg.mxu0
        %1070 = vmatpush.msra.mxu0 %v1048
        %1071 = vmatpush.msra.mxu0 %v1045
        %1072 = vmatpush.msra.mxu0 %v1042
        %1073 = vmatpush.msra.mxu0 %v1039
        %1074 = vmatpush.msra.mxu0 %v1036
        %1075 = vmatpush.msra.mxu0 %v1033
        %1076 = vmatpush.msra.mxu0 %v1030
        %1077 = vmatpush.msra.mxu0 %v1027
        %1078 = vmatpush.msra.mxu0 %v1024
        %1079 = vmatpush.msra.mxu0 %v1021
        %1080 = vmatpush.msra.mxu0 %v1018
        %1081 = vmatpush.msra.mxu0 %v1015
        %1082 = vmatpush.msra.mxu0 %v1012
        %1083 = vmatpush.msra.mxu0 %v1009
        %1084 = vmatpush.msra.mxu0 %v1006
        %1085 = vmatpush.msra.mxu0 %v1003
        %1086 = vmatmul.f32.gmra.mxu0 %v1000
        %v1087 = vpop.f32.mrf.mxu0
        %v1088 = vadd.f32 0.0, %v1087
        %1089 = vdwg.mxu0
        %1090 = vmatpush.msra.mxu0 %v1049
        %1091 = vmatpush.msra.mxu0 %v1046
        %1092 = vmatpush.msra.mxu0 %v1043
        %1093 = vmatpush.msra.mxu0 %v1040
        %1094 = vmatpush.msra.mxu0 %v1037
        %1095 = vmatpush.msra.mxu0 %v1034
        %1096 = vmatpush.msra.mxu0 %v1031
        %1097 = vmatpush.msra.mxu0 %v1028
        %1098 = vmatpush.msra.mxu0 %v1025
        %1099 = vmatpush.msra.mxu0 %v1022
        %1100 = vmatpush.msra.mxu0 %v1019
        %1101 = vmatpush.msra.mxu0 %v1016
        %1102 = vmatpush.msra.mxu0 %v1013
        %1103 = vmatpush.msra.mxu0 %v1010
        %1104 = vmatpush.msra.mxu0 %v1007
        %1105 = vmatpush.msra.mxu0 %v1004
        %1106 = vmatmul.f32.gmra.mxu0 %v1000
        %v1107 = vpop.f32.mrf.mxu0
        %v1108 = vadd.f32 0.0, %v1107
        %1109 = vdwg.mxu0
        %s1110 = scalar_lea.vmem [#allocation2], 24
        %v1111 = vld [vmem:[%s1110] sm:$0xff]
        %v1112 = vld [vmem:[%s1110 + $0x8] sm:$0xff]
        %v1113 = vld [vmem:[%s1110 + $0x10] sm:$0xff]
        %v1114 = vadd.f32 %v1111, %v1068
        %v1115 = vxor.u32 %v1114, 2147483648
        %v1116 = vmul.f32 %v1115, 1.442695
        %v1117 = vpow.pop %v1116
        %v1118 = vadd.f32 %v1117, 1.0
        %v1119 = vrcp.pop %v1118
        %v1120 = vmul.f32 %v1118, %v1119
        %v1121 = vsub.f32 1.0, %v1120
        %v1122 = vmul.f32 %v1119, %v1121
        %v1123 = vadd.f32 %v1119, %v1122
        %vm1124 = vweird.f32 %v1118
        %vm1125 = vweird.f32 %v1119
        %vm1126 = vmor %vm1124, %vm1125
        %v1127 = vsel %vm1126, %v1119, %v1123
        %v1128 = vand.u32 2147483647, %v1118
        %vm1129 = vcmp.eq.f32.partialorder %v1128, 8.507059e+37
        %v1130 = vand.u32 %v1118, 2147483648
        %v1131 = vor.u32 1.1754944e-38, %v1130
        %v1132 = vsel %vm1129, %v1131, %v1127
        %v1133 = vmul.f32 1.0, %v1132
        %v1134 = vadd.f32 %v1112, %v1088
        %v1135 = vxor.u32 %v1134, 2147483648
        %v1136 = vmul.f32 %v1135, 1.442695
        %v1137 = vpow.pop %v1136
        %v1138 = vadd.f32 %v1137, 1.0
        %v1139 = vrcp.pop %v1138
        %v1140 = vmul.f32 %v1138, %v1139
        %v1141 = vsub.f32 1.0, %v1140
        %v1142 = vmul.f32 %v1139, %v1141
        %v1143 = vadd.f32 %v1139, %v1142
        %vm1144 = vweird.f32 %v1138
        %vm1145 = vweird.f32 %v1139
        %vm1146 = vmor %vm1144, %vm1145
        %v1147 = vsel %vm1146, %v1139, %v1143
        %v1148 = vand.u32 2147483647, %v1138
        %vm1149 = vcmp.eq.f32.partialorder %v1148, 8.507059e+37
        %v1150 = vand.u32 %v1138, 2147483648
        %v1151 = vor.u32 1.1754944e-38, %v1150
        %v1152 = vsel %vm1149, %v1151, %v1147
        %v1153 = vmul.f32 1.0, %v1152
        %v1154 = vadd.f32 %v1108, %v839
        %v1155 = vmul.f32 %v1133, %v1154
        %v1156 = vadd.f32 %v1113, %v1155
        %v1157 = vtanh.pop %v1156
        %v1158 = vsub.f32 1.0, %v1153
        %v1159 = vmul.f32 %v1158, %v1157
        %v1160 = vmul.f32 %v1153, %v1000
        %v1161 = vadd.f32 %v1159, %v1160
        %s1162 = scalar_lea.vmem [#allocation3], 8
        %1163 = vst [vmem:[%s1162] sm:$0xff] %v1161
        %v1164 = vld [vmem:[#allocation7] sm:$0xff]
        %v1165 = vld [vmem:[#allocation7 + $0x8] sm:$0xff]
        %v1166 = vld [vmem:[#allocation7 + $0x10] sm:$0xff]
        %v1167 = vld [vmem:[#allocation7 + $0x18] sm:$0xff]
        %v1168 = vld [vmem:[#allocation7 + $0x20] sm:$0xff]
        %v1169 = vld [vmem:[#allocation7 + $0x28] sm:$0xff]
        %v1170 = vld [vmem:[#allocation7 + $0x30] sm:$0xff]
        %v1171 = vld [vmem:[#allocation7 + $0x38] sm:$0xff]
        %v1172 = vld [vmem:[#allocation7 + $0x40] sm:$0xff]
        %v1173 = vld [vmem:[#allocation7 + $0x48] sm:$0xff]
        %v1174 = vld [vmem:[#allocation7 + $0x50] sm:$0xff]
        %v1175 = vld [vmem:[#allocation7 + $0x58] sm:$0xff]
        %v1176 = vld [vmem:[#allocation7 + $0x60] sm:$0xff]
        %v1177 = vld [vmem:[#allocation7 + $0x68] sm:$0xff]
        %v1178 = vld [vmem:[#allocation7 + $0x70] sm:$0xff]
        %v1179 = vld [vmem:[#allocation7 + $0x78] sm:$0xff]
        %v1180 = vld [vmem:[#allocation7 + $0x80] sm:$0xff]
        %v1181 = vld [vmem:[#allocation7 + $0x88] sm:$0xff]
        %v1182 = vld [vmem:[#allocation7 + $0x90] sm:$0xff]
        %v1183 = vld [vmem:[#allocation7 + $0x98] sm:$0xff]
        %v1184 = vld [vmem:[#allocation7 + $0xa0] sm:$0xff]
        %v1185 = vld [vmem:[#allocation7 + $0xa8] sm:$0xff]
        %v1186 = vld [vmem:[#allocation7 + $0xb0] sm:$0xff]
        %v1187 = vld [vmem:[#allocation7 + $0xb8] sm:$0xff]
        %v1188 = vld [vmem:[#allocation7 + $0xc0] sm:$0xff]
        %v1189 = vld [vmem:[#allocation7 + $0xc8] sm:$0xff]
        %v1190 = vld [vmem:[#allocation7 + $0xd0] sm:$0xff]
        %v1191 = vld [vmem:[#allocation7 + $0xd8] sm:$0xff]
        %v1192 = vld [vmem:[#allocation7 + $0xe0] sm:$0xff]
        %v1193 = vld [vmem:[#allocation7 + $0xe8] sm:$0xff]
        %v1194 = vld [vmem:[#allocation7 + $0xf0] sm:$0xff]
        %v1195 = vld [vmem:[#allocation7 + $0xf8] sm:$0xff]
        %v1196 = vld [vmem:[#allocation7 + $0x100] sm:$0xff]
        %v1197 = vld [vmem:[#allocation7 + $0x108] sm:$0xff]
        %v1198 = vld [vmem:[#allocation7 + $0x110] sm:$0xff]
        %v1199 = vld [vmem:[#allocation7 + $0x118] sm:$0xff]
        %v1200 = vld [vmem:[#allocation7 + $0x120] sm:$0xff]
        %v1201 = vld [vmem:[#allocation7 + $0x128] sm:$0xff]
        %v1202 = vld [vmem:[#allocation7 + $0x130] sm:$0xff]
        %v1203 = vld [vmem:[#allocation7 + $0x138] sm:$0xff]
        %v1204 = vld [vmem:[#allocation7 + $0x140] sm:$0xff]
        %v1205 = vld [vmem:[#allocation7 + $0x148] sm:$0xff]
        %v1206 = vld [vmem:[#allocation7 + $0x150] sm:$0xff]
        %v1207 = vld [vmem:[#allocation7 + $0x158] sm:$0xff]
        %v1208 = vld [vmem:[#allocation7 + $0x160] sm:$0xff]
        %v1209 = vld [vmem:[#allocation7 + $0x168] sm:$0xff]
        %v1210 = vld [vmem:[#allocation7 + $0x170] sm:$0xff]
        %v1211 = vld [vmem:[#allocation7 + $0x178] sm:$0xff]
        %1212 = vmatpush.msra.mxu0 %v1209
        %1213 = vmatpush.msra.mxu0 %v1206
        %1214 = vmatpush.msra.mxu0 %v1203
        %1215 = vmatpush.msra.mxu0 %v1200
        %1216 = vmatpush.msra.mxu0 %v1197
        %1217 = vmatpush.msra.mxu0 %v1194
        %1218 = vmatpush.msra.mxu0 %v1191
        %1219 = vmatpush.msra.mxu0 %v1188
        %1220 = vmatpush.msra.mxu0 %v1185
        %1221 = vmatpush.msra.mxu0 %v1182
        %1222 = vmatpush.msra.mxu0 %v1179
        %1223 = vmatpush.msra.mxu0 %v1176
        %1224 = vmatpush.msra.mxu0 %v1173
        %1225 = vmatpush.msra.mxu0 %v1170
        %1226 = vmatpush.msra.mxu0 %v1167
        %1227 = vmatpush.msra.mxu0 %v1164
        %1228 = vmatmul.f32.gmra.mxu0 %v1161
        %v1229 = vpop.f32.mrf.mxu0
        %v1230 = vadd.f32 0.0, %v1229
        %1231 = vdwg.mxu0
        %1232 = vmatpush.msra.mxu0 %v1210
        %1233 = vmatpush.msra.mxu0 %v1207
        %1234 = vmatpush.msra.mxu0 %v1204
        %1235 = vmatpush.msra.mxu0 %v1201
        %1236 = vmatpush.msra.mxu0 %v1198
        %1237 = vmatpush.msra.mxu0 %v1195
        %1238 = vmatpush.msra.mxu0 %v1192
        %1239 = vmatpush.msra.mxu0 %v1189
        %1240 = vmatpush.msra.mxu0 %v1186
        %1241 = vmatpush.msra.mxu0 %v1183
        %1242 = vmatpush.msra.mxu0 %v1180
        %1243 = vmatpush.msra.mxu0 %v1177
        %1244 = vmatpush.msra.mxu0 %v1174
        %1245 = vmatpush.msra.mxu0 %v1171
        %1246 = vmatpush.msra.mxu0 %v1168
        %1247 = vmatpush.msra.mxu0 %v1165
        %1248 = vmatmul.f32.gmra.mxu0 %v1161
        %v1249 = vpop.f32.mrf.mxu0
        %v1250 = vadd.f32 0.0, %v1249
        %1251 = vdwg.mxu0
        %1252 = vmatpush.msra.mxu0 %v1211
        %1253 = vmatpush.msra.mxu0 %v1208
        %1254 = vmatpush.msra.mxu0 %v1205
        %1255 = vmatpush.msra.mxu0 %v1202
        %1256 = vmatpush.msra.mxu0 %v1199
        %1257 = vmatpush.msra.mxu0 %v1196
        %1258 = vmatpush.msra.mxu0 %v1193
        %1259 = vmatpush.msra.mxu0 %v1190
        %1260 = vmatpush.msra.mxu0 %v1187
        %1261 = vmatpush.msra.mxu0 %v1184
        %1262 = vmatpush.msra.mxu0 %v1181
        %1263 = vmatpush.msra.mxu0 %v1178
        %1264 = vmatpush.msra.mxu0 %v1175
        %1265 = vmatpush.msra.mxu0 %v1172
        %1266 = vmatpush.msra.mxu0 %v1169
        %1267 = vmatpush.msra.mxu0 %v1166
        %1268 = vmatmul.f32.gmra.mxu0 %v1161
        %v1269 = vpop.f32.mrf.mxu0
        %v1270 = vadd.f32 0.0, %v1269
        %1271 = vdwg.mxu0
        %s1272 = scalar_lea.vmem [#allocation2], 48
        %v1273 = vld [vmem:[%s1272] sm:$0xff]
        %v1274 = vld [vmem:[%s1272 + $0x8] sm:$0xff]
        %v1275 = vld [vmem:[%s1272 + $0x10] sm:$0xff]
        %v1276 = vadd.f32 %v1273, %v1230
        %v1277 = vxor.u32 %v1276, 2147483648
        %v1278 = vmul.f32 %v1277, 1.442695
        %v1279 = vpow.pop %v1278
        %v1280 = vadd.f32 %v1279, 1.0
        %v1281 = vrcp.pop %v1280
        %v1282 = vmul.f32 %v1280, %v1281
        %v1283 = vsub.f32 1.0, %v1282
        %v1284 = vmul.f32 %v1281, %v1283
        %v1285 = vadd.f32 %v1281, %v1284
        %vm1286 = vweird.f32 %v1280
        %vm1287 = vweird.f32 %v1281
        %vm1288 = vmor %vm1286, %vm1287
        %v1289 = vsel %vm1288, %v1281, %v1285
        %v1290 = vand.u32 2147483647, %v1280
        %vm1291 = vcmp.eq.f32.partialorder %v1290, 8.507059e+37
        %v1292 = vand.u32 %v1280, 2147483648
        %v1293 = vor.u32 1.1754944e-38, %v1292
        %v1294 = vsel %vm1291, %v1293, %v1289
        %v1295 = vmul.f32 1.0, %v1294
        %v1296 = vadd.f32 %v1274, %v1250
        %v1297 = vxor.u32 %v1296, 2147483648
        %v1298 = vmul.f32 %v1297, 1.442695
        %v1299 = vpow.pop %v1298
        %v1300 = vadd.f32 %v1299, 1.0
        %v1301 = vrcp.pop %v1300
        %v1302 = vmul.f32 %v1300, %v1301
        %v1303 = vsub.f32 1.0, %v1302
        %v1304 = vmul.f32 %v1301, %v1303
        %v1305 = vadd.f32 %v1301, %v1304
        %vm1306 = vweird.f32 %v1300
        %vm1307 = vweird.f32 %v1301
        %vm1308 = vmor %vm1306, %vm1307
        %v1309 = vsel %vm1308, %v1301, %v1305
        %v1310 = vand.u32 2147483647, %v1300
        %vm1311 = vcmp.eq.f32.partialorder %v1310, 8.507059e+37
        %v1312 = vand.u32 %v1300, 2147483648
        %v1313 = vor.u32 1.1754944e-38, %v1312
        %v1314 = vsel %vm1311, %v1313, %v1309
        %v1315 = vmul.f32 1.0, %v1314
        %v1316 = vadd.f32 %v1270, %v839
        %v1317 = vmul.f32 %v1295, %v1316
        %v1318 = vadd.f32 %v1275, %v1317
        %v1319 = vtanh.pop %v1318
        %v1320 = vsub.f32 1.0, %v1315
        %v1321 = vmul.f32 %v1320, %v1319
        %v1322 = vmul.f32 %v1315, %v1161
        %v1323 = vadd.f32 %v1321, %v1322
        %s1324 = scalar_lea.vmem [#allocation3], 16
        %1325 = vst [vmem:[%s1324] sm:$0xff] %v1323
        %v1326 = vld [vmem:[#allocation7] sm:$0xff]
        %v1327 = vld [vmem:[#allocation7 + $0x8] sm:$0xff]
        %v1328 = vld [vmem:[#allocation7 + $0x10] sm:$0xff]
        %v1329 = vld [vmem:[#allocation7 + $0x18] sm:$0xff]
        %v1330 = vld [vmem:[#allocation7 + $0x20] sm:$0xff]
        %v1331 = vld [vmem:[#allocation7 + $0x28] sm:$0xff]
        %v1332 = vld [vmem:[#allocation7 + $0x30] sm:$0xff]
        %v1333 = vld [vmem:[#allocation7 + $0x38] sm:$0xff]
        %v1334 = vld [vmem:[#allocation7 + $0x40] sm:$0xff]
        %v1335 = vld [vmem:[#allocation7 + $0x48] sm:$0xff]
        %v1336 = vld [vmem:[#allocation7 + $0x50] sm:$0xff]
        %v1337 = vld [vmem:[#allocation7 + $0x58] sm:$0xff]
        %v1338 = vld [vmem:[#allocation7 + $0x60] sm:$0xff]
        %v1339 = vld [vmem:[#allocation7 + $0x68] sm:$0xff]
        %v1340 = vld [vmem:[#allocation7 + $0x70] sm:$0xff]
        %v1341 = vld [vmem:[#allocation7 + $0x78] sm:$0xff]
        %v1342 = vld [vmem:[#allocation7 + $0x80] sm:$0xff]
        %v1343 = vld [vmem:[#allocation7 + $0x88] sm:$0xff]
        %v1344 = vld [vmem:[#allocation7 + $0x90] sm:$0xff]
        %v1345 = vld [vmem:[#allocation7 + $0x98] sm:$0xff]
        %v1346 = vld [vmem:[#allocation7 + $0xa0] sm:$0xff]
        %v1347 = vld [vmem:[#allocation7 + $0xa8] sm:$0xff]
        %v1348 = vld [vmem:[#allocation7 + $0xb0] sm:$0xff]
        %v1349 = vld [vmem:[#allocation7 + $0xb8] sm:$0xff]
        %v1350 = vld [vmem:[#allocation7 + $0xc0] sm:$0xff]
        %v1351 = vld [vmem:[#allocation7 + $0xc8] sm:$0xff]
        %v1352 = vld [vmem:[#allocation7 + $0xd0] sm:$0xff]
        %v1353 = vld [vmem:[#allocation7 + $0xd8] sm:$0xff]
        %v1354 = vld [vmem:[#allocation7 + $0xe0] sm:$0xff]
        %v1355 = vld [vmem:[#allocation7 + $0xe8] sm:$0xff]
        %v1356 = vld [vmem:[#allocation7 + $0xf0] sm:$0xff]
        %v1357 = vld [vmem:[#allocation7 + $0xf8] sm:$0xff]
        %v1358 = vld [vmem:[#allocation7 + $0x100] sm:$0xff]
        %v1359 = vld [vmem:[#allocation7 + $0x108] sm:$0xff]
        %v1360 = vld [vmem:[#allocation7 + $0x110] sm:$0xff]
        %v1361 = vld [vmem:[#allocation7 + $0x118] sm:$0xff]
        %v1362 = vld [vmem:[#allocation7 + $0x120] sm:$0xff]
        %v1363 = vld [vmem:[#allocation7 + $0x128] sm:$0xff]
        %v1364 = vld [vmem:[#allocation7 + $0x130] sm:$0xff]
        %v1365 = vld [vmem:[#allocation7 + $0x138] sm:$0xff]
        %v1366 = vld [vmem:[#allocation7 + $0x140] sm:$0xff]
        %v1367 = vld [vmem:[#allocation7 + $0x148] sm:$0xff]
        %v1368 = vld [vmem:[#allocation7 + $0x150] sm:$0xff]
        %v1369 = vld [vmem:[#allocation7 + $0x158] sm:$0xff]
        %v1370 = vld [vmem:[#allocation7 + $0x160] sm:$0xff]
        %v1371 = vld [vmem:[#allocation7 + $0x168] sm:$0xff]
        %v1372 = vld [vmem:[#allocation7 + $0x170] sm:$0xff]
        %v1373 = vld [vmem:[#allocation7 + $0x178] sm:$0xff]
        %1374 = vmatpush.msra.mxu0 %v1371
        %1375 = vmatpush.msra.mxu0 %v1368
        %1376 = vmatpush.msra.mxu0 %v1365
        %1377 = vmatpush.msra.mxu0 %v1362
        %1378 = vmatpush.msra.mxu0 %v1359
        %1379 = vmatpush.msra.mxu0 %v1356
        %1380 = vmatpush.msra.mxu0 %v1353
        %1381 = vmatpush.msra.mxu0 %v1350
        %1382 = vmatpush.msra.mxu0 %v1347
        %1383 = vmatpush.msra.mxu0 %v1344
        %1384 = vmatpush.msra.mxu0 %v1341
        %1385 = vmatpush.msra.mxu0 %v1338
        %1386 = vmatpush.msra.mxu0 %v1335
        %1387 = vmatpush.msra.mxu0 %v1332
        %1388 = vmatpush.msra.mxu0 %v1329
        %1389 = vmatpush.msra.mxu0 %v1326
        %1390 = vmatmul.f32.gmra.mxu0 %v1323
        %v1391 = vpop.f32.mrf.mxu0
        %v1392 = vadd.f32 0.0, %v1391
        %1393 = vdwg.mxu0
        %1394 = vmatpush.msra.mxu0 %v1372
        %1395 = vmatpush.msra.mxu0 %v1369
        %1396 = vmatpush.msra.mxu0 %v1366
        %1397 = vmatpush.msra.mxu0 %v1363
        %1398 = vmatpush.msra.mxu0 %v1360
        %1399 = vmatpush.msra.mxu0 %v1357
        %1400 = vmatpush.msra.mxu0 %v1354
        %1401 = vmatpush.msra.mxu0 %v1351
        %1402 = vmatpush.msra.mxu0 %v1348
        %1403 = vmatpush.msra.mxu0 %v1345
        %1404 = vmatpush.msra.mxu0 %v1342
        %1405 = vmatpush.msra.mxu0 %v1339
        %1406 = vmatpush.msra.mxu0 %v1336
        %1407 = vmatpush.msra.mxu0 %v1333
        %1408 = vmatpush.msra.mxu0 %v1330
        %1409 = vmatpush.msra.mxu0 %v1327
        %1410 = vmatmul.f32.gmra.mxu0 %v1323
        %v1411 = vpop.f32.mrf.mxu0
        %v1412 = vadd.f32 0.0, %v1411
        %1413 = vdwg.mxu0
        %1414 = vmatpush.msra.mxu0 %v1373
        %1415 = vmatpush.msra.mxu0 %v1370
        %1416 = vmatpush.msra.mxu0 %v1367
        %1417 = vmatpush.msra.mxu0 %v1364
        %1418 = vmatpush.msra.mxu0 %v1361
        %1419 = vmatpush.msra.mxu0 %v1358
        %1420 = vmatpush.msra.mxu0 %v1355
        %1421 = vmatpush.msra.mxu0 %v1352
        %1422 = vmatpush.msra.mxu0 %v1349
        %1423 = vmatpush.msra.mxu0 %v1346
        %1424 = vmatpush.msra.mxu0 %v1343
        %1425 = vmatpush.msra.mxu0 %v1340
        %1426 = vmatpush.msra.mxu0 %v1337
        %1427 = vmatpush.msra.mxu0 %v1334
        %1428 = vmatpush.msra.mxu0 %v1331
        %1429 = vmatpush.msra.mxu0 %v1328
        %1430 = vmatmul.f32.gmra.mxu0 %v1323
        %v1431 = vpop.f32.mrf.mxu0
        %v1432 = vadd.f32 0.0, %v1431
        %1433 = vdwg.mxu0
        %s1434 = scalar_lea.vmem [#allocation2], 72
        %v1435 = vld [vmem:[%s1434] sm:$0xff]
        %v1436 = vld [vmem:[%s1434 + $0x8] sm:$0xff]
        %v1437 = vld [vmem:[%s1434 + $0x10] sm:$0xff]
        %v1438 = vadd.f32 %v1435, %v1392
        %v1439 = vxor.u32 %v1438, 2147483648
        %v1440 = vmul.f32 %v1439, 1.442695
        %v1441 = vpow.pop %v1440
        %v1442 = vadd.f32 %v1441, 1.0
        %v1443 = vrcp.pop %v1442
        %v1444 = vmul.f32 %v1442, %v1443
        %v1445 = vsub.f32 1.0, %v1444
        %v1446 = vmul.f32 %v1443, %v1445
        %v1447 = vadd.f32 %v1443, %v1446
        %vm1448 = vweird.f32 %v1442
        %vm1449 = vweird.f32 %v1443
        %vm1450 = vmor %vm1448, %vm1449
        %v1451 = vsel %vm1450, %v1443, %v1447
        %v1452 = vand.u32 2147483647, %v1442
        %vm1453 = vcmp.eq.f32.partialorder %v1452, 8.507059e+37
        %v1454 = vand.u32 %v1442, 2147483648
        %v1455 = vor.u32 1.1754944e-38, %v1454
        %v1456 = vsel %vm1453, %v1455, %v1451
        %v1457 = vmul.f32 1.0, %v1456
        %v1458 = vadd.f32 %v1436, %v1412
        %v1459 = vxor.u32 %v1458, 2147483648
        %v1460 = vmul.f32 %v1459, 1.442695
        %v1461 = vpow.pop %v1460
        %v1462 = vadd.f32 %v1461, 1.0
        %v1463 = vrcp.pop %v1462
        %v1464 = vmul.f32 %v1462, %v1463
        %v1465 = vsub.f32 1.0, %v1464
        %v1466 = vmul.f32 %v1463, %v1465
        %v1467 = vadd.f32 %v1463, %v1466
        %vm1468 = vweird.f32 %v1462
        %vm1469 = vweird.f32 %v1463
        %vm1470 = vmor %vm1468, %vm1469
        %v1471 = vsel %vm1470, %v1463, %v1467
        %v1472 = vand.u32 2147483647, %v1462
        %vm1473 = vcmp.eq.f32.partialorder %v1472, 8.507059e+37
        %v1474 = vand.u32 %v1462, 2147483648
        %v1475 = vor.u32 1.1754944e-38, %v1474
        %v1476 = vsel %vm1473, %v1475, %v1471
        %v1477 = vmul.f32 1.0, %v1476
        %v1478 = vadd.f32 %v1432, %v839
        %v1479 = vmul.f32 %v1457, %v1478
        %v1480 = vadd.f32 %v1437, %v1479
        %v1481 = vtanh.pop %v1480
        %v1482 = vsub.f32 1.0, %v1477
        %v1483 = vmul.f32 %v1482, %v1481
        %v1484 = vmul.f32 %v1477, %v1323
        %v1485 = vadd.f32 %v1483, %v1484
        %s1486 = scalar_lea.vmem [#allocation3], 24
        %1487 = vst [vmem:[%s1486] sm:$0xff] %v1485
        %v1488 = vld [vmem:[#allocation7] sm:$0xff]
        %v1489 = vld [vmem:[#allocation7 + $0x8] sm:$0xff]
        %v1490 = vld [vmem:[#allocation7 + $0x10] sm:$0xff]
        %v1491 = vld [vmem:[#allocation7 + $0x18] sm:$0xff]
        %v1492 = vld [vmem:[#allocation7 + $0x20] sm:$0xff]
        %v1493 = vld [vmem:[#allocation7 + $0x28] sm:$0xff]
        %v1494 = vld [vmem:[#allocation7 + $0x30] sm:$0xff]
        %v1495 = vld [vmem:[#allocation7 + $0x38] sm:$0xff]
        %v1496 = vld [vmem:[#allocation7 + $0x40] sm:$0xff]
        %v1497 = vld [vmem:[#allocation7 + $0x48] sm:$0xff]
        %v1498 = vld [vmem:[#allocation7 + $0x50] sm:$0xff]
        %v1499 = vld [vmem:[#allocation7 + $0x58] sm:$0xff]
        %v1500 = vld [vmem:[#allocation7 + $0x60] sm:$0xff]
        %v1501 = vld [vmem:[#allocation7 + $0x68] sm:$0xff]
        %v1502 = vld [vmem:[#allocation7 + $0x70] sm:$0xff]
        %v1503 = vld [vmem:[#allocation7 + $0x78] sm:$0xff]
        %v1504 = vld [vmem:[#allocation7 + $0x80] sm:$0xff]
        %v1505 = vld [vmem:[#allocation7 + $0x88] sm:$0xff]
        %v1506 = vld [vmem:[#allocation7 + $0x90] sm:$0xff]
        %v1507 = vld [vmem:[#allocation7 + $0x98] sm:$0xff]
        %v1508 = vld [vmem:[#allocation7 + $0xa0] sm:$0xff]
        %v1509 = vld [vmem:[#allocation7 + $0xa8] sm:$0xff]
        %v1510 = vld [vmem:[#allocation7 + $0xb0] sm:$0xff]
        %v1511 = vld [vmem:[#allocation7 + $0xb8] sm:$0xff]
        %v1512 = vld [vmem:[#allocation7 + $0xc0] sm:$0xff]
        %v1513 = vld [vmem:[#allocation7 + $0xc8] sm:$0xff]
        %v1514 = vld [vmem:[#allocation7 + $0xd0] sm:$0xff]
        %v1515 = vld [vmem:[#allocation7 + $0xd8] sm:$0xff]
        %v1516 = vld [vmem:[#allocation7 + $0xe0] sm:$0xff]
        %v1517 = vld [vmem:[#allocation7 + $0xe8] sm:$0xff]
        %v1518 = vld [vmem:[#allocation7 + $0xf0] sm:$0xff]
        %v1519 = vld [vmem:[#allocation7 + $0xf8] sm:$0xff]
        %v1520 = vld [vmem:[#allocation7 + $0x100] sm:$0xff]
        %v1521 = vld [vmem:[#allocation7 + $0x108] sm:$0xff]
        %v1522 = vld [vmem:[#allocation7 + $0x110] sm:$0xff]
        %v1523 = vld [vmem:[#allocation7 + $0x118] sm:$0xff]
        %v1524 = vld [vmem:[#allocation7 + $0x120] sm:$0xff]
        %v1525 = vld [vmem:[#allocation7 + $0x128] sm:$0xff]
        %v1526 = vld [vmem:[#allocation7 + $0x130] sm:$0xff]
        %v1527 = vld [vmem:[#allocation7 + $0x138] sm:$0xff]
        %v1528 = vld [vmem:[#allocation7 + $0x140] sm:$0xff]
        %v1529 = vld [vmem:[#allocation7 + $0x148] sm:$0xff]
        %v1530 = vld [vmem:[#allocation7 + $0x150] sm:$0xff]
        %v1531 = vld [vmem:[#allocation7 + $0x158] sm:$0xff]
        %v1532 = vld [vmem:[#allocation7 + $0x160] sm:$0xff]
        %v1533 = vld [vmem:[#allocation7 + $0x168] sm:$0xff]
        %v1534 = vld [vmem:[#allocation7 + $0x170] sm:$0xff]
        %v1535 = vld [vmem:[#allocation7 + $0x178] sm:$0xff]
        %1536 = vmatpush.msra.mxu0 %v1533
        %1537 = vmatpush.msra.mxu0 %v1530
        %1538 = vmatpush.msra.mxu0 %v1527
        %1539 = vmatpush.msra.mxu0 %v1524
        %1540 = vmatpush.msra.mxu0 %v1521
        %1541 = vmatpush.msra.mxu0 %v1518
        %1542 = vmatpush.msra.mxu0 %v1515
        %1543 = vmatpush.msra.mxu0 %v1512
        %1544 = vmatpush.msra.mxu0 %v1509
        %1545 = vmatpush.msra.mxu0 %v1506
        %1546 = vmatpush.msra.mxu0 %v1503
        %1547 = vmatpush.msra.mxu0 %v1500
        %1548 = vmatpush.msra.mxu0 %v1497
        %1549 = vmatpush.msra.mxu0 %v1494
        %1550 = vmatpush.msra.mxu0 %v1491
        %1551 = vmatpush.msra.mxu0 %v1488
        %1552 = vmatmul.f32.gmra.mxu0 %v1485
        %v1553 = vpop.f32.mrf.mxu0
        %v1554 = vadd.f32 0.0, %v1553
        %1555 = vdwg.mxu0
        %1556 = vmatpush.msra.mxu0 %v1534
        %1557 = vmatpush.msra.mxu0 %v1531
        %1558 = vmatpush.msra.mxu0 %v1528
        %1559 = vmatpush.msra.mxu0 %v1525
        %1560 = vmatpush.msra.mxu0 %v1522
        %1561 = vmatpush.msra.mxu0 %v1519
        %1562 = vmatpush.msra.mxu0 %v1516
        %1563 = vmatpush.msra.mxu0 %v1513
        %1564 = vmatpush.msra.mxu0 %v1510
        %1565 = vmatpush.msra.mxu0 %v1507
        %1566 = vmatpush.msra.mxu0 %v1504
        %1567 = vmatpush.msra.mxu0 %v1501
        %1568 = vmatpush.msra.mxu0 %v1498
        %1569 = vmatpush.msra.mxu0 %v1495
        %1570 = vmatpush.msra.mxu0 %v1492
        %1571 = vmatpush.msra.mxu0 %v1489
        %1572 = vmatmul.f32.gmra.mxu0 %v1485
        %v1573 = vpop.f32.mrf.mxu0
        %v1574 = vadd.f32 0.0, %v1573
        %1575 = vdwg.mxu0
        %1576 = vmatpush.msra.mxu0 %v1535
        %1577 = vmatpush.msra.mxu0 %v1532
        %1578 = vmatpush.msra.mxu0 %v1529
        %1579 = vmatpush.msra.mxu0 %v1526
        %1580 = vmatpush.msra.mxu0 %v1523
        %1581 = vmatpush.msra.mxu0 %v1520
        %1582 = vmatpush.msra.mxu0 %v1517
        %1583 = vmatpush.msra.mxu0 %v1514
        %1584 = vmatpush.msra.mxu0 %v1511
        %1585 = vmatpush.msra.mxu0 %v1508
        %1586 = vmatpush.msra.mxu0 %v1505
        %1587 = vmatpush.msra.mxu0 %v1502
        %1588 = vmatpush.msra.mxu0 %v1499
        %1589 = vmatpush.msra.mxu0 %v1496
        %1590 = vmatpush.msra.mxu0 %v1493
        %1591 = vmatpush.msra.mxu0 %v1490
        %1592 = vmatmul.f32.gmra.mxu0 %v1485
        %v1593 = vpop.f32.mrf.mxu0
        %v1594 = vadd.f32 0.0, %v1593
        %1595 = vdwg.mxu0
        %s1596 = scalar_lea.vmem [#allocation2], 96
        %v1597 = vld [vmem:[%s1596] sm:$0xff]
        %v1598 = vld [vmem:[%s1596 + $0x8] sm:$0xff]
        %v1599 = vld [vmem:[%s1596 + $0x10] sm:$0xff]
        %v1600 = vadd.f32 %v1597, %v1554
        %v1601 = vxor.u32 %v1600, 2147483648
        %v1602 = vmul.f32 %v1601, 1.442695
        %v1603 = vpow.pop %v1602
        %v1604 = vadd.f32 %v1603, 1.0
        %v1605 = vrcp.pop %v1604
        %v1606 = vmul.f32 %v1604, %v1605
        %v1607 = vsub.f32 1.0, %v1606
        %v1608 = vmul.f32 %v1605, %v1607
        %v1609 = vadd.f32 %v1605, %v1608
        %vm1610 = vweird.f32 %v1604
        %vm1611 = vweird.f32 %v1605
        %vm1612 = vmor %vm1610, %vm1611
        %v1613 = vsel %vm1612, %v1605, %v1609
        %v1614 = vand.u32 2147483647, %v1604
        %vm1615 = vcmp.eq.f32.partialorder %v1614, 8.507059e+37
        %v1616 = vand.u32 %v1604, 2147483648
        %v1617 = vor.u32 1.1754944e-38, %v1616
        %v1618 = vsel %vm1615, %v1617, %v1613
        %v1619 = vmul.f32 1.0, %v1618
        %v1620 = vadd.f32 %v1598, %v1574
        %v1621 = vxor.u32 %v1620, 2147483648
        %v1622 = vmul.f32 %v1621, 1.442695
        %v1623 = vpow.pop %v1622
        %v1624 = vadd.f32 %v1623, 1.0
        %v1625 = vrcp.pop %v1624
        %v1626 = vmul.f32 %v1624, %v1625
        %v1627 = vsub.f32 1.0, %v1626
        %v1628 = vmul.f32 %v1625, %v1627
        %v1629 = vadd.f32 %v1625, %v1628
        %vm1630 = vweird.f32 %v1624
        %vm1631 = vweird.f32 %v1625
        %vm1632 = vmor %vm1630, %vm1631
        %v1633 = vsel %vm1632, %v1625, %v1629
        %v1634 = vand.u32 2147483647, %v1624
        %vm1635 = vcmp.eq.f32.partialorder %v1634, 8.507059e+37
        %v1636 = vand.u32 %v1624, 2147483648
        %v1637 = vor.u32 1.1754944e-38, %v1636
        %v1638 = vsel %vm1635, %v1637, %v1633
        %v1639 = vmul.f32 1.0, %v1638
        %v1640 = vadd.f32 %v1594, %v839
        %v1641 = vmul.f32 %v1619, %v1640
        %v1642 = vadd.f32 %v1599, %v1641
        %v1643 = vtanh.pop %v1642
        %v1644 = vsub.f32 1.0, %v1639
        %v1645 = vmul.f32 %v1644, %v1643
        %v1646 = vmul.f32 %v1639, %v1485
        %v1647 = vadd.f32 %v1645, %v1646
        %s1648 = scalar_lea.vmem [#allocation3], 32
        %1649 = vst [vmem:[%s1648] sm:$0xff] %v1647
        %v1650 = vld [vmem:[#allocation7] sm:$0xff]
        %v1651 = vld [vmem:[#allocation7 + $0x8] sm:$0xff]
        %v1652 = vld [vmem:[#allocation7 + $0x10] sm:$0xff]
        %v1653 = vld [vmem:[#allocation7 + $0x18] sm:$0xff]
        %v1654 = vld [vmem:[#allocation7 + $0x20] sm:$0xff]
        %v1655 = vld [vmem:[#allocation7 + $0x28] sm:$0xff]
        %v1656 = vld [vmem:[#allocation7 + $0x30] sm:$0xff]
        %v1657 = vld [vmem:[#allocation7 + $0x38] sm:$0xff]
        %v1658 = vld [vmem:[#allocation7 + $0x40] sm:$0xff]
        %v1659 = vld [vmem:[#allocation7 + $0x48] sm:$0xff]
        %v1660 = vld [vmem:[#allocation7 + $0x50] sm:$0xff]
        %v1661 = vld [vmem:[#allocation7 + $0x58] sm:$0xff]
        %v1662 = vld [vmem:[#allocation7 + $0x60] sm:$0xff]
        %v1663 = vld [vmem:[#allocation7 + $0x68] sm:$0xff]
        %v1664 = vld [vmem:[#allocation7 + $0x70] sm:$0xff]
        %v1665 = vld [vmem:[#allocation7 + $0x78] sm:$0xff]
        %v1666 = vld [vmem:[#allocation7 + $0x80] sm:$0xff]
        %v1667 = vld [vmem:[#allocation7 + $0x88] sm:$0xff]
        %v1668 = vld [vmem:[#allocation7 + $0x90] sm:$0xff]
        %v1669 = vld [vmem:[#allocation7 + $0x98] sm:$0xff]
        %v1670 = vld [vmem:[#allocation7 + $0xa0] sm:$0xff]
        %v1671 = vld [vmem:[#allocation7 + $0xa8] sm:$0xff]
        %v1672 = vld [vmem:[#allocation7 + $0xb0] sm:$0xff]
        %v1673 = vld [vmem:[#allocation7 + $0xb8] sm:$0xff]
        %v1674 = vld [vmem:[#allocation7 + $0xc0] sm:$0xff]
        %v1675 = vld [vmem:[#allocation7 + $0xc8] sm:$0xff]
        %v1676 = vld [vmem:[#allocation7 + $0xd0] sm:$0xff]
        %v1677 = vld [vmem:[#allocation7 + $0xd8] sm:$0xff]
        %v1678 = vld [vmem:[#allocation7 + $0xe0] sm:$0xff]
        %v1679 = vld [vmem:[#allocation7 + $0xe8] sm:$0xff]
        %v1680 = vld [vmem:[#allocation7 + $0xf0] sm:$0xff]
        %v1681 = vld [vmem:[#allocation7 + $0xf8] sm:$0xff]
        %v1682 = vld [vmem:[#allocation7 + $0x100] sm:$0xff]
        %v1683 = vld [vmem:[#allocation7 + $0x108] sm:$0xff]
        %v1684 = vld [vmem:[#allocation7 + $0x110] sm:$0xff]
        %v1685 = vld [vmem:[#allocation7 + $0x118] sm:$0xff]
        %v1686 = vld [vmem:[#allocation7 + $0x120] sm:$0xff]
        %v1687 = vld [vmem:[#allocation7 + $0x128] sm:$0xff]
        %v1688 = vld [vmem:[#allocation7 + $0x130] sm:$0xff]
        %v1689 = vld [vmem:[#allocation7 + $0x138] sm:$0xff]
        %v1690 = vld [vmem:[#allocation7 + $0x140] sm:$0xff]
        %v1691 = vld [vmem:[#allocation7 + $0x148] sm:$0xff]
        %v1692 = vld [vmem:[#allocation7 + $0x150] sm:$0xff]
        %v1693 = vld [vmem:[#allocation7 + $0x158] sm:$0xff]
        %v1694 = vld [vmem:[#allocation7 + $0x160] sm:$0xff]
        %v1695 = vld [vmem:[#allocation7 + $0x168] sm:$0xff]
        %v1696 = vld [vmem:[#allocation7 + $0x170] sm:$0xff]
        %v1697 = vld [vmem:[#allocation7 + $0x178] sm:$0xff]
        %1698 = vmatpush.msra.mxu0 %v1695
        %1699 = vmatpush.msra.mxu0 %v1692
        %1700 = vmatpush.msra.mxu0 %v1689
        %1701 = vmatpush.msra.mxu0 %v1686
        %1702 = vmatpush.msra.mxu0 %v1683
        %1703 = vmatpush.msra.mxu0 %v1680
        %1704 = vmatpush.msra.mxu0 %v1677
        %1705 = vmatpush.msra.mxu0 %v1674
        %1706 = vmatpush.msra.mxu0 %v1671
        %1707 = vmatpush.msra.mxu0 %v1668
        %1708 = vmatpush.msra.mxu0 %v1665
        %1709 = vmatpush.msra.mxu0 %v1662
        %1710 = vmatpush.msra.mxu0 %v1659
        %1711 = vmatpush.msra.mxu0 %v1656
        %1712 = vmatpush.msra.mxu0 %v1653
        %1713 = vmatpush.msra.mxu0 %v1650
        %1714 = vmatmul.f32.gmra.mxu0 %v1647
        %v1715 = vpop.f32.mrf.mxu0
        %v1716 = vadd.f32 0.0, %v1715
        %1717 = vdwg.mxu0
        %1718 = vmatpush.msra.mxu0 %v1696
        %1719 = vmatpush.msra.mxu0 %v1693
        %1720 = vmatpush.msra.mxu0 %v1690
        %1721 = vmatpush.msra.mxu0 %v1687
        %1722 = vmatpush.msra.mxu0 %v1684
        %1723 = vmatpush.msra.mxu0 %v1681
        %1724 = vmatpush.msra.mxu0 %v1678
        %1725 = vmatpush.msra.mxu0 %v1675
        %1726 = vmatpush.msra.mxu0 %v1672
        %1727 = vmatpush.msra.mxu0 %v1669
        %1728 = vmatpush.msra.mxu0 %v1666
        %1729 = vmatpush.msra.mxu0 %v1663
        %1730 = vmatpush.msra.mxu0 %v1660
        %1731 = vmatpush.msra.mxu0 %v1657
        %1732 = vmatpush.msra.mxu0 %v1654
        %1733 = vmatpush.msra.mxu0 %v1651
        %1734 = vmatmul.f32.gmra.mxu0 %v1647
        %v1735 = vpop.f32.mrf.mxu0
        %v1736 = vadd.f32 0.0, %v1735
        %1737 = vdwg.mxu0
        %1738 = vmatpush.msra.mxu0 %v1697
        %1739 = vmatpush.msra.mxu0 %v1694
        %1740 = vmatpush.msra.mxu0 %v1691
        %1741 = vmatpush.msra.mxu0 %v1688
        %1742 = vmatpush.msra.mxu0 %v1685
        %1743 = vmatpush.msra.mxu0 %v1682
        %1744 = vmatpush.msra.mxu0 %v1679
        %1745 = vmatpush.msra.mxu0 %v1676
        %1746 = vmatpush.msra.mxu0 %v1673
        %1747 = vmatpush.msra.mxu0 %v1670
        %1748 = vmatpush.msra.mxu0 %v1667
        %1749 = vmatpush.msra.mxu0 %v1664
        %1750 = vmatpush.msra.mxu0 %v1661
        %1751 = vmatpush.msra.mxu0 %v1658
        %1752 = vmatpush.msra.mxu0 %v1655
        %1753 = vmatpush.msra.mxu0 %v1652
        %1754 = vmatmul.f32.gmra.mxu0 %v1647
        %v1755 = vpop.f32.mrf.mxu0
        %v1756 = vadd.f32 0.0, %v1755
        %1757 = vdwg.mxu0
        %s1758 = scalar_lea.vmem [#allocation2], 120
        %v1759 = vld [vmem:[%s1758] sm:$0xff]
        %v1760 = vld [vmem:[%s1758 + $0x8] sm:$0xff]
        %v1761 = vld [vmem:[%s1758 + $0x10] sm:$0xff]
        %v1762 = vadd.f32 %v1759, %v1716
        %v1763 = vxor.u32 %v1762, 2147483648
        %v1764 = vmul.f32 %v1763, 1.442695
        %v1765 = vpow.pop %v1764
        %v1766 = vadd.f32 %v1765, 1.0
        %v1767 = vrcp.pop %v1766
        %v1768 = vmul.f32 %v1766, %v1767
        %v1769 = vsub.f32 1.0, %v1768
        %v1770 = vmul.f32 %v1767, %v1769
        %v1771 = vadd.f32 %v1767, %v1770
        %vm1772 = vweird.f32 %v1766
        %vm1773 = vweird.f32 %v1767
        %vm1774 = vmor %vm1772, %vm1773
        %v1775 = vsel %vm1774, %v1767, %v1771
        %v1776 = vand.u32 2147483647, %v1766
        %vm1777 = vcmp.eq.f32.partialorder %v1776, 8.507059e+37
        %v1778 = vand.u32 %v1766, 2147483648
        %v1779 = vor.u32 1.1754944e-38, %v1778
        %v1780 = vsel %vm1777, %v1779, %v1775
        %v1781 = vmul.f32 1.0, %v1780
        %v1782 = vadd.f32 %v1760, %v1736
        %v1783 = vxor.u32 %v1782, 2147483648
        %v1784 = vmul.f32 %v1783, 1.442695
        %v1785 = vpow.pop %v1784
        %v1786 = vadd.f32 %v1785, 1.0
        %v1787 = vrcp.pop %v1786
        %v1788 = vmul.f32 %v1786, %v1787
        %v1789 = vsub.f32 1.0, %v1788
        %v1790 = vmul.f32 %v1787, %v1789
        %v1791 = vadd.f32 %v1787, %v1790
        %vm1792 = vweird.f32 %v1786
        %vm1793 = vweird.f32 %v1787
        %vm1794 = vmor %vm1792, %vm1793
        %v1795 = vsel %vm1794, %v1787, %v1791
        %v1796 = vand.u32 2147483647, %v1786
        %vm1797 = vcmp.eq.f32.partialorder %v1796, 8.507059e+37
        %v1798 = vand.u32 %v1786, 2147483648
        %v1799 = vor.u32 1.1754944e-38, %v1798
        %v1800 = vsel %vm1797, %v1799, %v1795
        %v1801 = vmul.f32 1.0, %v1800
        %v1802 = vadd.f32 %v1756, %v839
        %v1803 = vmul.f32 %v1781, %v1802
        %v1804 = vadd.f32 %v1761, %v1803
        %v1805 = vtanh.pop %v1804
        %v1806 = vsub.f32 1.0, %v1801
        %v1807 = vmul.f32 %v1806, %v1805
        %v1808 = vmul.f32 %v1801, %v1647
        %v1809 = vadd.f32 %v1807, %v1808
        %s1810 = scalar_lea.vmem [#allocation3], 40
        %1811 = vst [vmem:[%s1810] sm:$0xff] %v1809
        %v1812 = vld [vmem:[#allocation7] sm:$0xff]
        %v1813 = vld [vmem:[#allocation7 + $0x8] sm:$0xff]
        %v1814 = vld [vmem:[#allocation7 + $0x10] sm:$0xff]
        %v1815 = vld [vmem:[#allocation7 + $0x18] sm:$0xff]
        %v1816 = vld [vmem:[#allocation7 + $0x20] sm:$0xff]
        %v1817 = vld [vmem:[#allocation7 + $0x28] sm:$0xff]
        %v1818 = vld [vmem:[#allocation7 + $0x30] sm:$0xff]
        %v1819 = vld [vmem:[#allocation7 + $0x38] sm:$0xff]
        %v1820 = vld [vmem:[#allocation7 + $0x40] sm:$0xff]
        %v1821 = vld [vmem:[#allocation7 + $0x48] sm:$0xff]
        %v1822 = vld [vmem:[#allocation7 + $0x50] sm:$0xff]
        %v1823 = vld [vmem:[#allocation7 + $0x58] sm:$0xff]
        %v1824 = vld [vmem:[#allocation7 + $0x60] sm:$0xff]
        %v1825 = vld [vmem:[#allocation7 + $0x68] sm:$0xff]
        %v1826 = vld [vmem:[#allocation7 + $0x70] sm:$0xff]
        %v1827 = vld [vmem:[#allocation7 + $0x78] sm:$0xff]
        %v1828 = vld [vmem:[#allocation7 + $0x80] sm:$0xff]
        %v1829 = vld [vmem:[#allocation7 + $0x88] sm:$0xff]
        %v1830 = vld [vmem:[#allocation7 + $0x90] sm:$0xff]
        %v1831 = vld [vmem:[#allocation7 + $0x98] sm:$0xff]
        %v1832 = vld [vmem:[#allocation7 + $0xa0] sm:$0xff]
        %v1833 = vld [vmem:[#allocation7 + $0xa8] sm:$0xff]
        %v1834 = vld [vmem:[#allocation7 + $0xb0] sm:$0xff]
        %v1835 = vld [vmem:[#allocation7 + $0xb8] sm:$0xff]
        %v1836 = vld [vmem:[#allocation7 + $0xc0] sm:$0xff]
        %v1837 = vld [vmem:[#allocation7 + $0xc8] sm:$0xff]
        %v1838 = vld [vmem:[#allocation7 + $0xd0] sm:$0xff]
        %v1839 = vld [vmem:[#allocation7 + $0xd8] sm:$0xff]
        %v1840 = vld [vmem:[#allocation7 + $0xe0] sm:$0xff]
        %v1841 = vld [vmem:[#allocation7 + $0xe8] sm:$0xff]
        %v1842 = vld [vmem:[#allocation7 + $0xf0] sm:$0xff]
        %v1843 = vld [vmem:[#allocation7 + $0xf8] sm:$0xff]
        %v1844 = vld [vmem:[#allocation7 + $0x100] sm:$0xff]
        %v1845 = vld [vmem:[#allocation7 + $0x108] sm:$0xff]
        %v1846 = vld [vmem:[#allocation7 + $0x110] sm:$0xff]
        %v1847 = vld [vmem:[#allocation7 + $0x118] sm:$0xff]
        %v1848 = vld [vmem:[#allocation7 + $0x120] sm:$0xff]
        %v1849 = vld [vmem:[#allocation7 + $0x128] sm:$0xff]
        %v1850 = vld [vmem:[#allocation7 + $0x130] sm:$0xff]
        %v1851 = vld [vmem:[#allocation7 + $0x138] sm:$0xff]
        %v1852 = vld [vmem:[#allocation7 + $0x140] sm:$0xff]
        %v1853 = vld [vmem:[#allocation7 + $0x148] sm:$0xff]
        %v1854 = vld [vmem:[#allocation7 + $0x150] sm:$0xff]
        %v1855 = vld [vmem:[#allocation7 + $0x158] sm:$0xff]
        %v1856 = vld [vmem:[#allocation7 + $0x160] sm:$0xff]
        %v1857 = vld [vmem:[#allocation7 + $0x168] sm:$0xff]
        %v1858 = vld [vmem:[#allocation7 + $0x170] sm:$0xff]
        %v1859 = vld [vmem:[#allocation7 + $0x178] sm:$0xff]
        %1860 = vmatpush.msra.mxu0 %v1857
        %1861 = vmatpush.msra.mxu0 %v1854
        %1862 = vmatpush.msra.mxu0 %v1851
        %1863 = vmatpush.msra.mxu0 %v1848
        %1864 = vmatpush.msra.mxu0 %v1845
        %1865 = vmatpush.msra.mxu0 %v1842
        %1866 = vmatpush.msra.mxu0 %v1839
        %1867 = vmatpush.msra.mxu0 %v1836
        %1868 = vmatpush.msra.mxu0 %v1833
        %1869 = vmatpush.msra.mxu0 %v1830
        %1870 = vmatpush.msra.mxu0 %v1827
        %1871 = vmatpush.msra.mxu0 %v1824
        %1872 = vmatpush.msra.mxu0 %v1821
        %1873 = vmatpush.msra.mxu0 %v1818
        %1874 = vmatpush.msra.mxu0 %v1815
        %1875 = vmatpush.msra.mxu0 %v1812
        %1876 = vmatmul.f32.gmra.mxu0 %v1809
        %v1877 = vpop.f32.mrf.mxu0
        %v1878 = vadd.f32 0.0, %v1877
        %1879 = vdwg.mxu0
        %1880 = vmatpush.msra.mxu0 %v1858
        %1881 = vmatpush.msra.mxu0 %v1855
        %1882 = vmatpush.msra.mxu0 %v1852
        %1883 = vmatpush.msra.mxu0 %v1849
        %1884 = vmatpush.msra.mxu0 %v1846
        %1885 = vmatpush.msra.mxu0 %v1843
        %1886 = vmatpush.msra.mxu0 %v1840
        %1887 = vmatpush.msra.mxu0 %v1837
        %1888 = vmatpush.msra.mxu0 %v1834
        %1889 = vmatpush.msra.mxu0 %v1831
        %1890 = vmatpush.msra.mxu0 %v1828
        %1891 = vmatpush.msra.mxu0 %v1825
        %1892 = vmatpush.msra.mxu0 %v1822
        %1893 = vmatpush.msra.mxu0 %v1819
        %1894 = vmatpush.msra.mxu0 %v1816
        %1895 = vmatpush.msra.mxu0 %v1813
        %1896 = vmatmul.f32.gmra.mxu0 %v1809
        %v1897 = vpop.f32.mrf.mxu0
        %v1898 = vadd.f32 0.0, %v1897
        %1899 = vdwg.mxu0
        %1900 = vmatpush.msra.mxu0 %v1859
        %1901 = vmatpush.msra.mxu0 %v1856
        %1902 = vmatpush.msra.mxu0 %v1853
        %1903 = vmatpush.msra.mxu0 %v1850
        %1904 = vmatpush.msra.mxu0 %v1847
        %1905 = vmatpush.msra.mxu0 %v1844
        %1906 = vmatpush.msra.mxu0 %v1841
        %1907 = vmatpush.msra.mxu0 %v1838
        %1908 = vmatpush.msra.mxu0 %v1835
        %1909 = vmatpush.msra.mxu0 %v1832
        %1910 = vmatpush.msra.mxu0 %v1829
        %1911 = vmatpush.msra.mxu0 %v1826
        %1912 = vmatpush.msra.mxu0 %v1823
        %1913 = vmatpush.msra.mxu0 %v1820
        %1914 = vmatpush.msra.mxu0 %v1817
        %1915 = vmatpush.msra.mxu0 %v1814
        %1916 = vmatmul.f32.gmra.mxu0 %v1809
        %v1917 = vpop.f32.mrf.mxu0
        %v1918 = vadd.f32 0.0, %v1917
        %1919 = vdwg.mxu0
        %s1920 = scalar_lea.vmem [#allocation2], 144
        %v1921 = vld [vmem:[%s1920] sm:$0xff]
        %v1922 = vld [vmem:[%s1920 + $0x8] sm:$0xff]
        %v1923 = vld [vmem:[%s1920 + $0x10] sm:$0xff]
        %v1924 = vadd.f32 %v1921, %v1878
        %v1925 = vxor.u32 %v1924, 2147483648
        %v1926 = vmul.f32 %v1925, 1.442695
        %v1927 = vpow.pop %v1926
        %v1928 = vadd.f32 %v1927, 1.0
        %v1929 = vrcp.pop %v1928
        %v1930 = vmul.f32 %v1928, %v1929
        %v1931 = vsub.f32 1.0, %v1930
        %v1932 = vmul.f32 %v1929, %v1931
        %v1933 = vadd.f32 %v1929, %v1932
        %vm1934 = vweird.f32 %v1928
        %vm1935 = vweird.f32 %v1929
        %vm1936 = vmor %vm1934, %vm1935
        %v1937 = vsel %vm1936, %v1929, %v1933
        %v1938 = vand.u32 2147483647, %v1928
        %vm1939 = vcmp.eq.f32.partialorder %v1938, 8.507059e+37
        %v1940 = vand.u32 %v1928, 2147483648
        %v1941 = vor.u32 1.1754944e-38, %v1940
        %v1942 = vsel %vm1939, %v1941, %v1937
        %v1943 = vmul.f32 1.0, %v1942
        %v1944 = vadd.f32 %v1922, %v1898
        %v1945 = vxor.u32 %v1944, 2147483648
        %v1946 = vmul.f32 %v1945, 1.442695
        %v1947 = vpow.pop %v1946
        %v1948 = vadd.f32 %v1947, 1.0
        %v1949 = vrcp.pop %v1948
        %v1950 = vmul.f32 %v1948, %v1949
        %v1951 = vsub.f32 1.0, %v1950
        %v1952 = vmul.f32 %v1949, %v1951
        %v1953 = vadd.f32 %v1949, %v1952
        %vm1954 = vweird.f32 %v1948
        %vm1955 = vweird.f32 %v1949
        %vm1956 = vmor %vm1954, %vm1955
        %v1957 = vsel %vm1956, %v1949, %v1953
        %v1958 = vand.u32 2147483647, %v1948
        %vm1959 = vcmp.eq.f32.partialorder %v1958, 8.507059e+37
        %v1960 = vand.u32 %v1948, 2147483648
        %v1961 = vor.u32 1.1754944e-38, %v1960
        %v1962 = vsel %vm1959, %v1961, %v1957
        %v1963 = vmul.f32 1.0, %v1962
        %v1964 = vadd.f32 %v1918, %v839
        %v1965 = vmul.f32 %v1943, %v1964
        %v1966 = vadd.f32 %v1923, %v1965
        %v1967 = vtanh.pop %v1966
        %v1968 = vsub.f32 1.0, %v1963
        %v1969 = vmul.f32 %v1968, %v1967
        %v1970 = vmul.f32 %v1963, %v1809
        %v1971 = vadd.f32 %v1969, %v1970
        %s1972 = scalar_lea.vmem [#allocation3], 48
        %1973 = vst [vmem:[%s1972] sm:$0xff] %v1971
        %v1974 = vld [vmem:[#allocation7] sm:$0xff]
        %v1975 = vld [vmem:[#allocation7 + $0x8] sm:$0xff]
        %v1976 = vld [vmem:[#allocation7 + $0x10] sm:$0xff]
        %v1977 = vld [vmem:[#allocation7 + $0x18] sm:$0xff]
        %v1978 = vld [vmem:[#allocation7 + $0x20] sm:$0xff]
        %v1979 = vld [vmem:[#allocation7 + $0x28] sm:$0xff]
        %v1980 = vld [vmem:[#allocation7 + $0x30] sm:$0xff]
        %v1981 = vld [vmem:[#allocation7 + $0x38] sm:$0xff]
        %v1982 = vld [vmem:[#allocation7 + $0x40] sm:$0xff]
        %v1983 = vld [vmem:[#allocation7 + $0x48] sm:$0xff]
        %v1984 = vld [vmem:[#allocation7 + $0x50] sm:$0xff]
        %v1985 = vld [vmem:[#allocation7 + $0x58] sm:$0xff]
        %v1986 = vld [vmem:[#allocation7 + $0x60] sm:$0xff]
        %v1987 = vld [vmem:[#allocation7 + $0x68] sm:$0xff]
        %v1988 = vld [vmem:[#allocation7 + $0x70] sm:$0xff]
        %v1989 = vld [vmem:[#allocation7 + $0x78] sm:$0xff]
        %v1990 = vld [vmem:[#allocation7 + $0x80] sm:$0xff]
        %v1991 = vld [vmem:[#allocation7 + $0x88] sm:$0xff]
        %v1992 = vld [vmem:[#allocation7 + $0x90] sm:$0xff]
        %v1993 = vld [vmem:[#allocation7 + $0x98] sm:$0xff]
        %v1994 = vld [vmem:[#allocation7 + $0xa0] sm:$0xff]
        %v1995 = vld [vmem:[#allocation7 + $0xa8] sm:$0xff]
        %v1996 = vld [vmem:[#allocation7 + $0xb0] sm:$0xff]
        %v1997 = vld [vmem:[#allocation7 + $0xb8] sm:$0xff]
        %v1998 = vld [vmem:[#allocation7 + $0xc0] sm:$0xff]
        %v1999 = vld [vmem:[#allocation7 + $0xc8] sm:$0xff]
        %v2000 = vld [vmem:[#allocation7 + $0xd0] sm:$0xff]
        %v2001 = vld [vmem:[#allocation7 + $0xd8] sm:$0xff]
        %v2002 = vld [vmem:[#allocation7 + $0xe0] sm:$0xff]
        %v2003 = vld [vmem:[#allocation7 + $0xe8] sm:$0xff]
        %v2004 = vld [vmem:[#allocation7 + $0xf0] sm:$0xff]
        %v2005 = vld [vmem:[#allocation7 + $0xf8] sm:$0xff]
        %v2006 = vld [vmem:[#allocation7 + $0x100] sm:$0xff]
        %v2007 = vld [vmem:[#allocation7 + $0x108] sm:$0xff]
        %v2008 = vld [vmem:[#allocation7 + $0x110] sm:$0xff]
        %v2009 = vld [vmem:[#allocation7 + $0x118] sm:$0xff]
        %v2010 = vld [vmem:[#allocation7 + $0x120] sm:$0xff]
        %v2011 = vld [vmem:[#allocation7 + $0x128] sm:$0xff]
        %v2012 = vld [vmem:[#allocation7 + $0x130] sm:$0xff]
        %v2013 = vld [vmem:[#allocation7 + $0x138] sm:$0xff]
        %v2014 = vld [vmem:[#allocation7 + $0x140] sm:$0xff]
        %v2015 = vld [vmem:[#allocation7 + $0x148] sm:$0xff]
        %v2016 = vld [vmem:[#allocation7 + $0x150] sm:$0xff]
        %v2017 = vld [vmem:[#allocation7 + $0x158] sm:$0xff]
        %v2018 = vld [vmem:[#allocation7 + $0x160] sm:$0xff]
        %v2019 = vld [vmem:[#allocation7 + $0x168] sm:$0xff]
        %v2020 = vld [vmem:[#allocation7 + $0x170] sm:$0xff]
        %v2021 = vld [vmem:[#allocation7 + $0x178] sm:$0xff]
        %2022 = vmatpush.msra.mxu0 %v2019
        %2023 = vmatpush.msra.mxu0 %v2016
        %2024 = vmatpush.msra.mxu0 %v2013
        %2025 = vmatpush.msra.mxu0 %v2010
        %2026 = vmatpush.msra.mxu0 %v2007
        %2027 = vmatpush.msra.mxu0 %v2004
        %2028 = vmatpush.msra.mxu0 %v2001
        %2029 = vmatpush.msra.mxu0 %v1998
        %2030 = vmatpush.msra.mxu0 %v1995
        %2031 = vmatpush.msra.mxu0 %v1992
        %2032 = vmatpush.msra.mxu0 %v1989
        %2033 = vmatpush.msra.mxu0 %v1986
        %2034 = vmatpush.msra.mxu0 %v1983
        %2035 = vmatpush.msra.mxu0 %v1980
        %2036 = vmatpush.msra.mxu0 %v1977
        %2037 = vmatpush.msra.mxu0 %v1974
        %2038 = vmatmul.f32.gmra.mxu0 %v1971
        %v2039 = vpop.f32.mrf.mxu0
        %v2040 = vadd.f32 0.0, %v2039
        %2041 = vdwg.mxu0
        %2042 = vmatpush.msra.mxu0 %v2020
        %2043 = vmatpush.msra.mxu0 %v2017
        %2044 = vmatpush.msra.mxu0 %v2014
        %2045 = vmatpush.msra.mxu0 %v2011
        %2046 = vmatpush.msra.mxu0 %v2008
        %2047 = vmatpush.msra.mxu0 %v2005
        %2048 = vmatpush.msra.mxu0 %v2002
        %2049 = vmatpush.msra.mxu0 %v1999
        %2050 = vmatpush.msra.mxu0 %v1996
        %2051 = vmatpush.msra.mxu0 %v1993
        %2052 = vmatpush.msra.mxu0 %v1990
        %2053 = vmatpush.msra.mxu0 %v1987
        %2054 = vmatpush.msra.mxu0 %v1984
        %2055 = vmatpush.msra.mxu0 %v1981
        %2056 = vmatpush.msra.mxu0 %v1978
        %2057 = vmatpush.msra.mxu0 %v1975
        %2058 = vmatmul.f32.gmra.mxu0 %v1971
        %v2059 = vpop.f32.mrf.mxu0
        %v2060 = vadd.f32 0.0, %v2059
        %2061 = vdwg.mxu0
        %2062 = vmatpush.msra.mxu0 %v2021
        %2063 = vmatpush.msra.mxu0 %v2018
        %2064 = vmatpush.msra.mxu0 %v2015
        %2065 = vmatpush.msra.mxu0 %v2012
        %2066 = vmatpush.msra.mxu0 %v2009
        %2067 = vmatpush.msra.mxu0 %v2006
        %2068 = vmatpush.msra.mxu0 %v2003
        %2069 = vmatpush.msra.mxu0 %v2000
        %2070 = vmatpush.msra.mxu0 %v1997
        %2071 = vmatpush.msra.mxu0 %v1994
        %2072 = vmatpush.msra.mxu0 %v1991
        %2073 = vmatpush.msra.mxu0 %v1988
        %2074 = vmatpush.msra.mxu0 %v1985
        %2075 = vmatpush.msra.mxu0 %v1982
        %2076 = vmatpush.msra.mxu0 %v1979
        %2077 = vmatpush.msra.mxu0 %v1976
        %2078 = vmatmul.f32.gmra.mxu0 %v1971
        %v2079 = vpop.f32.mrf.mxu0
        %v2080 = vadd.f32 0.0, %v2079
        %2081 = vdwg.mxu0
        %s2082 = scalar_lea.vmem [#allocation2], 168
        %v2083 = vld [vmem:[%s2082] sm:$0xff]
        %v2084 = vld [vmem:[%s2082 + $0x8] sm:$0xff]
        %v2085 = vld [vmem:[%s2082 + $0x10] sm:$0xff]
        %v2086 = vadd.f32 %v2083, %v2040
        %v2087 = vxor.u32 %v2086, 2147483648
        %v2088 = vmul.f32 %v2087, 1.442695
        %v2089 = vpow.pop %v2088
        %v2090 = vadd.f32 %v2089, 1.0
        %v2091 = vrcp.pop %v2090
        %v2092 = vmul.f32 %v2090, %v2091
        %v2093 = vsub.f32 1.0, %v2092
        %v2094 = vmul.f32 %v2091, %v2093
        %v2095 = vadd.f32 %v2091, %v2094
        %vm2096 = vweird.f32 %v2090
        %vm2097 = vweird.f32 %v2091
        %vm2098 = vmor %vm2096, %vm2097
        %v2099 = vsel %vm2098, %v2091, %v2095
        %v2100 = vand.u32 2147483647, %v2090
        %vm2101 = vcmp.eq.f32.partialorder %v2100, 8.507059e+37
        %v2102 = vand.u32 %v2090, 2147483648
        %v2103 = vor.u32 1.1754944e-38, %v2102
        %v2104 = vsel %vm2101, %v2103, %v2099
        %v2105 = vmul.f32 1.0, %v2104
        %v2106 = vadd.f32 %v2084, %v2060
        %v2107 = vxor.u32 %v2106, 2147483648
        %v2108 = vmul.f32 %v2107, 1.442695
        %v2109 = vpow.pop %v2108
        %v2110 = vadd.f32 %v2109, 1.0
        %v2111 = vrcp.pop %v2110
        %v2112 = vmul.f32 %v2110, %v2111
        %v2113 = vsub.f32 1.0, %v2112
        %v2114 = vmul.f32 %v2111, %v2113
        %v2115 = vadd.f32 %v2111, %v2114
        %vm2116 = vweird.f32 %v2110
        %vm2117 = vweird.f32 %v2111
        %vm2118 = vmor %vm2116, %vm2117
        %v2119 = vsel %vm2118, %v2111, %v2115
        %v2120 = vand.u32 2147483647, %v2110
        %vm2121 = vcmp.eq.f32.partialorder %v2120, 8.507059e+37
        %v2122 = vand.u32 %v2110, 2147483648
        %v2123 = vor.u32 1.1754944e-38, %v2122
        %v2124 = vsel %vm2121, %v2123, %v2119
        %v2125 = vmul.f32 1.0, %v2124
        %v2126 = vadd.f32 %v2080, %v839
        %v2127 = vmul.f32 %v2105, %v2126
        %v2128 = vadd.f32 %v2085, %v2127
        %v2129 = vtanh.pop %v2128
        %v2130 = vsub.f32 1.0, %v2125
        %v2131 = vmul.f32 %v2130, %v2129
        %v2132 = vmul.f32 %v2125, %v1971
        %v2133 = vadd.f32 %v2131, %v2132
        %s2134 = scalar_lea.vmem [#allocation3], 56
        %2135 = vst [vmem:[%s2134] sm:$0xff] %v2133
        %v2136 = vld [vmem:[#allocation7] sm:$0xff]
        %v2137 = vld [vmem:[#allocation7 + $0x8] sm:$0xff]
        %v2138 = vld [vmem:[#allocation7 + $0x10] sm:$0xff]
        %v2139 = vld [vmem:[#allocation7 + $0x18] sm:$0xff]
        %v2140 = vld [vmem:[#allocation7 + $0x20] sm:$0xff]
        %v2141 = vld [vmem:[#allocation7 + $0x28] sm:$0xff]
        %v2142 = vld [vmem:[#allocation7 + $0x30] sm:$0xff]
        %v2143 = vld [vmem:[#allocation7 + $0x38] sm:$0xff]
        %v2144 = vld [vmem:[#allocation7 + $0x40] sm:$0xff]
        %v2145 = vld [vmem:[#allocation7 + $0x48] sm:$0xff]
        %v2146 = vld [vmem:[#allocation7 + $0x50] sm:$0xff]
        %v2147 = vld [vmem:[#allocation7 + $0x58] sm:$0xff]
        %v2148 = vld [vmem:[#allocation7 + $0x60] sm:$0xff]
        %v2149 = vld [vmem:[#allocation7 + $0x68] sm:$0xff]
        %v2150 = vld [vmem:[#allocation7 + $0x70] sm:$0xff]
        %v2151 = vld [vmem:[#allocation7 + $0x78] sm:$0xff]
        %v2152 = vld [vmem:[#allocation7 + $0x80] sm:$0xff]
        %v2153 = vld [vmem:[#allocation7 + $0x88] sm:$0xff]
        %v2154 = vld [vmem:[#allocation7 + $0x90] sm:$0xff]
        %v2155 = vld [vmem:[#allocation7 + $0x98] sm:$0xff]
        %v2156 = vld [vmem:[#allocation7 + $0xa0] sm:$0xff]
        %v2157 = vld [vmem:[#allocation7 + $0xa8] sm:$0xff]
        %v2158 = vld [vmem:[#allocation7 + $0xb0] sm:$0xff]
        %v2159 = vld [vmem:[#allocation7 + $0xb8] sm:$0xff]
        %v2160 = vld [vmem:[#allocation7 + $0xc0] sm:$0xff]
        %v2161 = vld [vmem:[#allocation7 + $0xc8] sm:$0xff]
        %v2162 = vld [vmem:[#allocation7 + $0xd0] sm:$0xff]
        %v2163 = vld [vmem:[#allocation7 + $0xd8] sm:$0xff]
        %v2164 = vld [vmem:[#allocation7 + $0xe0] sm:$0xff]
        %v2165 = vld [vmem:[#allocation7 + $0xe8] sm:$0xff]
        %v2166 = vld [vmem:[#allocation7 + $0xf0] sm:$0xff]
        %v2167 = vld [vmem:[#allocation7 + $0xf8] sm:$0xff]
        %v2168 = vld [vmem:[#allocation7 + $0x100] sm:$0xff]
        %v2169 = vld [vmem:[#allocation7 + $0x108] sm:$0xff]
        %v2170 = vld [vmem:[#allocation7 + $0x110] sm:$0xff]
        %v2171 = vld [vmem:[#allocation7 + $0x118] sm:$0xff]
        %v2172 = vld [vmem:[#allocation7 + $0x120] sm:$0xff]
        %v2173 = vld [vmem:[#allocation7 + $0x128] sm:$0xff]
        %v2174 = vld [vmem:[#allocation7 + $0x130] sm:$0xff]
        %v2175 = vld [vmem:[#allocation7 + $0x138] sm:$0xff]
        %v2176 = vld [vmem:[#allocation7 + $0x140] sm:$0xff]
        %v2177 = vld [vmem:[#allocation7 + $0x148] sm:$0xff]
        %v2178 = vld [vmem:[#allocation7 + $0x150] sm:$0xff]
        %v2179 = vld [vmem:[#allocation7 + $0x158] sm:$0xff]
        %v2180 = vld [vmem:[#allocation7 + $0x160] sm:$0xff]
        %v2181 = vld [vmem:[#allocation7 + $0x168] sm:$0xff]
        %v2182 = vld [vmem:[#allocation7 + $0x170] sm:$0xff]
        %v2183 = vld [vmem:[#allocation7 + $0x178] sm:$0xff]
        %2184 = vmatpush.msra.mxu0 %v2181
        %2185 = vmatpush.msra.mxu0 %v2178
        %2186 = vmatpush.msra.mxu0 %v2175
        %2187 = vmatpush.msra.mxu0 %v2172
        %2188 = vmatpush.msra.mxu0 %v2169
        %2189 = vmatpush.msra.mxu0 %v2166
        %2190 = vmatpush.msra.mxu0 %v2163
        %2191 = vmatpush.msra.mxu0 %v2160
        %2192 = vmatpush.msra.mxu0 %v2157
        %2193 = vmatpush.msra.mxu0 %v2154
        %2194 = vmatpush.msra.mxu0 %v2151
        %2195 = vmatpush.msra.mxu0 %v2148
        %2196 = vmatpush.msra.mxu0 %v2145
        %2197 = vmatpush.msra.mxu0 %v2142
        %2198 = vmatpush.msra.mxu0 %v2139
        %2199 = vmatpush.msra.mxu0 %v2136
        %2200 = vmatmul.f32.gmra.mxu0 %v2133
        %v2201 = vpop.f32.mrf.mxu0
        %v2202 = vadd.f32 0.0, %v2201
        %2203 = vdwg.mxu0
        %2204 = vmatpush.msra.mxu0 %v2182
        %2205 = vmatpush.msra.mxu0 %v2179
        %2206 = vmatpush.msra.mxu0 %v2176
        %2207 = vmatpush.msra.mxu0 %v2173
        %2208 = vmatpush.msra.mxu0 %v2170
        %2209 = vmatpush.msra.mxu0 %v2167
        %2210 = vmatpush.msra.mxu0 %v2164
        %2211 = vmatpush.msra.mxu0 %v2161
        %2212 = vmatpush.msra.mxu0 %v2158
        %2213 = vmatpush.msra.mxu0 %v2155
        %2214 = vmatpush.msra.mxu0 %v2152
        %2215 = vmatpush.msra.mxu0 %v2149
        %2216 = vmatpush.msra.mxu0 %v2146
        %2217 = vmatpush.msra.mxu0 %v2143
        %2218 = vmatpush.msra.mxu0 %v2140
        %2219 = vmatpush.msra.mxu0 %v2137
        %2220 = vmatmul.f32.gmra.mxu0 %v2133
        %v2221 = vpop.f32.mrf.mxu0
        %v2222 = vadd.f32 0.0, %v2221
        %2223 = vdwg.mxu0
        %2224 = vmatpush.msra.mxu0 %v2183
        %2225 = vmatpush.msra.mxu0 %v2180
        %2226 = vmatpush.msra.mxu0 %v2177
        %2227 = vmatpush.msra.mxu0 %v2174
        %2228 = vmatpush.msra.mxu0 %v2171
        %2229 = vmatpush.msra.mxu0 %v2168
        %2230 = vmatpush.msra.mxu0 %v2165
        %2231 = vmatpush.msra.mxu0 %v2162
        %2232 = vmatpush.msra.mxu0 %v2159
        %2233 = vmatpush.msra.mxu0 %v2156
        %2234 = vmatpush.msra.mxu0 %v2153
        %2235 = vmatpush.msra.mxu0 %v2150
        %2236 = vmatpush.msra.mxu0 %v2147
        %2237 = vmatpush.msra.mxu0 %v2144
        %2238 = vmatpush.msra.mxu0 %v2141
        %2239 = vmatpush.msra.mxu0 %v2138
        %2240 = vmatmul.f32.gmra.mxu0 %v2133
        %v2241 = vpop.f32.mrf.mxu0
        %v2242 = vadd.f32 0.0, %v2241
        %2243 = vdwg.mxu0
        %s2244 = scalar_lea.vmem [#allocation2], 192
        %v2245 = vld [vmem:[%s2244] sm:$0xff]
        %v2246 = vld [vmem:[%s2244 + $0x8] sm:$0xff]
        %v2247 = vld [vmem:[%s2244 + $0x10] sm:$0xff]
        %v2248 = vadd.f32 %v2245, %v2202
        %v2249 = vxor.u32 %v2248, 2147483648
        %v2250 = vmul.f32 %v2249, 1.442695
        %v2251 = vpow.pop %v2250
        %v2252 = vadd.f32 %v2251, 1.0
        %v2253 = vrcp.pop %v2252
        %v2254 = vmul.f32 %v2252, %v2253
        %v2255 = vsub.f32 1.0, %v2254
        %v2256 = vmul.f32 %v2253, %v2255
        %v2257 = vadd.f32 %v2253, %v2256
        %vm2258 = vweird.f32 %v2252
        %vm2259 = vweird.f32 %v2253
        %vm2260 = vmor %vm2258, %vm2259
        %v2261 = vsel %vm2260, %v2253, %v2257
        %v2262 = vand.u32 2147483647, %v2252
        %vm2263 = vcmp.eq.f32.partialorder %v2262, 8.507059e+37
        %v2264 = vand.u32 %v2252, 2147483648
        %v2265 = vor.u32 1.1754944e-38, %v2264
        %v2266 = vsel %vm2263, %v2265, %v2261
        %v2267 = vmul.f32 1.0, %v2266
        %v2268 = vadd.f32 %v2246, %v2222
        %v2269 = vxor.u32 %v2268, 2147483648
        %v2270 = vmul.f32 %v2269, 1.442695
        %v2271 = vpow.pop %v2270
        %v2272 = vadd.f32 %v2271, 1.0
        %v2273 = vrcp.pop %v2272
        %v2274 = vmul.f32 %v2272, %v2273
        %v2275 = vsub.f32 1.0, %v2274
        %v2276 = vmul.f32 %v2273, %v2275
        %v2277 = vadd.f32 %v2273, %v2276
        %vm2278 = vweird.f32 %v2272
        %vm2279 = vweird.f32 %v2273
        %vm2280 = vmor %vm2278, %vm2279
        %v2281 = vsel %vm2280, %v2273, %v2277
        %v2282 = vand.u32 2147483647, %v2272
        %vm2283 = vcmp.eq.f32.partialorder %v2282, 8.507059e+37
        %v2284 = vand.u32 %v2272, 2147483648
        %v2285 = vor.u32 1.1754944e-38, %v2284
        %v2286 = vsel %vm2283, %v2285, %v2281
        %v2287 = vmul.f32 1.0, %v2286
        %v2288 = vadd.f32 %v2242, %v839
        %v2289 = vmul.f32 %v2267, %v2288
        %v2290 = vadd.f32 %v2247, %v2289
        %v2291 = vtanh.pop %v2290
        %v2292 = vsub.f32 1.0, %v2287
        %v2293 = vmul.f32 %v2292, %v2291
        %v2294 = vmul.f32 %v2287, %v2133
        %v2295 = vadd.f32 %v2293, %v2294
        %s2296 = scalar_lea.vmem [#allocation3], 64
        %2297 = vst [vmem:[%s2296] sm:$0xff] %v2295
        %v2298 = vld [vmem:[#allocation7] sm:$0xff]
        %v2299 = vld [vmem:[#allocation7 + $0x8] sm:$0xff]
        %v2300 = vld [vmem:[#allocation7 + $0x10] sm:$0xff]
        %v2301 = vld [vmem:[#allocation7 + $0x18] sm:$0xff]
        %v2302 = vld [vmem:[#allocation7 + $0x20] sm:$0xff]
        %v2303 = vld [vmem:[#allocation7 + $0x28] sm:$0xff]
        %v2304 = vld [vmem:[#allocation7 + $0x30] sm:$0xff]
        %v2305 = vld [vmem:[#allocation7 + $0x38] sm:$0xff]
        %v2306 = vld [vmem:[#allocation7 + $0x40] sm:$0xff]
        %v2307 = vld [vmem:[#allocation7 + $0x48] sm:$0xff]
        %v2308 = vld [vmem:[#allocation7 + $0x50] sm:$0xff]
        %v2309 = vld [vmem:[#allocation7 + $0x58] sm:$0xff]
        %v2310 = vld [vmem:[#allocation7 + $0x60] sm:$0xff]
        %v2311 = vld [vmem:[#allocation7 + $0x68] sm:$0xff]
        %v2312 = vld [vmem:[#allocation7 + $0x70] sm:$0xff]
        %v2313 = vld [vmem:[#allocation7 + $0x78] sm:$0xff]
        %v2314 = vld [vmem:[#allocation7 + $0x80] sm:$0xff]
        %v2315 = vld [vmem:[#allocation7 + $0x88] sm:$0xff]
        %v2316 = vld [vmem:[#allocation7 + $0x90] sm:$0xff]
        %v2317 = vld [vmem:[#allocation7 + $0x98] sm:$0xff]
        %v2318 = vld [vmem:[#allocation7 + $0xa0] sm:$0xff]
        %v2319 = vld [vmem:[#allocation7 + $0xa8] sm:$0xff]
        %v2320 = vld [vmem:[#allocation7 + $0xb0] sm:$0xff]
        %v2321 = vld [vmem:[#allocation7 + $0xb8] sm:$0xff]
        %v2322 = vld [vmem:[#allocation7 + $0xc0] sm:$0xff]
        %v2323 = vld [vmem:[#allocation7 + $0xc8] sm:$0xff]
        %v2324 = vld [vmem:[#allocation7 + $0xd0] sm:$0xff]
        %v2325 = vld [vmem:[#allocation7 + $0xd8] sm:$0xff]
        %v2326 = vld [vmem:[#allocation7 + $0xe0] sm:$0xff]
        %v2327 = vld [vmem:[#allocation7 + $0xe8] sm:$0xff]
        %v2328 = vld [vmem:[#allocation7 + $0xf0] sm:$0xff]
        %v2329 = vld [vmem:[#allocation7 + $0xf8] sm:$0xff]
        %v2330 = vld [vmem:[#allocation7 + $0x100] sm:$0xff]
        %v2331 = vld [vmem:[#allocation7 + $0x108] sm:$0xff]
        %v2332 = vld [vmem:[#allocation7 + $0x110] sm:$0xff]
        %v2333 = vld [vmem:[#allocation7 + $0x118] sm:$0xff]
        %v2334 = vld [vmem:[#allocation7 + $0x120] sm:$0xff]
        %v2335 = vld [vmem:[#allocation7 + $0x128] sm:$0xff]
        %v2336 = vld [vmem:[#allocation7 + $0x130] sm:$0xff]
        %v2337 = vld [vmem:[#allocation7 + $0x138] sm:$0xff]
        %v2338 = vld [vmem:[#allocation7 + $0x140] sm:$0xff]
        %v2339 = vld [vmem:[#allocation7 + $0x148] sm:$0xff]
        %v2340 = vld [vmem:[#allocation7 + $0x150] sm:$0xff]
        %v2341 = vld [vmem:[#allocation7 + $0x158] sm:$0xff]
        %v2342 = vld [vmem:[#allocation7 + $0x160] sm:$0xff]
        %v2343 = vld [vmem:[#allocation7 + $0x168] sm:$0xff]
        %v2344 = vld [vmem:[#allocation7 + $0x170] sm:$0xff]
        %v2345 = vld [vmem:[#allocation7 + $0x178] sm:$0xff]
        %2346 = vmatpush.msra.mxu0 %v2343
        %2347 = vmatpush.msra.mxu0 %v2340
        %2348 = vmatpush.msra.mxu0 %v2337
        %2349 = vmatpush.msra.mxu0 %v2334
        %2350 = vmatpush.msra.mxu0 %v2331
        %2351 = vmatpush.msra.mxu0 %v2328
        %2352 = vmatpush.msra.mxu0 %v2325
        %2353 = vmatpush.msra.mxu0 %v2322
        %2354 = vmatpush.msra.mxu0 %v2319
        %2355 = vmatpush.msra.mxu0 %v2316
        %2356 = vmatpush.msra.mxu0 %v2313
        %2357 = vmatpush.msra.mxu0 %v2310
        %2358 = vmatpush.msra.mxu0 %v2307
        %2359 = vmatpush.msra.mxu0 %v2304
        %2360 = vmatpush.msra.mxu0 %v2301
        %2361 = vmatpush.msra.mxu0 %v2298
        %2362 = vmatmul.f32.gmra.mxu0 %v2295
        %v2363 = vpop.f32.mrf.mxu0
        %v2364 = vadd.f32 0.0, %v2363
        %2365 = vdwg.mxu0
        %2366 = vmatpush.msra.mxu0 %v2344
        %2367 = vmatpush.msra.mxu0 %v2341
        %2368 = vmatpush.msra.mxu0 %v2338
        %2369 = vmatpush.msra.mxu0 %v2335
        %2370 = vmatpush.msra.mxu0 %v2332
        %2371 = vmatpush.msra.mxu0 %v2329
        %2372 = vmatpush.msra.mxu0 %v2326
        %2373 = vmatpush.msra.mxu0 %v2323
        %2374 = vmatpush.msra.mxu0 %v2320
        %2375 = vmatpush.msra.mxu0 %v2317
        %2376 = vmatpush.msra.mxu0 %v2314
        %2377 = vmatpush.msra.mxu0 %v2311
        %2378 = vmatpush.msra.mxu0 %v2308
        %2379 = vmatpush.msra.mxu0 %v2305
        %2380 = vmatpush.msra.mxu0 %v2302
        %2381 = vmatpush.msra.mxu0 %v2299
        %2382 = vmatmul.f32.gmra.mxu0 %v2295
        %v2383 = vpop.f32.mrf.mxu0
        %v2384 = vadd.f32 0.0, %v2383
        %2385 = vdwg.mxu0
        %2386 = vmatpush.msra.mxu0 %v2345
        %2387 = vmatpush.msra.mxu0 %v2342
        %2388 = vmatpush.msra.mxu0 %v2339
        %2389 = vmatpush.msra.mxu0 %v2336
        %2390 = vmatpush.msra.mxu0 %v2333
        %2391 = vmatpush.msra.mxu0 %v2330
        %2392 = vmatpush.msra.mxu0 %v2327
        %2393 = vmatpush.msra.mxu0 %v2324
        %2394 = vmatpush.msra.mxu0 %v2321
        %2395 = vmatpush.msra.mxu0 %v2318
        %2396 = vmatpush.msra.mxu0 %v2315
        %2397 = vmatpush.msra.mxu0 %v2312
        %2398 = vmatpush.msra.mxu0 %v2309
        %2399 = vmatpush.msra.mxu0 %v2306
        %2400 = vmatpush.msra.mxu0 %v2303
        %2401 = vmatpush.msra.mxu0 %v2300
        %2402 = vmatmul.f32.gmra.mxu0 %v2295
        %v2403 = vpop.f32.mrf.mxu0
        %v2404 = vadd.f32 0.0, %v2403
        %2405 = vdwg.mxu0
        %s2406 = scalar_lea.vmem [#allocation2], 216
        %v2407 = vld [vmem:[%s2406] sm:$0xff]
        %v2408 = vld [vmem:[%s2406 + $0x8] sm:$0xff]
        %v2409 = vld [vmem:[%s2406 + $0x10] sm:$0xff]
        %v2410 = vadd.f32 %v2407, %v2364
        %v2411 = vxor.u32 %v2410, 2147483648
        %v2412 = vmul.f32 %v2411, 1.442695
        %v2413 = vpow.pop %v2412
        %v2414 = vadd.f32 %v2413, 1.0
        %v2415 = vrcp.pop %v2414
        %v2416 = vmul.f32 %v2414, %v2415
        %v2417 = vsub.f32 1.0, %v2416
        %v2418 = vmul.f32 %v2415, %v2417
        %v2419 = vadd.f32 %v2415, %v2418
        %vm2420 = vweird.f32 %v2414
        %vm2421 = vweird.f32 %v2415
        %vm2422 = vmor %vm2420, %vm2421
        %v2423 = vsel %vm2422, %v2415, %v2419
        %v2424 = vand.u32 2147483647, %v2414
        %vm2425 = vcmp.eq.f32.partialorder %v2424, 8.507059e+37
        %v2426 = vand.u32 %v2414, 2147483648
        %v2427 = vor.u32 1.1754944e-38, %v2426
        %v2428 = vsel %vm2425, %v2427, %v2423
        %v2429 = vmul.f32 1.0, %v2428
        %v2430 = vadd.f32 %v2408, %v2384
        %v2431 = vxor.u32 %v2430, 2147483648
        %v2432 = vmul.f32 %v2431, 1.442695
        %v2433 = vpow.pop %v2432
        %v2434 = vadd.f32 %v2433, 1.0
        %v2435 = vrcp.pop %v2434
        %v2436 = vmul.f32 %v2434, %v2435
        %v2437 = vsub.f32 1.0, %v2436
        %v2438 = vmul.f32 %v2435, %v2437
        %v2439 = vadd.f32 %v2435, %v2438
        %vm2440 = vweird.f32 %v2434
        %vm2441 = vweird.f32 %v2435
        %vm2442 = vmor %vm2440, %vm2441
        %v2443 = vsel %vm2442, %v2435, %v2439
        %v2444 = vand.u32 2147483647, %v2434
        %vm2445 = vcmp.eq.f32.partialorder %v2444, 8.507059e+37
        %v2446 = vand.u32 %v2434, 2147483648
        %v2447 = vor.u32 1.1754944e-38, %v2446
        %v2448 = vsel %vm2445, %v2447, %v2443
        %v2449 = vmul.f32 1.0, %v2448
        %v2450 = vadd.f32 %v2404, %v839
        %v2451 = vmul.f32 %v2429, %v2450
        %v2452 = vadd.f32 %v2409, %v2451
        %v2453 = vtanh.pop %v2452
        %v2454 = vsub.f32 1.0, %v2449
        %v2455 = vmul.f32 %v2454, %v2453
        %v2456 = vmul.f32 %v2449, %v2295
        %v2457 = vadd.f32 %v2455, %v2456
        %s2458 = scalar_lea.vmem [#allocation3], 72
        %2459 = vst [vmem:[%s2458] sm:$0xff] %v2457
        %v2460 = vld [vmem:[#allocation7] sm:$0xff]
        %v2461 = vld [vmem:[#allocation7 + $0x8] sm:$0xff]
        %v2462 = vld [vmem:[#allocation7 + $0x10] sm:$0xff]
        %v2463 = vld [vmem:[#allocation7 + $0x18] sm:$0xff]
        %v2464 = vld [vmem:[#allocation7 + $0x20] sm:$0xff]
        %v2465 = vld [vmem:[#allocation7 + $0x28] sm:$0xff]
        %v2466 = vld [vmem:[#allocation7 + $0x30] sm:$0xff]
        %v2467 = vld [vmem:[#allocation7 + $0x38] sm:$0xff]
        %v2468 = vld [vmem:[#allocation7 + $0x40] sm:$0xff]
        %v2469 = vld [vmem:[#allocation7 + $0x48] sm:$0xff]
        %v2470 = vld [vmem:[#allocation7 + $0x50] sm:$0xff]
        %v2471 = vld [vmem:[#allocation7 + $0x58] sm:$0xff]
        %v2472 = vld [vmem:[#allocation7 + $0x60] sm:$0xff]
        %v2473 = vld [vmem:[#allocation7 + $0x68] sm:$0xff]
        %v2474 = vld [vmem:[#allocation7 + $0x70] sm:$0xff]
        %v2475 = vld [vmem:[#allocation7 + $0x78] sm:$0xff]
        %v2476 = vld [vmem:[#allocation7 + $0x80] sm:$0xff]
        %v2477 = vld [vmem:[#allocation7 + $0x88] sm:$0xff]
        %v2478 = vld [vmem:[#allocation7 + $0x90] sm:$0xff]
        %v2479 = vld [vmem:[#allocation7 + $0x98] sm:$0xff]
        %v2480 = vld [vmem:[#allocation7 + $0xa0] sm:$0xff]
        %v2481 = vld [vmem:[#allocation7 + $0xa8] sm:$0xff]
        %v2482 = vld [vmem:[#allocation7 + $0xb0] sm:$0xff]
        %v2483 = vld [vmem:[#allocation7 + $0xb8] sm:$0xff]
        %v2484 = vld [vmem:[#allocation7 + $0xc0] sm:$0xff]
        %v2485 = vld [vmem:[#allocation7 + $0xc8] sm:$0xff]
        %v2486 = vld [vmem:[#allocation7 + $0xd0] sm:$0xff]
        %v2487 = vld [vmem:[#allocation7 + $0xd8] sm:$0xff]
        %v2488 = vld [vmem:[#allocation7 + $0xe0] sm:$0xff]
        %v2489 = vld [vmem:[#allocation7 + $0xe8] sm:$0xff]
        %v2490 = vld [vmem:[#allocation7 + $0xf0] sm:$0xff]
        %v2491 = vld [vmem:[#allocation7 + $0xf8] sm:$0xff]
        %v2492 = vld [vmem:[#allocation7 + $0x100] sm:$0xff]
        %v2493 = vld [vmem:[#allocation7 + $0x108] sm:$0xff]
        %v2494 = vld [vmem:[#allocation7 + $0x110] sm:$0xff]
        %v2495 = vld [vmem:[#allocation7 + $0x118] sm:$0xff]
        %v2496 = vld [vmem:[#allocation7 + $0x120] sm:$0xff]
        %v2497 = vld [vmem:[#allocation7 + $0x128] sm:$0xff]
        %v2498 = vld [vmem:[#allocation7 + $0x130] sm:$0xff]
        %v2499 = vld [vmem:[#allocation7 + $0x138] sm:$0xff]
        %v2500 = vld [vmem:[#allocation7 + $0x140] sm:$0xff]
        %v2501 = vld [vmem:[#allocation7 + $0x148] sm:$0xff]
        %v2502 = vld [vmem:[#allocation7 + $0x150] sm:$0xff]
        %v2503 = vld [vmem:[#allocation7 + $0x158] sm:$0xff]
        %v2504 = vld [vmem:[#allocation7 + $0x160] sm:$0xff]
        %v2505 = vld [vmem:[#allocation7 + $0x168] sm:$0xff]
        %v2506 = vld [vmem:[#allocation7 + $0x170] sm:$0xff]
        %v2507 = vld [vmem:[#allocation7 + $0x178] sm:$0xff]
        %2508 = vmatpush.msra.mxu0 %v2505
        %2509 = vmatpush.msra.mxu0 %v2502
        %2510 = vmatpush.msra.mxu0 %v2499
        %2511 = vmatpush.msra.mxu0 %v2496
        %2512 = vmatpush.msra.mxu0 %v2493
        %2513 = vmatpush.msra.mxu0 %v2490
        %2514 = vmatpush.msra.mxu0 %v2487
        %2515 = vmatpush.msra.mxu0 %v2484
        %2516 = vmatpush.msra.mxu0 %v2481
        %2517 = vmatpush.msra.mxu0 %v2478
        %2518 = vmatpush.msra.mxu0 %v2475
        %2519 = vmatpush.msra.mxu0 %v2472
        %2520 = vmatpush.msra.mxu0 %v2469
        %2521 = vmatpush.msra.mxu0 %v2466
        %2522 = vmatpush.msra.mxu0 %v2463
        %2523 = vmatpush.msra.mxu0 %v2460
        %2524 = vmatmul.f32.gmra.mxu0 %v2457
        %v2525 = vpop.f32.mrf.mxu0
        %v2526 = vadd.f32 0.0, %v2525
        %2527 = vdwg.mxu0
        %2528 = vmatpush.msra.mxu0 %v2506
        %2529 = vmatpush.msra.mxu0 %v2503
        %2530 = vmatpush.msra.mxu0 %v2500
        %2531 = vmatpush.msra.mxu0 %v2497
        %2532 = vmatpush.msra.mxu0 %v2494
        %2533 = vmatpush.msra.mxu0 %v2491
        %2534 = vmatpush.msra.mxu0 %v2488
        %2535 = vmatpush.msra.mxu0 %v2485
        %2536 = vmatpush.msra.mxu0 %v2482
        %2537 = vmatpush.msra.mxu0 %v2479
        %2538 = vmatpush.msra.mxu0 %v2476
        %2539 = vmatpush.msra.mxu0 %v2473
        %2540 = vmatpush.msra.mxu0 %v2470
        %2541 = vmatpush.msra.mxu0 %v2467
        %2542 = vmatpush.msra.mxu0 %v2464
        %2543 = vmatpush.msra.mxu0 %v2461
        %2544 = vmatmul.f32.gmra.mxu0 %v2457
        %v2545 = vpop.f32.mrf.mxu0
        %v2546 = vadd.f32 0.0, %v2545
        %2547 = vdwg.mxu0
        %2548 = vmatpush.msra.mxu0 %v2507
        %2549 = vmatpush.msra.mxu0 %v2504
        %2550 = vmatpush.msra.mxu0 %v2501
        %2551 = vmatpush.msra.mxu0 %v2498
        %2552 = vmatpush.msra.mxu0 %v2495
        %2553 = vmatpush.msra.mxu0 %v2492
        %2554 = vmatpush.msra.mxu0 %v2489
        %2555 = vmatpush.msra.mxu0 %v2486
        %2556 = vmatpush.msra.mxu0 %v2483
        %2557 = vmatpush.msra.mxu0 %v2480
        %2558 = vmatpush.msra.mxu0 %v2477
        %2559 = vmatpush.msra.mxu0 %v2474
        %2560 = vmatpush.msra.mxu0 %v2471
        %2561 = vmatpush.msra.mxu0 %v2468
        %2562 = vmatpush.msra.mxu0 %v2465
        %2563 = vmatpush.msra.mxu0 %v2462
        %2564 = vmatmul.f32.gmra.mxu0 %v2457
        %v2565 = vpop.f32.mrf.mxu0
        %v2566 = vadd.f32 0.0, %v2565
        %2567 = vdwg.mxu0
        %s2568 = scalar_lea.vmem [#allocation2], 240
        %v2569 = vld [vmem:[%s2568] sm:$0xff]
        %v2570 = vld [vmem:[%s2568 + $0x8] sm:$0xff]
        %v2571 = vld [vmem:[%s2568 + $0x10] sm:$0xff]
        %v2572 = vadd.f32 %v2569, %v2526
        %v2573 = vxor.u32 %v2572, 2147483648
        %v2574 = vmul.f32 %v2573, 1.442695
        %v2575 = vpow.pop %v2574
        %v2576 = vadd.f32 %v2575, 1.0
        %v2577 = vrcp.pop %v2576
        %v2578 = vmul.f32 %v2576, %v2577
        %v2579 = vsub.f32 1.0, %v2578
        %v2580 = vmul.f32 %v2577, %v2579
        %v2581 = vadd.f32 %v2577, %v2580
        %vm2582 = vweird.f32 %v2576
        %vm2583 = vweird.f32 %v2577
        %vm2584 = vmor %vm2582, %vm2583
        %v2585 = vsel %vm2584, %v2577, %v2581
        %v2586 = vand.u32 2147483647, %v2576
        %vm2587 = vcmp.eq.f32.partialorder %v2586, 8.507059e+37
        %v2588 = vand.u32 %v2576, 2147483648
        %v2589 = vor.u32 1.1754944e-38, %v2588
        %v2590 = vsel %vm2587, %v2589, %v2585
        %v2591 = vmul.f32 1.0, %v2590
        %v2592 = vadd.f32 %v2570, %v2546
        %v2593 = vxor.u32 %v2592, 2147483648
        %v2594 = vmul.f32 %v2593, 1.442695
        %v2595 = vpow.pop %v2594
        %v2596 = vadd.f32 %v2595, 1.0
        %v2597 = vrcp.pop %v2596
        %v2598 = vmul.f32 %v2596, %v2597
        %v2599 = vsub.f32 1.0, %v2598
        %v2600 = vmul.f32 %v2597, %v2599
        %v2601 = vadd.f32 %v2597, %v2600
        %vm2602 = vweird.f32 %v2596
        %vm2603 = vweird.f32 %v2597
        %vm2604 = vmor %vm2602, %vm2603
        %v2605 = vsel %vm2604, %v2597, %v2601
        %v2606 = vand.u32 2147483647, %v2596
        %vm2607 = vcmp.eq.f32.partialorder %v2606, 8.507059e+37
        %v2608 = vand.u32 %v2596, 2147483648
        %v2609 = vor.u32 1.1754944e-38, %v2608
        %v2610 = vsel %vm2607, %v2609, %v2605
        %v2611 = vmul.f32 1.0, %v2610
        %v2612 = vadd.f32 %v2566, %v839
        %v2613 = vmul.f32 %v2591, %v2612
        %v2614 = vadd.f32 %v2571, %v2613
        %v2615 = vtanh.pop %v2614
        %v2616 = vsub.f32 1.0, %v2611
        %v2617 = vmul.f32 %v2616, %v2615
        %v2618 = vmul.f32 %v2611, %v2457
        %v2619 = vadd.f32 %v2617, %v2618
        %s2620 = scalar_lea.vmem [#allocation3], 80
        %2621 = vst [vmem:[%s2620] sm:$0xff] %v2619
        %v2622 = vld [vmem:[#allocation7] sm:$0xff]
        %v2623 = vld [vmem:[#allocation7 + $0x8] sm:$0xff]
        %v2624 = vld [vmem:[#allocation7 + $0x10] sm:$0xff]
        %v2625 = vld [vmem:[#allocation7 + $0x18] sm:$0xff]
        %v2626 = vld [vmem:[#allocation7 + $0x20] sm:$0xff]
        %v2627 = vld [vmem:[#allocation7 + $0x28] sm:$0xff]
        %v2628 = vld [vmem:[#allocation7 + $0x30] sm:$0xff]
        %v2629 = vld [vmem:[#allocation7 + $0x38] sm:$0xff]
        %v2630 = vld [vmem:[#allocation7 + $0x40] sm:$0xff]
        %v2631 = vld [vmem:[#allocation7 + $0x48] sm:$0xff]
        %v2632 = vld [vmem:[#allocation7 + $0x50] sm:$0xff]
        %v2633 = vld [vmem:[#allocation7 + $0x58] sm:$0xff]
        %v2634 = vld [vmem:[#allocation7 + $0x60] sm:$0xff]
        %v2635 = vld [vmem:[#allocation7 + $0x68] sm:$0xff]
        %v2636 = vld [vmem:[#allocation7 + $0x70] sm:$0xff]
        %v2637 = vld [vmem:[#allocation7 + $0x78] sm:$0xff]
        %v2638 = vld [vmem:[#allocation7 + $0x80] sm:$0xff]
        %v2639 = vld [vmem:[#allocation7 + $0x88] sm:$0xff]
        %v2640 = vld [vmem:[#allocation7 + $0x90] sm:$0xff]
        %v2641 = vld [vmem:[#allocation7 + $0x98] sm:$0xff]
        %v2642 = vld [vmem:[#allocation7 + $0xa0] sm:$0xff]
        %v2643 = vld [vmem:[#allocation7 + $0xa8] sm:$0xff]
        %v2644 = vld [vmem:[#allocation7 + $0xb0] sm:$0xff]
        %v2645 = vld [vmem:[#allocation7 + $0xb8] sm:$0xff]
        %v2646 = vld [vmem:[#allocation7 + $0xc0] sm:$0xff]
        %v2647 = vld [vmem:[#allocation7 + $0xc8] sm:$0xff]
        %v2648 = vld [vmem:[#allocation7 + $0xd0] sm:$0xff]
        %v2649 = vld [vmem:[#allocation7 + $0xd8] sm:$0xff]
        %v2650 = vld [vmem:[#allocation7 + $0xe0] sm:$0xff]
        %v2651 = vld [vmem:[#allocation7 + $0xe8] sm:$0xff]
        %v2652 = vld [vmem:[#allocation7 + $0xf0] sm:$0xff]
        %v2653 = vld [vmem:[#allocation7 + $0xf8] sm:$0xff]
        %v2654 = vld [vmem:[#allocation7 + $0x100] sm:$0xff]
        %v2655 = vld [vmem:[#allocation7 + $0x108] sm:$0xff]
        %v2656 = vld [vmem:[#allocation7 + $0x110] sm:$0xff]
        %v2657 = vld [vmem:[#allocation7 + $0x118] sm:$0xff]
        %v2658 = vld [vmem:[#allocation7 + $0x120] sm:$0xff]
        %v2659 = vld [vmem:[#allocation7 + $0x128] sm:$0xff]
        %v2660 = vld [vmem:[#allocation7 + $0x130] sm:$0xff]
        %v2661 = vld [vmem:[#allocation7 + $0x138] sm:$0xff]
        %v2662 = vld [vmem:[#allocation7 + $0x140] sm:$0xff]
        %v2663 = vld [vmem:[#allocation7 + $0x148] sm:$0xff]
        %v2664 = vld [vmem:[#allocation7 + $0x150] sm:$0xff]
        %v2665 = vld [vmem:[#allocation7 + $0x158] sm:$0xff]
        %v2666 = vld [vmem:[#allocation7 + $0x160] sm:$0xff]
        %v2667 = vld [vmem:[#allocation7 + $0x168] sm:$0xff]
        %v2668 = vld [vmem:[#allocation7 + $0x170] sm:$0xff]
        %v2669 = vld [vmem:[#allocation7 + $0x178] sm:$0xff]
        %2670 = vmatpush.msra.mxu0 %v2667
        %2671 = vmatpush.msra.mxu0 %v2664
        %2672 = vmatpush.msra.mxu0 %v2661
        %2673 = vmatpush.msra.mxu0 %v2658
        %2674 = vmatpush.msra.mxu0 %v2655
        %2675 = vmatpush.msra.mxu0 %v2652
        %2676 = vmatpush.msra.mxu0 %v2649
        %2677 = vmatpush.msra.mxu0 %v2646
        %2678 = vmatpush.msra.mxu0 %v2643
        %2679 = vmatpush.msra.mxu0 %v2640
        %2680 = vmatpush.msra.mxu0 %v2637
        %2681 = vmatpush.msra.mxu0 %v2634
        %2682 = vmatpush.msra.mxu0 %v2631
        %2683 = vmatpush.msra.mxu0 %v2628
        %2684 = vmatpush.msra.mxu0 %v2625
        %2685 = vmatpush.msra.mxu0 %v2622
        %2686 = vmatmul.f32.gmra.mxu0 %v2619
        %v2687 = vpop.f32.mrf.mxu0
        %v2688 = vadd.f32 0.0, %v2687
        %2689 = vdwg.mxu0
        %2690 = vmatpush.msra.mxu0 %v2668
        %2691 = vmatpush.msra.mxu0 %v2665
        %2692 = vmatpush.msra.mxu0 %v2662
        %2693 = vmatpush.msra.mxu0 %v2659
        %2694 = vmatpush.msra.mxu0 %v2656
        %2695 = vmatpush.msra.mxu0 %v2653
        %2696 = vmatpush.msra.mxu0 %v2650
        %2697 = vmatpush.msra.mxu0 %v2647
        %2698 = vmatpush.msra.mxu0 %v2644
        %2699 = vmatpush.msra.mxu0 %v2641
        %2700 = vmatpush.msra.mxu0 %v2638
        %2701 = vmatpush.msra.mxu0 %v2635
        %2702 = vmatpush.msra.mxu0 %v2632
        %2703 = vmatpush.msra.mxu0 %v2629
        %2704 = vmatpush.msra.mxu0 %v2626
        %2705 = vmatpush.msra.mxu0 %v2623
        %2706 = vmatmul.f32.gmra.mxu0 %v2619
        %v2707 = vpop.f32.mrf.mxu0
        %v2708 = vadd.f32 0.0, %v2707
        %2709 = vdwg.mxu0
        %2710 = vmatpush.msra.mxu0 %v2669
        %2711 = vmatpush.msra.mxu0 %v2666
        %2712 = vmatpush.msra.mxu0 %v2663
        %2713 = vmatpush.msra.mxu0 %v2660
        %2714 = vmatpush.msra.mxu0 %v2657
        %2715 = vmatpush.msra.mxu0 %v2654
        %2716 = vmatpush.msra.mxu0 %v2651
        %2717 = vmatpush.msra.mxu0 %v2648
        %2718 = vmatpush.msra.mxu0 %v2645
        %2719 = vmatpush.msra.mxu0 %v2642
        %2720 = vmatpush.msra.mxu0 %v2639
        %2721 = vmatpush.msra.mxu0 %v2636
        %2722 = vmatpush.msra.mxu0 %v2633
        %2723 = vmatpush.msra.mxu0 %v2630
        %2724 = vmatpush.msra.mxu0 %v2627
        %2725 = vmatpush.msra.mxu0 %v2624
        %2726 = vmatmul.f32.gmra.mxu0 %v2619
        %v2727 = vpop.f32.mrf.mxu0
        %v2728 = vadd.f32 0.0, %v2727
        %2729 = vdwg.mxu0
        %s2730 = scalar_lea.vmem [#allocation2], 264
        %v2731 = vld [vmem:[%s2730] sm:$0xff]
        %v2732 = vld [vmem:[%s2730 + $0x8] sm:$0xff]
        %v2733 = vld [vmem:[%s2730 + $0x10] sm:$0xff]
        %v2734 = vadd.f32 %v2731, %v2688
        %v2735 = vxor.u32 %v2734, 2147483648
        %v2736 = vmul.f32 %v2735, 1.442695
        %v2737 = vpow.pop %v2736
        %v2738 = vadd.f32 %v2737, 1.0
        %v2739 = vrcp.pop %v2738
        %v2740 = vmul.f32 %v2738, %v2739
        %v2741 = vsub.f32 1.0, %v2740
        %v2742 = vmul.f32 %v2739, %v2741
        %v2743 = vadd.f32 %v2739, %v2742
        %vm2744 = vweird.f32 %v2738
        %vm2745 = vweird.f32 %v2739
        %vm2746 = vmor %vm2744, %vm2745
        %v2747 = vsel %vm2746, %v2739, %v2743
        %v2748 = vand.u32 2147483647, %v2738
        %vm2749 = vcmp.eq.f32.partialorder %v2748, 8.507059e+37
        %v2750 = vand.u32 %v2738, 2147483648
        %v2751 = vor.u32 1.1754944e-38, %v2750
        %v2752 = vsel %vm2749, %v2751, %v2747
        %v2753 = vmul.f32 1.0, %v2752
        %v2754 = vadd.f32 %v2732, %v2708
        %v2755 = vxor.u32 %v2754, 2147483648
        %v2756 = vmul.f32 %v2755, 1.442695
        %v2757 = vpow.pop %v2756
        %v2758 = vadd.f32 %v2757, 1.0
        %v2759 = vrcp.pop %v2758
        %v2760 = vmul.f32 %v2758, %v2759
        %v2761 = vsub.f32 1.0, %v2760
        %v2762 = vmul.f32 %v2759, %v2761
        %v2763 = vadd.f32 %v2759, %v2762
        %vm2764 = vweird.f32 %v2758
        %vm2765 = vweird.f32 %v2759
        %vm2766 = vmor %vm2764, %vm2765
        %v2767 = vsel %vm2766, %v2759, %v2763
        %v2768 = vand.u32 2147483647, %v2758
        %vm2769 = vcmp.eq.f32.partialorder %v2768, 8.507059e+37
        %v2770 = vand.u32 %v2758, 2147483648
        %v2771 = vor.u32 1.1754944e-38, %v2770
        %v2772 = vsel %vm2769, %v2771, %v2767
        %v2773 = vmul.f32 1.0, %v2772
        %v2774 = vadd.f32 %v2728, %v839
        %v2775 = vmul.f32 %v2753, %v2774
        %v2776 = vadd.f32 %v2733, %v2775
        %v2777 = vtanh.pop %v2776
        %v2778 = vsub.f32 1.0, %v2773
        %v2779 = vmul.f32 %v2778, %v2777
        %v2780 = vmul.f32 %v2773, %v2619
        %v2781 = vadd.f32 %v2779, %v2780
        %s2782 = scalar_lea.vmem [#allocation3], 88
        %2783 = vst [vmem:[%s2782] sm:$0xff] %v2781
        %v2784 = vld [vmem:[#allocation7] sm:$0xff]
        %v2785 = vld [vmem:[#allocation7 + $0x8] sm:$0xff]
        %v2786 = vld [vmem:[#allocation7 + $0x10] sm:$0xff]
        %v2787 = vld [vmem:[#allocation7 + $0x18] sm:$0xff]
        %v2788 = vld [vmem:[#allocation7 + $0x20] sm:$0xff]
        %v2789 = vld [vmem:[#allocation7 + $0x28] sm:$0xff]
        %v2790 = vld [vmem:[#allocation7 + $0x30] sm:$0xff]
        %v2791 = vld [vmem:[#allocation7 + $0x38] sm:$0xff]
        %v2792 = vld [vmem:[#allocation7 + $0x40] sm:$0xff]
        %v2793 = vld [vmem:[#allocation7 + $0x48] sm:$0xff]
        %v2794 = vld [vmem:[#allocation7 + $0x50] sm:$0xff]
        %v2795 = vld [vmem:[#allocation7 + $0x58] sm:$0xff]
        %v2796 = vld [vmem:[#allocation7 + $0x60] sm:$0xff]
        %v2797 = vld [vmem:[#allocation7 + $0x68] sm:$0xff]
        %v2798 = vld [vmem:[#allocation7 + $0x70] sm:$0xff]
        %v2799 = vld [vmem:[#allocation7 + $0x78] sm:$0xff]
        %v2800 = vld [vmem:[#allocation7 + $0x80] sm:$0xff]
        %v2801 = vld [vmem:[#allocation7 + $0x88] sm:$0xff]
        %v2802 = vld [vmem:[#allocation7 + $0x90] sm:$0xff]
        %v2803 = vld [vmem:[#allocation7 + $0x98] sm:$0xff]
        %v2804 = vld [vmem:[#allocation7 + $0xa0] sm:$0xff]
        %v2805 = vld [vmem:[#allocation7 + $0xa8] sm:$0xff]
        %v2806 = vld [vmem:[#allocation7 + $0xb0] sm:$0xff]
        %v2807 = vld [vmem:[#allocation7 + $0xb8] sm:$0xff]
        %v2808 = vld [vmem:[#allocation7 + $0xc0] sm:$0xff]
        %v2809 = vld [vmem:[#allocation7 + $0xc8] sm:$0xff]
        %v2810 = vld [vmem:[#allocation7 + $0xd0] sm:$0xff]
        %v2811 = vld [vmem:[#allocation7 + $0xd8] sm:$0xff]
        %v2812 = vld [vmem:[#allocation7 + $0xe0] sm:$0xff]
        %v2813 = vld [vmem:[#allocation7 + $0xe8] sm:$0xff]
        %v2814 = vld [vmem:[#allocation7 + $0xf0] sm:$0xff]
        %v2815 = vld [vmem:[#allocation7 + $0xf8] sm:$0xff]
        %v2816 = vld [vmem:[#allocation7 + $0x100] sm:$0xff]
        %v2817 = vld [vmem:[#allocation7 + $0x108] sm:$0xff]
        %v2818 = vld [vmem:[#allocation7 + $0x110] sm:$0xff]
        %v2819 = vld [vmem:[#allocation7 + $0x118] sm:$0xff]
        %v2820 = vld [vmem:[#allocation7 + $0x120] sm:$0xff]
        %v2821 = vld [vmem:[#allocation7 + $0x128] sm:$0xff]
        %v2822 = vld [vmem:[#allocation7 + $0x130] sm:$0xff]
        %v2823 = vld [vmem:[#allocation7 + $0x138] sm:$0xff]
        %v2824 = vld [vmem:[#allocation7 + $0x140] sm:$0xff]
        %v2825 = vld [vmem:[#allocation7 + $0x148] sm:$0xff]
        %v2826 = vld [vmem:[#allocation7 + $0x150] sm:$0xff]
        %v2827 = vld [vmem:[#allocation7 + $0x158] sm:$0xff]
        %v2828 = vld [vmem:[#allocation7 + $0x160] sm:$0xff]
        %v2829 = vld [vmem:[#allocation7 + $0x168] sm:$0xff]
        %v2830 = vld [vmem:[#allocation7 + $0x170] sm:$0xff]
        %v2831 = vld [vmem:[#allocation7 + $0x178] sm:$0xff]
        %2832 = vmatpush.msra.mxu0 %v2829
        %2833 = vmatpush.msra.mxu0 %v2826
        %2834 = vmatpush.msra.mxu0 %v2823
        %2835 = vmatpush.msra.mxu0 %v2820
        %2836 = vmatpush.msra.mxu0 %v2817
        %2837 = vmatpush.msra.mxu0 %v2814
        %2838 = vmatpush.msra.mxu0 %v2811
        %2839 = vmatpush.msra.mxu0 %v2808
        %2840 = vmatpush.msra.mxu0 %v2805
        %2841 = vmatpush.msra.mxu0 %v2802
        %2842 = vmatpush.msra.mxu0 %v2799
        %2843 = vmatpush.msra.mxu0 %v2796
        %2844 = vmatpush.msra.mxu0 %v2793
        %2845 = vmatpush.msra.mxu0 %v2790
        %2846 = vmatpush.msra.mxu0 %v2787
        %2847 = vmatpush.msra.mxu0 %v2784
        %2848 = vmatmul.f32.gmra.mxu0 %v2781
        %v2849 = vpop.f32.mrf.mxu0
        %v2850 = vadd.f32 0.0, %v2849
        %2851 = vdwg.mxu0
        %2852 = vmatpush.msra.mxu0 %v2830
        %2853 = vmatpush.msra.mxu0 %v2827
        %2854 = vmatpush.msra.mxu0 %v2824
        %2855 = vmatpush.msra.mxu0 %v2821
        %2856 = vmatpush.msra.mxu0 %v2818
        %2857 = vmatpush.msra.mxu0 %v2815
        %2858 = vmatpush.msra.mxu0 %v2812
        %2859 = vmatpush.msra.mxu0 %v2809
        %2860 = vmatpush.msra.mxu0 %v2806
        %2861 = vmatpush.msra.mxu0 %v2803
        %2862 = vmatpush.msra.mxu0 %v2800
        %2863 = vmatpush.msra.mxu0 %v2797
        %2864 = vmatpush.msra.mxu0 %v2794
        %2865 = vmatpush.msra.mxu0 %v2791
        %2866 = vmatpush.msra.mxu0 %v2788
        %2867 = vmatpush.msra.mxu0 %v2785
        %2868 = vmatmul.f32.gmra.mxu0 %v2781
        %v2869 = vpop.f32.mrf.mxu0
        %v2870 = vadd.f32 0.0, %v2869
        %2871 = vdwg.mxu0
        %2872 = vmatpush.msra.mxu0 %v2831
        %2873 = vmatpush.msra.mxu0 %v2828
        %2874 = vmatpush.msra.mxu0 %v2825
        %2875 = vmatpush.msra.mxu0 %v2822
        %2876 = vmatpush.msra.mxu0 %v2819
        %2877 = vmatpush.msra.mxu0 %v2816
        %2878 = vmatpush.msra.mxu0 %v2813
        %2879 = vmatpush.msra.mxu0 %v2810
        %2880 = vmatpush.msra.mxu0 %v2807
        %2881 = vmatpush.msra.mxu0 %v2804
        %2882 = vmatpush.msra.mxu0 %v2801
        %2883 = vmatpush.msra.mxu0 %v2798
        %2884 = vmatpush.msra.mxu0 %v2795
        %2885 = vmatpush.msra.mxu0 %v2792
        %2886 = vmatpush.msra.mxu0 %v2789
        %2887 = vmatpush.msra.mxu0 %v2786
        %2888 = vmatmul.f32.gmra.mxu0 %v2781
        %v2889 = vpop.f32.mrf.mxu0
        %v2890 = vadd.f32 0.0, %v2889
        %2891 = vdwg.mxu0
        %s2892 = scalar_lea.vmem [#allocation2], 288
        %v2893 = vld [vmem:[%s2892] sm:$0xff]
        %v2894 = vld [vmem:[%s2892 + $0x8] sm:$0xff]
        %v2895 = vld [vmem:[%s2892 + $0x10] sm:$0xff]
        %v2896 = vadd.f32 %v2893, %v2850
        %v2897 = vxor.u32 %v2896, 2147483648
        %v2898 = vmul.f32 %v2897, 1.442695
        %v2899 = vpow.pop %v2898
        %v2900 = vadd.f32 %v2899, 1.0
        %v2901 = vrcp.pop %v2900
        %v2902 = vmul.f32 %v2900, %v2901
        %v2903 = vsub.f32 1.0, %v2902
        %v2904 = vmul.f32 %v2901, %v2903
        %v2905 = vadd.f32 %v2901, %v2904
        %vm2906 = vweird.f32 %v2900
        %vm2907 = vweird.f32 %v2901
        %vm2908 = vmor %vm2906, %vm2907
        %v2909 = vsel %vm2908, %v2901, %v2905
        %v2910 = vand.u32 2147483647, %v2900
        %vm2911 = vcmp.eq.f32.partialorder %v2910, 8.507059e+37
        %v2912 = vand.u32 %v2900, 2147483648
        %v2913 = vor.u32 1.1754944e-38, %v2912
        %v2914 = vsel %vm2911, %v2913, %v2909
        %v2915 = vmul.f32 1.0, %v2914
        %v2916 = vadd.f32 %v2894, %v2870
        %v2917 = vxor.u32 %v2916, 2147483648
        %v2918 = vmul.f32 %v2917, 1.442695
        %v2919 = vpow.pop %v2918
        %v2920 = vadd.f32 %v2919, 1.0
        %v2921 = vrcp.pop %v2920
        %v2922 = vmul.f32 %v2920, %v2921
        %v2923 = vsub.f32 1.0, %v2922
        %v2924 = vmul.f32 %v2921, %v2923
        %v2925 = vadd.f32 %v2921, %v2924
        %vm2926 = vweird.f32 %v2920
        %vm2927 = vweird.f32 %v2921
        %vm2928 = vmor %vm2926, %vm2927
        %v2929 = vsel %vm2928, %v2921, %v2925
        %v2930 = vand.u32 2147483647, %v2920
        %vm2931 = vcmp.eq.f32.partialorder %v2930, 8.507059e+37
        %v2932 = vand.u32 %v2920, 2147483648
        %v2933 = vor.u32 1.1754944e-38, %v2932
        %v2934 = vsel %vm2931, %v2933, %v2929
        %v2935 = vmul.f32 1.0, %v2934
        %v2936 = vadd.f32 %v2890, %v839
        %v2937 = vmul.f32 %v2915, %v2936
        %v2938 = vadd.f32 %v2895, %v2937
        %v2939 = vtanh.pop %v2938
        %v2940 = vsub.f32 1.0, %v2935
        %v2941 = vmul.f32 %v2940, %v2939
        %v2942 = vmul.f32 %v2935, %v2781
        %v2943 = vadd.f32 %v2941, %v2942
        %s2944 = scalar_lea.vmem [#allocation3], 96
        %2945 = vst [vmem:[%s2944] sm:$0xff] %v2943
        %v2946 = vld [vmem:[#allocation7] sm:$0xff]
        %v2947 = vld [vmem:[#allocation7 + $0x8] sm:$0xff]
        %v2948 = vld [vmem:[#allocation7 + $0x10] sm:$0xff]
        %v2949 = vld [vmem:[#allocation7 + $0x18] sm:$0xff]
        %v2950 = vld [vmem:[#allocation7 + $0x20] sm:$0xff]
        %v2951 = vld [vmem:[#allocation7 + $0x28] sm:$0xff]
        %v2952 = vld [vmem:[#allocation7 + $0x30] sm:$0xff]
        %v2953 = vld [vmem:[#allocation7 + $0x38] sm:$0xff]
        %v2954 = vld [vmem:[#allocation7 + $0x40] sm:$0xff]
        %v2955 = vld [vmem:[#allocation7 + $0x48] sm:$0xff]
        %v2956 = vld [vmem:[#allocation7 + $0x50] sm:$0xff]
        %v2957 = vld [vmem:[#allocation7 + $0x58] sm:$0xff]
        %v2958 = vld [vmem:[#allocation7 + $0x60] sm:$0xff]
        %v2959 = vld [vmem:[#allocation7 + $0x68] sm:$0xff]
        %v2960 = vld [vmem:[#allocation7 + $0x70] sm:$0xff]
        %v2961 = vld [vmem:[#allocation7 + $0x78] sm:$0xff]
        %v2962 = vld [vmem:[#allocation7 + $0x80] sm:$0xff]
        %v2963 = vld [vmem:[#allocation7 + $0x88] sm:$0xff]
        %v2964 = vld [vmem:[#allocation7 + $0x90] sm:$0xff]
        %v2965 = vld [vmem:[#allocation7 + $0x98] sm:$0xff]
        %v2966 = vld [vmem:[#allocation7 + $0xa0] sm:$0xff]
        %v2967 = vld [vmem:[#allocation7 + $0xa8] sm:$0xff]
        %v2968 = vld [vmem:[#allocation7 + $0xb0] sm:$0xff]
        %v2969 = vld [vmem:[#allocation7 + $0xb8] sm:$0xff]
        %v2970 = vld [vmem:[#allocation7 + $0xc0] sm:$0xff]
        %v2971 = vld [vmem:[#allocation7 + $0xc8] sm:$0xff]
        %v2972 = vld [vmem:[#allocation7 + $0xd0] sm:$0xff]
        %v2973 = vld [vmem:[#allocation7 + $0xd8] sm:$0xff]
        %v2974 = vld [vmem:[#allocation7 + $0xe0] sm:$0xff]
        %v2975 = vld [vmem:[#allocation7 + $0xe8] sm:$0xff]
        %v2976 = vld [vmem:[#allocation7 + $0xf0] sm:$0xff]
        %v2977 = vld [vmem:[#allocation7 + $0xf8] sm:$0xff]
        %v2978 = vld [vmem:[#allocation7 + $0x100] sm:$0xff]
        %v2979 = vld [vmem:[#allocation7 + $0x108] sm:$0xff]
        %v2980 = vld [vmem:[#allocation7 + $0x110] sm:$0xff]
        %v2981 = vld [vmem:[#allocation7 + $0x118] sm:$0xff]
        %v2982 = vld [vmem:[#allocation7 + $0x120] sm:$0xff]
        %v2983 = vld [vmem:[#allocation7 + $0x128] sm:$0xff]
        %v2984 = vld [vmem:[#allocation7 + $0x130] sm:$0xff]
        %v2985 = vld [vmem:[#allocation7 + $0x138] sm:$0xff]
        %v2986 = vld [vmem:[#allocation7 + $0x140] sm:$0xff]
        %v2987 = vld [vmem:[#allocation7 + $0x148] sm:$0xff]
        %v2988 = vld [vmem:[#allocation7 + $0x150] sm:$0xff]
        %v2989 = vld [vmem:[#allocation7 + $0x158] sm:$0xff]
        %v2990 = vld [vmem:[#allocation7 + $0x160] sm:$0xff]
        %v2991 = vld [vmem:[#allocation7 + $0x168] sm:$0xff]
        %v2992 = vld [vmem:[#allocation7 + $0x170] sm:$0xff]
        %v2993 = vld [vmem:[#allocation7 + $0x178] sm:$0xff]
        %2994 = vmatpush.msra.mxu0 %v2991
        %2995 = vmatpush.msra.mxu0 %v2988
        %2996 = vmatpush.msra.mxu0 %v2985
        %2997 = vmatpush.msra.mxu0 %v2982
        %2998 = vmatpush.msra.mxu0 %v2979
        %2999 = vmatpush.msra.mxu0 %v2976
        %3000 = vmatpush.msra.mxu0 %v2973
        %3001 = vmatpush.msra.mxu0 %v2970
        %3002 = vmatpush.msra.mxu0 %v2967
        %3003 = vmatpush.msra.mxu0 %v2964
        %3004 = vmatpush.msra.mxu0 %v2961
        %3005 = vmatpush.msra.mxu0 %v2958
        %3006 = vmatpush.msra.mxu0 %v2955
        %3007 = vmatpush.msra.mxu0 %v2952
        %3008 = vmatpush.msra.mxu0 %v2949
        %3009 = vmatpush.msra.mxu0 %v2946
        %3010 = vmatmul.f32.gmra.mxu0 %v2943
        %v3011 = vpop.f32.mrf.mxu0
        %v3012 = vadd.f32 0.0, %v3011
        %3013 = vdwg.mxu0
        %3014 = vmatpush.msra.mxu0 %v2992
        %3015 = vmatpush.msra.mxu0 %v2989
        %3016 = vmatpush.msra.mxu0 %v2986
        %3017 = vmatpush.msra.mxu0 %v2983
        %3018 = vmatpush.msra.mxu0 %v2980
        %3019 = vmatpush.msra.mxu0 %v2977
        %3020 = vmatpush.msra.mxu0 %v2974
        %3021 = vmatpush.msra.mxu0 %v2971
        %3022 = vmatpush.msra.mxu0 %v2968
        %3023 = vmatpush.msra.mxu0 %v2965
        %3024 = vmatpush.msra.mxu0 %v2962
        %3025 = vmatpush.msra.mxu0 %v2959
        %3026 = vmatpush.msra.mxu0 %v2956
        %3027 = vmatpush.msra.mxu0 %v2953
        %3028 = vmatpush.msra.mxu0 %v2950
        %3029 = vmatpush.msra.mxu0 %v2947
        %3030 = vmatmul.f32.gmra.mxu0 %v2943
        %v3031 = vpop.f32.mrf.mxu0
        %v3032 = vadd.f32 0.0, %v3031
        %3033 = vdwg.mxu0
        %3034 = vmatpush.msra.mxu0 %v2993
        %3035 = vmatpush.msra.mxu0 %v2990
        %3036 = vmatpush.msra.mxu0 %v2987
        %3037 = vmatpush.msra.mxu0 %v2984
        %3038 = vmatpush.msra.mxu0 %v2981
        %3039 = vmatpush.msra.mxu0 %v2978
        %3040 = vmatpush.msra.mxu0 %v2975
        %3041 = vmatpush.msra.mxu0 %v2972
        %3042 = vmatpush.msra.mxu0 %v2969
        %3043 = vmatpush.msra.mxu0 %v2966
        %3044 = vmatpush.msra.mxu0 %v2963
        %3045 = vmatpush.msra.mxu0 %v2960
        %3046 = vmatpush.msra.mxu0 %v2957
        %3047 = vmatpush.msra.mxu0 %v2954
        %3048 = vmatpush.msra.mxu0 %v2951
        %3049 = vmatpush.msra.mxu0 %v2948
        %3050 = vmatmul.f32.gmra.mxu0 %v2943
        %v3051 = vpop.f32.mrf.mxu0
        %v3052 = vadd.f32 0.0, %v3051
        %3053 = vdwg.mxu0
        %s3054 = scalar_lea.vmem [#allocation2], 312
        %v3055 = vld [vmem:[%s3054] sm:$0xff]
        %v3056 = vld [vmem:[%s3054 + $0x8] sm:$0xff]
        %v3057 = vld [vmem:[%s3054 + $0x10] sm:$0xff]
        %v3058 = vadd.f32 %v3055, %v3012
        %v3059 = vxor.u32 %v3058, 2147483648
        %v3060 = vmul.f32 %v3059, 1.442695
        %v3061 = vpow.pop %v3060
        %v3062 = vadd.f32 %v3061, 1.0
        %v3063 = vrcp.pop %v3062
        %v3064 = vmul.f32 %v3062, %v3063
        %v3065 = vsub.f32 1.0, %v3064
        %v3066 = vmul.f32 %v3063, %v3065
        %v3067 = vadd.f32 %v3063, %v3066
        %vm3068 = vweird.f32 %v3062
        %vm3069 = vweird.f32 %v3063
        %vm3070 = vmor %vm3068, %vm3069
        %v3071 = vsel %vm3070, %v3063, %v3067
        %v3072 = vand.u32 2147483647, %v3062
        %vm3073 = vcmp.eq.f32.partialorder %v3072, 8.507059e+37
        %v3074 = vand.u32 %v3062, 2147483648
        %v3075 = vor.u32 1.1754944e-38, %v3074
        %v3076 = vsel %vm3073, %v3075, %v3071
        %v3077 = vmul.f32 1.0, %v3076
        %v3078 = vadd.f32 %v3056, %v3032
        %v3079 = vxor.u32 %v3078, 2147483648
        %v3080 = vmul.f32 %v3079, 1.442695
        %v3081 = vpow.pop %v3080
        %v3082 = vadd.f32 %v3081, 1.0
        %v3083 = vrcp.pop %v3082
        %v3084 = vmul.f32 %v3082, %v3083
        %v3085 = vsub.f32 1.0, %v3084
        %v3086 = vmul.f32 %v3083, %v3085
        %v3087 = vadd.f32 %v3083, %v3086
        %vm3088 = vweird.f32 %v3082
        %vm3089 = vweird.f32 %v3083
        %vm3090 = vmor %vm3088, %vm3089
        %v3091 = vsel %vm3090, %v3083, %v3087
        %v3092 = vand.u32 2147483647, %v3082
        %vm3093 = vcmp.eq.f32.partialorder %v3092, 8.507059e+37
        %v3094 = vand.u32 %v3082, 2147483648
        %v3095 = vor.u32 1.1754944e-38, %v3094
        %v3096 = vsel %vm3093, %v3095, %v3091
        %v3097 = vmul.f32 1.0, %v3096
        %v3098 = vadd.f32 %v3052, %v839
        %v3099 = vmul.f32 %v3077, %v3098
        %v3100 = vadd.f32 %v3057, %v3099
        %v3101 = vtanh.pop %v3100
        %v3102 = vsub.f32 1.0, %v3097
        %v3103 = vmul.f32 %v3102, %v3101
        %v3104 = vmul.f32 %v3097, %v2943
        %v3105 = vadd.f32 %v3103, %v3104
        %s3106 = scalar_lea.vmem [#allocation3], 104
        %3107 = vst [vmem:[%s3106] sm:$0xff] %v3105
        %v3108 = vld [vmem:[#allocation7] sm:$0xff]
        %v3109 = vld [vmem:[#allocation7 + $0x8] sm:$0xff]
        %v3110 = vld [vmem:[#allocation7 + $0x10] sm:$0xff]
        %v3111 = vld [vmem:[#allocation7 + $0x18] sm:$0xff]
        %v3112 = vld [vmem:[#allocation7 + $0x20] sm:$0xff]
        %v3113 = vld [vmem:[#allocation7 + $0x28] sm:$0xff]
        %v3114 = vld [vmem:[#allocation7 + $0x30] sm:$0xff]
        %v3115 = vld [vmem:[#allocation7 + $0x38] sm:$0xff]
        %v3116 = vld [vmem:[#allocation7 + $0x40] sm:$0xff]
        %v3117 = vld [vmem:[#allocation7 + $0x48] sm:$0xff]
        %v3118 = vld [vmem:[#allocation7 + $0x50] sm:$0xff]
        %v3119 = vld [vmem:[#allocation7 + $0x58] sm:$0xff]
        %v3120 = vld [vmem:[#allocation7 + $0x60] sm:$0xff]
        %v3121 = vld [vmem:[#allocation7 + $0x68] sm:$0xff]
        %v3122 = vld [vmem:[#allocation7 + $0x70] sm:$0xff]
        %v3123 = vld [vmem:[#allocation7 + $0x78] sm:$0xff]
        %v3124 = vld [vmem:[#allocation7 + $0x80] sm:$0xff]
        %v3125 = vld [vmem:[#allocation7 + $0x88] sm:$0xff]
        %v3126 = vld [vmem:[#allocation7 + $0x90] sm:$0xff]
        %v3127 = vld [vmem:[#allocation7 + $0x98] sm:$0xff]
        %v3128 = vld [vmem:[#allocation7 + $0xa0] sm:$0xff]
        %v3129 = vld [vmem:[#allocation7 + $0xa8] sm:$0xff]
        %v3130 = vld [vmem:[#allocation7 + $0xb0] sm:$0xff]
        %v3131 = vld [vmem:[#allocation7 + $0xb8] sm:$0xff]
        %v3132 = vld [vmem:[#allocation7 + $0xc0] sm:$0xff]
        %v3133 = vld [vmem:[#allocation7 + $0xc8] sm:$0xff]
        %v3134 = vld [vmem:[#allocation7 + $0xd0] sm:$0xff]
        %v3135 = vld [vmem:[#allocation7 + $0xd8] sm:$0xff]
        %v3136 = vld [vmem:[#allocation7 + $0xe0] sm:$0xff]
        %v3137 = vld [vmem:[#allocation7 + $0xe8] sm:$0xff]
        %v3138 = vld [vmem:[#allocation7 + $0xf0] sm:$0xff]
        %v3139 = vld [vmem:[#allocation7 + $0xf8] sm:$0xff]
        %v3140 = vld [vmem:[#allocation7 + $0x100] sm:$0xff]
        %v3141 = vld [vmem:[#allocation7 + $0x108] sm:$0xff]
        %v3142 = vld [vmem:[#allocation7 + $0x110] sm:$0xff]
        %v3143 = vld [vmem:[#allocation7 + $0x118] sm:$0xff]
        %v3144 = vld [vmem:[#allocation7 + $0x120] sm:$0xff]
        %v3145 = vld [vmem:[#allocation7 + $0x128] sm:$0xff]
        %v3146 = vld [vmem:[#allocation7 + $0x130] sm:$0xff]
        %v3147 = vld [vmem:[#allocation7 + $0x138] sm:$0xff]
        %v3148 = vld [vmem:[#allocation7 + $0x140] sm:$0xff]
        %v3149 = vld [vmem:[#allocation7 + $0x148] sm:$0xff]
        %v3150 = vld [vmem:[#allocation7 + $0x150] sm:$0xff]
        %v3151 = vld [vmem:[#allocation7 + $0x158] sm:$0xff]
        %v3152 = vld [vmem:[#allocation7 + $0x160] sm:$0xff]
        %v3153 = vld [vmem:[#allocation7 + $0x168] sm:$0xff]
        %v3154 = vld [vmem:[#allocation7 + $0x170] sm:$0xff]
        %v3155 = vld [vmem:[#allocation7 + $0x178] sm:$0xff]
        %3156 = vmatpush.msra.mxu0 %v3153
        %3157 = vmatpush.msra.mxu0 %v3150
        %3158 = vmatpush.msra.mxu0 %v3147
        %3159 = vmatpush.msra.mxu0 %v3144
        %3160 = vmatpush.msra.mxu0 %v3141
        %3161 = vmatpush.msra.mxu0 %v3138
        %3162 = vmatpush.msra.mxu0 %v3135
        %3163 = vmatpush.msra.mxu0 %v3132
        %3164 = vmatpush.msra.mxu0 %v3129
        %3165 = vmatpush.msra.mxu0 %v3126
        %3166 = vmatpush.msra.mxu0 %v3123
        %3167 = vmatpush.msra.mxu0 %v3120
        %3168 = vmatpush.msra.mxu0 %v3117
        %3169 = vmatpush.msra.mxu0 %v3114
        %3170 = vmatpush.msra.mxu0 %v3111
        %3171 = vmatpush.msra.mxu0 %v3108
        %3172 = vmatmul.f32.gmra.mxu0 %v3105
        %v3173 = vpop.f32.mrf.mxu0
        %v3174 = vadd.f32 0.0, %v3173
        %3175 = vdwg.mxu0
        %3176 = vmatpush.msra.mxu0 %v3154
        %3177 = vmatpush.msra.mxu0 %v3151
        %3178 = vmatpush.msra.mxu0 %v3148
        %3179 = vmatpush.msra.mxu0 %v3145
        %3180 = vmatpush.msra.mxu0 %v3142
        %3181 = vmatpush.msra.mxu0 %v3139
        %3182 = vmatpush.msra.mxu0 %v3136
        %3183 = vmatpush.msra.mxu0 %v3133
        %3184 = vmatpush.msra.mxu0 %v3130
        %3185 = vmatpush.msra.mxu0 %v3127
        %3186 = vmatpush.msra.mxu0 %v3124
        %3187 = vmatpush.msra.mxu0 %v3121
        %3188 = vmatpush.msra.mxu0 %v3118
        %3189 = vmatpush.msra.mxu0 %v3115
        %3190 = vmatpush.msra.mxu0 %v3112
        %3191 = vmatpush.msra.mxu0 %v3109
        %3192 = vmatmul.f32.gmra.mxu0 %v3105
        %v3193 = vpop.f32.mrf.mxu0
        %v3194 = vadd.f32 0.0, %v3193
        %3195 = vdwg.mxu0
        %3196 = vmatpush.msra.mxu0 %v3155
        %3197 = vmatpush.msra.mxu0 %v3152
        %3198 = vmatpush.msra.mxu0 %v3149
        %3199 = vmatpush.msra.mxu0 %v3146
        %3200 = vmatpush.msra.mxu0 %v3143
        %3201 = vmatpush.msra.mxu0 %v3140
        %3202 = vmatpush.msra.mxu0 %v3137
        %3203 = vmatpush.msra.mxu0 %v3134
        %3204 = vmatpush.msra.mxu0 %v3131
        %3205 = vmatpush.msra.mxu0 %v3128
        %3206 = vmatpush.msra.mxu0 %v3125
        %3207 = vmatpush.msra.mxu0 %v3122
        %3208 = vmatpush.msra.mxu0 %v3119
        %3209 = vmatpush.msra.mxu0 %v3116
        %3210 = vmatpush.msra.mxu0 %v3113
        %3211 = vmatpush.msra.mxu0 %v3110
        %3212 = vmatmul.f32.gmra.mxu0 %v3105
        %v3213 = vpop.f32.mrf.mxu0
        %v3214 = vadd.f32 0.0, %v3213
        %3215 = vdwg.mxu0
        %s3216 = scalar_lea.vmem [#allocation2], 336
        %v3217 = vld [vmem:[%s3216] sm:$0xff]
        %v3218 = vld [vmem:[%s3216 + $0x8] sm:$0xff]
        %v3219 = vld [vmem:[%s3216 + $0x10] sm:$0xff]
        %v3220 = vadd.f32 %v3217, %v3174
        %v3221 = vxor.u32 %v3220, 2147483648
        %v3222 = vmul.f32 %v3221, 1.442695
        %v3223 = vpow.pop %v3222
        %v3224 = vadd.f32 %v3223, 1.0
        %v3225 = vrcp.pop %v3224
        %v3226 = vmul.f32 %v3224, %v3225
        %v3227 = vsub.f32 1.0, %v3226
        %v3228 = vmul.f32 %v3225, %v3227
        %v3229 = vadd.f32 %v3225, %v3228
        %vm3230 = vweird.f32 %v3224
        %vm3231 = vweird.f32 %v3225
        %vm3232 = vmor %vm3230, %vm3231
        %v3233 = vsel %vm3232, %v3225, %v3229
        %v3234 = vand.u32 2147483647, %v3224
        %vm3235 = vcmp.eq.f32.partialorder %v3234, 8.507059e+37
        %v3236 = vand.u32 %v3224, 2147483648
        %v3237 = vor.u32 1.1754944e-38, %v3236
        %v3238 = vsel %vm3235, %v3237, %v3233
        %v3239 = vmul.f32 1.0, %v3238
        %v3240 = vadd.f32 %v3218, %v3194
        %v3241 = vxor.u32 %v3240, 2147483648
        %v3242 = vmul.f32 %v3241, 1.442695
        %v3243 = vpow.pop %v3242
        %v3244 = vadd.f32 %v3243, 1.0
        %v3245 = vrcp.pop %v3244
        %v3246 = vmul.f32 %v3244, %v3245
        %v3247 = vsub.f32 1.0, %v3246
        %v3248 = vmul.f32 %v3245, %v3247
        %v3249 = vadd.f32 %v3245, %v3248
        %vm3250 = vweird.f32 %v3244
        %vm3251 = vweird.f32 %v3245
        %vm3252 = vmor %vm3250, %vm3251
        %v3253 = vsel %vm3252, %v3245, %v3249
        %v3254 = vand.u32 2147483647, %v3244
        %vm3255 = vcmp.eq.f32.partialorder %v3254, 8.507059e+37
        %v3256 = vand.u32 %v3244, 2147483648
        %v3257 = vor.u32 1.1754944e-38, %v3256
        %v3258 = vsel %vm3255, %v3257, %v3253
        %v3259 = vmul.f32 1.0, %v3258
        %v3260 = vadd.f32 %v3214, %v839
        %v3261 = vmul.f32 %v3239, %v3260
        %v3262 = vadd.f32 %v3219, %v3261
        %v3263 = vtanh.pop %v3262
        %v3264 = vsub.f32 1.0, %v3259
        %v3265 = vmul.f32 %v3264, %v3263
        %v3266 = vmul.f32 %v3259, %v3105
        %v3267 = vadd.f32 %v3265, %v3266
        %s3268 = scalar_lea.vmem [#allocation3], 112
        %3269 = vst [vmem:[%s3268] sm:$0xff] %v3267
        %v3270 = vld [vmem:[#allocation7] sm:$0xff]
        %v3271 = vld [vmem:[#allocation7 + $0x8] sm:$0xff]
        %v3272 = vld [vmem:[#allocation7 + $0x10] sm:$0xff]
        %v3273 = vld [vmem:[#allocation7 + $0x18] sm:$0xff]
        %v3274 = vld [vmem:[#allocation7 + $0x20] sm:$0xff]
        %v3275 = vld [vmem:[#allocation7 + $0x28] sm:$0xff]
        %v3276 = vld [vmem:[#allocation7 + $0x30] sm:$0xff]
        %v3277 = vld [vmem:[#allocation7 + $0x38] sm:$0xff]
        %v3278 = vld [vmem:[#allocation7 + $0x40] sm:$0xff]
        %v3279 = vld [vmem:[#allocation7 + $0x48] sm:$0xff]
        %v3280 = vld [vmem:[#allocation7 + $0x50] sm:$0xff]
        %v3281 = vld [vmem:[#allocation7 + $0x58] sm:$0xff]
        %v3282 = vld [vmem:[#allocation7 + $0x60] sm:$0xff]
        %v3283 = vld [vmem:[#allocation7 + $0x68] sm:$0xff]
        %v3284 = vld [vmem:[#allocation7 + $0x70] sm:$0xff]
        %v3285 = vld [vmem:[#allocation7 + $0x78] sm:$0xff]
        %v3286 = vld [vmem:[#allocation7 + $0x80] sm:$0xff]
        %v3287 = vld [vmem:[#allocation7 + $0x88] sm:$0xff]
        %v3288 = vld [vmem:[#allocation7 + $0x90] sm:$0xff]
        %v3289 = vld [vmem:[#allocation7 + $0x98] sm:$0xff]
        %v3290 = vld [vmem:[#allocation7 + $0xa0] sm:$0xff]
        %v3291 = vld [vmem:[#allocation7 + $0xa8] sm:$0xff]
        %v3292 = vld [vmem:[#allocation7 + $0xb0] sm:$0xff]
        %v3293 = vld [vmem:[#allocation7 + $0xb8] sm:$0xff]
        %v3294 = vld [vmem:[#allocation7 + $0xc0] sm:$0xff]
        %v3295 = vld [vmem:[#allocation7 + $0xc8] sm:$0xff]
        %v3296 = vld [vmem:[#allocation7 + $0xd0] sm:$0xff]
        %v3297 = vld [vmem:[#allocation7 + $0xd8] sm:$0xff]
        %v3298 = vld [vmem:[#allocation7 + $0xe0] sm:$0xff]
        %v3299 = vld [vmem:[#allocation7 + $0xe8] sm:$0xff]
        %v3300 = vld [vmem:[#allocation7 + $0xf0] sm:$0xff]
        %v3301 = vld [vmem:[#allocation7 + $0xf8] sm:$0xff]
        %v3302 = vld [vmem:[#allocation7 + $0x100] sm:$0xff]
        %v3303 = vld [vmem:[#allocation7 + $0x108] sm:$0xff]
        %v3304 = vld [vmem:[#allocation7 + $0x110] sm:$0xff]
        %v3305 = vld [vmem:[#allocation7 + $0x118] sm:$0xff]
        %v3306 = vld [vmem:[#allocation7 + $0x120] sm:$0xff]
        %v3307 = vld [vmem:[#allocation7 + $0x128] sm:$0xff]
        %v3308 = vld [vmem:[#allocation7 + $0x130] sm:$0xff]
        %v3309 = vld [vmem:[#allocation7 + $0x138] sm:$0xff]
        %v3310 = vld [vmem:[#allocation7 + $0x140] sm:$0xff]
        %v3311 = vld [vmem:[#allocation7 + $0x148] sm:$0xff]
        %v3312 = vld [vmem:[#allocation7 + $0x150] sm:$0xff]
        %v3313 = vld [vmem:[#allocation7 + $0x158] sm:$0xff]
        %v3314 = vld [vmem:[#allocation7 + $0x160] sm:$0xff]
        %v3315 = vld [vmem:[#allocation7 + $0x168] sm:$0xff]
        %v3316 = vld [vmem:[#allocation7 + $0x170] sm:$0xff]
        %v3317 = vld [vmem:[#allocation7 + $0x178] sm:$0xff]
        %3318 = vmatpush.msra.mxu0 %v3315
        %3319 = vmatpush.msra.mxu0 %v3312
        %3320 = vmatpush.msra.mxu0 %v3309
        %3321 = vmatpush.msra.mxu0 %v3306
        %3322 = vmatpush.msra.mxu0 %v3303
        %3323 = vmatpush.msra.mxu0 %v3300
        %3324 = vmatpush.msra.mxu0 %v3297
        %3325 = vmatpush.msra.mxu0 %v3294
        %3326 = vmatpush.msra.mxu0 %v3291
        %3327 = vmatpush.msra.mxu0 %v3288
        %3328 = vmatpush.msra.mxu0 %v3285
        %3329 = vmatpush.msra.mxu0 %v3282
        %3330 = vmatpush.msra.mxu0 %v3279
        %3331 = vmatpush.msra.mxu0 %v3276
        %3332 = vmatpush.msra.mxu0 %v3273
        %3333 = vmatpush.msra.mxu0 %v3270
        %3334 = vmatmul.f32.gmra.mxu0 %v3267
        %v3335 = vpop.f32.mrf.mxu0
        %v3336 = vadd.f32 0.0, %v3335
        %3337 = vdwg.mxu0
        %3338 = vmatpush.msra.mxu0 %v3316
        %3339 = vmatpush.msra.mxu0 %v3313
        %3340 = vmatpush.msra.mxu0 %v3310
        %3341 = vmatpush.msra.mxu0 %v3307
        %3342 = vmatpush.msra.mxu0 %v3304
        %3343 = vmatpush.msra.mxu0 %v3301
        %3344 = vmatpush.msra.mxu0 %v3298
        %3345 = vmatpush.msra.mxu0 %v3295
        %3346 = vmatpush.msra.mxu0 %v3292
        %3347 = vmatpush.msra.mxu0 %v3289
        %3348 = vmatpush.msra.mxu0 %v3286
        %3349 = vmatpush.msra.mxu0 %v3283
        %3350 = vmatpush.msra.mxu0 %v3280
        %3351 = vmatpush.msra.mxu0 %v3277
        %3352 = vmatpush.msra.mxu0 %v3274
        %3353 = vmatpush.msra.mxu0 %v3271
        %3354 = vmatmul.f32.gmra.mxu0 %v3267
        %v3355 = vpop.f32.mrf.mxu0
        %v3356 = vadd.f32 0.0, %v3355
        %3357 = vdwg.mxu0
        %3358 = vmatpush.msra.mxu0 %v3317
        %3359 = vmatpush.msra.mxu0 %v3314
        %3360 = vmatpush.msra.mxu0 %v3311
        %3361 = vmatpush.msra.mxu0 %v3308
        %3362 = vmatpush.msra.mxu0 %v3305
        %3363 = vmatpush.msra.mxu0 %v3302
        %3364 = vmatpush.msra.mxu0 %v3299
        %3365 = vmatpush.msra.mxu0 %v3296
        %3366 = vmatpush.msra.mxu0 %v3293
        %3367 = vmatpush.msra.mxu0 %v3290
        %3368 = vmatpush.msra.mxu0 %v3287
        %3369 = vmatpush.msra.mxu0 %v3284
        %3370 = vmatpush.msra.mxu0 %v3281
        %3371 = vmatpush.msra.mxu0 %v3278
        %3372 = vmatpush.msra.mxu0 %v3275
        %3373 = vmatpush.msra.mxu0 %v3272
        %3374 = vmatmul.f32.gmra.mxu0 %v3267
        %v3375 = vpop.f32.mrf.mxu0
        %v3376 = vadd.f32 0.0, %v3375
        %3377 = vdwg.mxu0
        %s3378 = scalar_lea.vmem [#allocation2], 360
        %v3379 = vld [vmem:[%s3378] sm:$0xff]
        %v3380 = vld [vmem:[%s3378 + $0x8] sm:$0xff]
        %v3381 = vld [vmem:[%s3378 + $0x10] sm:$0xff]
        %v3382 = vadd.f32 %v3379, %v3336
        %v3383 = vxor.u32 %v3382, 2147483648
        %v3384 = vmul.f32 %v3383, 1.442695
        %v3385 = vpow.pop %v3384
        %v3386 = vadd.f32 %v3385, 1.0
        %v3387 = vrcp.pop %v3386
        %v3388 = vmul.f32 %v3386, %v3387
        %v3389 = vsub.f32 1.0, %v3388
        %v3390 = vmul.f32 %v3387, %v3389
        %v3391 = vadd.f32 %v3387, %v3390
        %vm3392 = vweird.f32 %v3386
        %vm3393 = vweird.f32 %v3387
        %vm3394 = vmor %vm3392, %vm3393
        %v3395 = vsel %vm3394, %v3387, %v3391
        %v3396 = vand.u32 2147483647, %v3386
        %vm3397 = vcmp.eq.f32.partialorder %v3396, 8.507059e+37
        %v3398 = vand.u32 %v3386, 2147483648
        %v3399 = vor.u32 1.1754944e-38, %v3398
        %v3400 = vsel %vm3397, %v3399, %v3395
        %v3401 = vmul.f32 1.0, %v3400
        %v3402 = vadd.f32 %v3380, %v3356
        %v3403 = vxor.u32 %v3402, 2147483648
        %v3404 = vmul.f32 %v3403, 1.442695
        %v3405 = vpow.pop %v3404
        %v3406 = vadd.f32 %v3405, 1.0
        %v3407 = vrcp.pop %v3406
        %v3408 = vmul.f32 %v3406, %v3407
        %v3409 = vsub.f32 1.0, %v3408
        %v3410 = vmul.f32 %v3407, %v3409
        %v3411 = vadd.f32 %v3407, %v3410
        %vm3412 = vweird.f32 %v3406
        %vm3413 = vweird.f32 %v3407
        %vm3414 = vmor %vm3412, %vm3413
        %v3415 = vsel %vm3414, %v3407, %v3411
        %v3416 = vand.u32 2147483647, %v3406
        %vm3417 = vcmp.eq.f32.partialorder %v3416, 8.507059e+37
        %v3418 = vand.u32 %v3406, 2147483648
        %v3419 = vor.u32 1.1754944e-38, %v3418
        %v3420 = vsel %vm3417, %v3419, %v3415
        %v3421 = vmul.f32 1.0, %v3420
        %v3422 = vadd.f32 %v3376, %v839
        %v3423 = vmul.f32 %v3401, %v3422
        %v3424 = vadd.f32 %v3381, %v3423
        %v3425 = vtanh.pop %v3424
        %v3426 = vsub.f32 1.0, %v3421
        %v3427 = vmul.f32 %v3426, %v3425
        %v3428 = vmul.f32 %v3421, %v3267
        %v3429 = vadd.f32 %v3427, %v3428
        %s3430 = scalar_lea.vmem [#allocation3], 120
        %3431 = vst [vmem:[%s3430] sm:$0xff] %v3429
        %3432 = vst [vmem:[%s372] sm:$0xff] %v3429
        %v3433 = vld [vmem:[#allocation3] sm:$0xff]
        %v3434 = vld [vmem:[#allocation3 + $0x8] sm:$0xff]
        %v3435 = vld [vmem:[#allocation3 + $0x10] sm:$0xff]
        %v3436 = vld [vmem:[#allocation3 + $0x18] sm:$0xff]
        %v3437 = vld [vmem:[#allocation3 + $0x20] sm:$0xff]
        %v3438 = vld [vmem:[#allocation3 + $0x28] sm:$0xff]
        %v3439 = vld [vmem:[#allocation3 + $0x30] sm:$0xff]
        %v3440 = vld [vmem:[#allocation3 + $0x38] sm:$0xff]
        %v3441 = vld [vmem:[#allocation3 + $0x40] sm:$0xff]
        %v3442 = vld [vmem:[#allocation3 + $0x48] sm:$0xff]
        %v3443 = vld [vmem:[#allocation3 + $0x50] sm:$0xff]
        %v3444 = vld [vmem:[#allocation3 + $0x58] sm:$0xff]
        %v3445 = vld [vmem:[#allocation3 + $0x60] sm:$0xff]
        %v3446 = vld [vmem:[#allocation3 + $0x68] sm:$0xff]
        %v3447 = vld [vmem:[#allocation3 + $0x70] sm:$0xff]
        %v3448 = vld [vmem:[#allocation3 + $0x78] sm:$0xff]
        %v3449 = vld [vmem:[#allocation9] sm:$0xff]
        %v3450 = vld [vmem:[#allocation9 + $0x8] sm:$0xff]
        %v3451 = vld [vmem:[#allocation9 + $0x10] sm:$0xff]
        %v3452 = vld [vmem:[#allocation9 + $0x18] sm:$0xff]
        %v3453 = vld [vmem:[#allocation9 + $0x20] sm:$0xff]
        %v3454 = vld [vmem:[#allocation9 + $0x28] sm:$0xff]
        %v3455 = vld [vmem:[#allocation9 + $0x30] sm:$0xff]
        %v3456 = vld [vmem:[#allocation9 + $0x38] sm:$0xff]
        %v3457 = vld [vmem:[#allocation9 + $0x40] sm:$0xff]
        %v3458 = vld [vmem:[#allocation9 + $0x48] sm:$0xff]
        %v3459 = vld [vmem:[#allocation9 + $0x50] sm:$0xff]
        %v3460 = vld [vmem:[#allocation9 + $0x58] sm:$0xff]
        %v3461 = vld [vmem:[#allocation9 + $0x60] sm:$0xff]
        %v3462 = vld [vmem:[#allocation9 + $0x68] sm:$0xff]
        %v3463 = vld [vmem:[#allocation9 + $0x70] sm:$0xff]
        %v3464 = vld [vmem:[#allocation9 + $0x78] sm:$0xff]
        %v3465 = vld [vmem:[%s6] sm:$0x1]
        %v3467 = vperm.slane %v3465, 0
        %3469 = vmatpush.msra.mxu0 %v3464
        %3470 = vmatpush.msra.mxu0 %v3463
        %3471 = vmatpush.msra.mxu0 %v3462
        %3472 = vmatpush.msra.mxu0 %v3461
        %3473 = vmatpush.msra.mxu0 %v3460
        %3474 = vmatpush.msra.mxu0 %v3459
        %3475 = vmatpush.msra.mxu0 %v3458
        %3476 = vmatpush.msra.mxu0 %v3457
        %3477 = vmatpush.msra.mxu0 %v3456
        %3478 = vmatpush.msra.mxu0 %v3455
        %3479 = vmatpush.msra.mxu0 %v3454
        %3480 = vmatpush.msra.mxu0 %v3453
        %3481 = vmatpush.msra.mxu0 %v3452
        %3482 = vmatpush.msra.mxu0 %v3451
        %3483 = vmatpush.msra.mxu0 %v3450
        %3484 = vmatpush.msra.mxu0 %v3449
        %3485 = vmatmul.f32.gmra.mxu0 %v3433
        %v3486 = vpop.f32.mrf.mxu0
        %v3487 = vadd.f32 %v3467, %v3486
        %3488 = vmatmul.f32.gmra.mxu0 %v3434
        %v3489 = vpop.f32.mrf.mxu0
        %v3490 = vadd.f32 %v3467, %v3489
        %3491 = vmatmul.f32.gmra.mxu0 %v3435
        %v3492 = vpop.f32.mrf.mxu0
        %v3493 = vadd.f32 %v3467, %v3492
        %3494 = vmatmul.f32.gmra.mxu0 %v3436
        %v3495 = vpop.f32.mrf.mxu0
        %v3496 = vadd.f32 %v3467, %v3495
        %3497 = vmatmul.f32.gmra.mxu0 %v3437
        %v3498 = vpop.f32.mrf.mxu0
        %v3499 = vadd.f32 %v3467, %v3498
        %3500 = vmatmul.f32.gmra.mxu0 %v3438
        %v3501 = vpop.f32.mrf.mxu0
        %v3502 = vadd.f32 %v3467, %v3501
        %3503 = vmatmul.f32.gmra.mxu0 %v3439
        %v3504 = vpop.f32.mrf.mxu0
        %v3505 = vadd.f32 %v3467, %v3504
        %3506 = vmatmul.f32.gmra.mxu0 %v3440
        %v3507 = vpop.f32.mrf.mxu0
        %v3508 = vadd.f32 %v3467, %v3507
        %3509 = vmatmul.f32.gmra.mxu0 %v3441
        %v3510 = vpop.f32.mrf.mxu0
        %v3511 = vadd.f32 %v3467, %v3510
        %3512 = vmatmul.f32.gmra.mxu0 %v3442
        %v3513 = vpop.f32.mrf.mxu0
        %v3514 = vadd.f32 %v3467, %v3513
        %3515 = vmatmul.f32.gmra.mxu0 %v3443
        %v3516 = vpop.f32.mrf.mxu0
        %v3517 = vadd.f32 %v3467, %v3516
        %3518 = vmatmul.f32.gmra.mxu0 %v3444
        %v3519 = vpop.f32.mrf.mxu0
        %v3520 = vadd.f32 %v3467, %v3519
        %3521 = vmatmul.f32.gmra.mxu0 %v3445
        %v3522 = vpop.f32.mrf.mxu0
        %v3523 = vadd.f32 %v3467, %v3522
        %3524 = vmatmul.f32.gmra.mxu0 %v3446
        %v3525 = vpop.f32.mrf.mxu0
        %v3526 = vadd.f32 %v3467, %v3525
        %3527 = vmatmul.f32.gmra.mxu0 %v3447
        %v3528 = vpop.f32.mrf.mxu0
        %v3529 = vadd.f32 %v3467, %v3528
        %3530 = vmatmul.f32.gmra.mxu0 %v3448
        %v3531 = vpop.f32.mrf.mxu0
        %v3532 = vadd.f32 %v3467, %v3531
        %3533 = vdwg.mxu0
        %3534 = vst [vmem:[%s365] sm:$0xff] %v3487
        %3535 = vst [vmem:[%s365 + $0x8] sm:$0xff] %v3490
        %3536 = vst [vmem:[%s365 + $0x10] sm:$0xff] %v3493
        %3537 = vst [vmem:[%s365 + $0x18] sm:$0xff] %v3496
        %3538 = vst [vmem:[%s365 + $0x20] sm:$0xff] %v3499
        %3539 = vst [vmem:[%s365 + $0x28] sm:$0xff] %v3502
        %3540 = vst [vmem:[%s365 + $0x30] sm:$0xff] %v3505
        %3541 = vst [vmem:[%s365 + $0x38] sm:$0xff] %v3508
        %3542 = vst [vmem:[%s365 + $0x40] sm:$0xff] %v3511
        %3543 = vst [vmem:[%s365 + $0x48] sm:$0xff] %v3514
        %3544 = vst [vmem:[%s365 + $0x50] sm:$0xff] %v3517
        %3545 = vst [vmem:[%s365 + $0x58] sm:$0xff] %v3520
        %3546 = vst [vmem:[%s365 + $0x60] sm:$0xff] %v3523
        %3547 = vst [vmem:[%s365 + $0x68] sm:$0xff] %v3526
        %3548 = vst [vmem:[%s365 + $0x70] sm:$0xff] %v3529
        %3549 = vst [vmem:[%s365 + $0x78] sm:$0xff] %v3532
        %s3550 = sand.u32 %s193, 1
        %s3551 = scalar_lea.sflag [#allocation6], %s3550
        %s3552 = sand.u32 %s193, 1
        %s3553 = smul.addr %s3552, 128
        %s3554 = scalar_lea.vmem [#allocation10], %s3553
        %s3555 = sand.u32 %s219, 1
        %s3556 = scalar_lea.sflag [#allocation12], %s3555
        %s3557 = sand.u32 %s219, 1
        %s3558 = smul.addr %s3557, 8
        %s3559 = scalar_lea.vmem [#allocation11], %s3558
        // Predicated region
        $region61: #{tpu_custom_call.1} parent=47 // pred_check
          %p3560 = pneg %p203
        $region62: #{tpu_custom_call.1} parent=47 // pred_check_branch
          %3562 = sbr.rel (%p3560) target = $region64
        $region63: #{tpu_custom_call.1} parent=47 // pred_region
          %3564 = vsyncadd %s3551, 0
          %s3565 = smul.addr %s28, 8
          %s3566 = scalar_lea.hbm %s7, %s3565
          %s3567 = sshll.u32 %s3554, 4
          %s3568 = int_to_ptr.vmem [resolvable:$true] %s3567
          %s3569 = sshll.u32 %s3566, 4
          %s3570 = int_to_ptr.hbm [resolvable:$true] %s3569
          %3575 = dma.vmem_to_hbm [thread:$0]  %s3568, 2048, %s3570, %s3551, 128, 256, 8
        $region64: #{tpu_custom_call.1} parent=47 // pred_fallthru
          _
        // Predicated region
        $region65: #{tpu_custom_call.1} parent=47 // pred_check
          %p3576 = pneg %p229
        $region66: #{tpu_custom_call.1} parent=47 // pred_check_branch
          %3578 = sbr.rel (%p3576) target = $region68
        $region67: #{tpu_custom_call.1} parent=47 // pred_region
          %3580 = vsyncadd %s3556, 0
          %s3581 = smul.addr %s28, 8
          %s3582 = scalar_lea.hbm %s8, %s3581
          %s3584 = sshll.u32 %s3559, 4
          %s3585 = int_to_ptr.vmem [resolvable:$true] %s3584
          %s3586 = sshll.u32 %s3582, 4
          %s3587 = int_to_ptr.hbm [resolvable:$true] %s3586
          %3589 = dma.vmem_to_hbm [thread:$0]  %s3585, 128, %s3587, %s3556
        $region68: #{tpu_custom_call.1} parent=47 // pred_fallthru
          _
      $region48: #{tpu_custom_call.1} parent=5 // pred_fallthru
        _
      %p3590 = scmp.le.s32.totalorder 2, %s23
      // Predicated region
      $region69: #{tpu_custom_call.1} parent=5 // pred_check
        %p3591 = pneg %p3590
      $region70: #{tpu_custom_call.1} parent=5 // pred_check_branch
        %3593 = sbr.rel (%p3591) target = $region72
      $region71: #{tpu_custom_call.1} parent=5 // pred_region
        %s3594 = ssub.s32 %s23, 2
        // Predicated region
        $region73: #{tpu_custom_call.1} parent=71 // pred_check
          %p3595 = pneg %p209
        $region74: #{tpu_custom_call.1} parent=71 // pred_check_branch
          %3597 = sbr.rel (%p3595) target = $region76
        $region75: #{tpu_custom_call.1} parent=71 // pred_region
          %s3598 = sand.u32 %s194, 1
          %s3599 = scalar_lea.sflag [#allocation6], %s3598
          %s3600 = sand.u32 %s194, 1
          %s3601 = smul.addr %s3600, 128
          %s3602 = scalar_lea.vmem [#allocation10], %s3601
          %3604 = dma.done %s3599, 2048
        $region76: #{tpu_custom_call.1} parent=71 // pred_fallthru
          _
        // Predicated region
        $region77: #{tpu_custom_call.1} parent=71 // pred_check
          %p3605 = pneg %p235
        $region78: #{tpu_custom_call.1} parent=71 // pred_check_branch
          %3607 = sbr.rel (%p3605) target = $region80
        $region79: #{tpu_custom_call.1} parent=71 // pred_region
          %s3608 = sand.u32 %s220, 1
          %s3609 = scalar_lea.sflag [#allocation12], %s3608
          %s3610 = sand.u32 %s220, 1
          %s3611 = smul.addr %s3610, 8
          %s3612 = scalar_lea.vmem [#allocation11], %s3611
          %3614 = dma.done %s3609, 128
        $region80: #{tpu_custom_call.1} parent=71 // pred_fallthru
          _
      $region72: #{tpu_custom_call.1} parent=5 // pred_fallthru
        _
    $region6: #{tpu_custom_call.1} parent=1 // loop_footer
      %s27 = sadd.s32 1, %s23
    $region7: #{tpu_custom_call.1} parent=1 // loop_footer_branch
      %22 = sbr.rel target = $region3
    $region8: #{tpu_custom_call.1} parent=1 // loop_exit
      _
    %3615 = vsyncpa [#allocation5], 1
    %s3616 = scalar_lea.sflag [#allocation5], 1
    %3617 = vsyncpa %s3616, 1
    %3618 = vsyncpa [#allocation8], 1
    %3619 = vsyncpa [#allocation6], 1
    %s3620 = scalar_lea.sflag [#allocation6], 1
    %3621 = vsyncpa %s3620, 1
    %3622 = vsyncpa [#allocation12], 1
    %s3623 = scalar_lea.sflag [#allocation12], 1
    %3624 = vsyncpa %s3623, 1

</llo_original>
